<compile_context>
chip_gen: v7x
topology: tpu7x:2x2x1
jax: 0.10.0
libtpu: 0.0.40
codegen_flags: <defaults>
</compile_context>

<pallas_src>
import functools
import math

import jax
import jax.numpy as jnp
from jax import lax
from jax.experimental import pallas as pl
from jax.experimental.pallas import tpu as pltpu


# ----------------------------- packed per-layer vector layout -----------------------------

def _vec_layout(D, DFF):
    fields = [
        ("bqkv_s", 3 * D), ("bo_s", D), ("ln1_g", D), ("ln1_b", D),
        ("bq_c", D), ("bkv_c", 2 * D), ("bo_c", D), ("ln2_g", D), ("ln2_b", D),
        ("b1", DFF), ("b2", D), ("ln3_g", D), ("ln3_b", D),
    ]
    layout, off = {}, 0
    for name, sz in fields:
        layout[name] = (off, sz)
        off += sz
    return layout, off


# ----------------------------- fused whole-stack kernel -----------------------------

def _decoder_stack_kernel(*refs, B, L, S, H, dh, NL, DFF,
                          has_x_mask, has_cross_mask, has_final_norm, eps):
    it = iter(refs)
    x_ref = next(it)                                   # (B*L, D) f32 (read at layer 0)
    cross_ref = next(it)                               # (B*S, D) f32
    xm_ref = next(it) if has_x_mask else None          # (L, L) additive bias
    cm_ref = next(it) if has_cross_mask else None      # (L, S) additive bias
    (wqkv_s_ref, wo_s_ref, wq_c_ref, wkv_c_ref, wo_c_ref,
     w1_ref, w2_ref, vec_ref) = [next(it) for _ in range(8)]
    fn_ref = next(it) if has_final_norm else None      # (1, 2D) final-norm gamma|beta
    o_ref = next(it)                                   # (B*L, D) output
    x_sc = next(it)                                    # (B*L, D) f32 carried activation

    D = H * dh
    layer = pl.program_id(0)
    layout, _ = _vec_layout(D, DFF)

    def vec(name):
        off, sz = layout[name]
        return vec_ref[0, :, off:off + sz]             # (1, sz) f32

    def layer_norm(v, g, b):
        mu = jnp.mean(v, axis=-1, keepdims=True)
        var = jnp.mean(jnp.square(v - mu), axis=-1, keepdims=True)
        return (v - mu) * lax.rsqrt(var + eps) * g + b

    def proj(a, w_ref, bias_name):
        w = w_ref[0]                                   # (in, out) bf16 MXU operand
        r = jnp.dot(a.astype(jnp.bfloat16), w, preferred_element_type=jnp.float32)
        return r + vec(bias_name)

    def attend(q, k, v, Lk, bias_ref):
        # q: (B*L, D), k/v: (B*Lk, D) f32.  Batched over B per head; head outputs are
        # concatenated lane-wise so the result never touches a VMEM scratch.
        q3 = q.reshape(B, L, D)
        k3 = k.reshape(B, Lk, D)
        v3 = v.reshape(B, Lk, D)
        bias = None
        if bias_ref is not None:
            bias = jnp.broadcast_to(bias_ref[...], (B, L, Lk))   # hoisted out of head loop
        heads = []
        for h in range(H):
            sl = slice(h * dh, (h + 1) * dh)
            qh = q3[:, :, sl].astype(jnp.bfloat16)
            kh = k3[:, :, sl].astype(jnp.bfloat16)
            vh = v3[:, :, sl].astype(jnp.bfloat16)
            s = jnp.einsum('bld,bkd->blk', qh, kh,
                           preferred_element_type=jnp.float32)   # scale folded into Wq
            if bias is not None:
                s = s + bias
            s = s - jnp.max(s, axis=-1, keepdims=True)
            p = jnp.exp(s)
            p = p * pl.reciprocal(jnp.sum(p, axis=-1, keepdims=True), approx=True)
            heads.append(jnp.einsum('blk,bkd->bld', p.astype(jnp.bfloat16), vh,
                                    preferred_element_type=jnp.float32))
        return jnp.concatenate(heads, axis=-1).reshape(B * L, D)

    @pl.when(layer == 0)
    def _():
        x_sc[...] = x_ref[...].astype(jnp.float32)

    x = x_sc[...]                                      # (B*L, D) f32

    # ---- x = norm1(x + self_attention(x, x, x, x_mask)) ----
    qkv = proj(x, wqkv_s_ref, "bqkv_s")                # (B*L, 3D), merged Wq|Wk|Wv
    sa = attend(qkv[:, 0:D], qkv[:, D:2 * D], qkv[:, 2 * D:3 * D], L, xm_ref)
    x = layer_norm(x + proj(sa, wo_s_ref, "bo_s"), vec("ln1_g"), vec("ln1_b"))

    # ---- x = norm2(x + cross_attention(x, cross, cross, cross_mask)) ----
    q = proj(x, wq_c_ref, "bq_c")
    kv = proj(cross_ref[...], wkv_c_ref, "bkv_c")      # (B*S, 2D), merged Wk|Wv
    ca = attend(q, kv[:, 0:D], kv[:, D:2 * D], S, cm_ref)
    x = layer_norm(x + proj(ca, wo_c_ref, "bo_c"), vec("ln2_g"), vec("ln2_b"))

    # ---- x = norm3(x + conv2(relu(conv1(x))))  (Conv1d k=1 == per-position Linear) ----
    hdn = jnp.maximum(proj(x, w1_ref, "b1"), 0.0)
    x = layer_norm(x + proj(hdn, w2_ref, "b2"), vec("ln3_g"), vec("ln3_b"))

    x_sc[...] = x                                      # carry to next layer

    @pl.when(layer == NL - 1)
    def _():
        out = x
        if has_final_norm:
            out = layer_norm(out, fn_ref[:, 0:D], fn_ref[:, D:2 * D])
        o_ref[...] = out.astype(o_ref.dtype)


# ----------------------------- wrapper -----------------------------

def _round_up(n, m):
    return ((n + m - 1) // m) * m


def decoder_forward(x, cross, params, n_heads, x_mask=None, cross_mask=None, eps=1e-5):
    B, L, D = x.shape
    S = cross.shape[1]
    NL = params["wqkv_s"].shape[0]
    DFF = params["w1"].shape[2]

    # Pad sequence lengths to sublane (8) multiples so in-kernel reshapes/slices are
    # tile-aligned; padded key positions get a -1e9 additive bias (ignored by softmax).
    Lp, Sp = _round_up(L, 8), _round_up(S, 8)

    x_bias = None
    if x_mask is not None:
        x_bias = jnp.where(x_mask, 0.0, -1e9).astype(jnp.float32)
    if Lp != L:
        if x_bias is None:
            x_bias = jnp.zeros((L, L), jnp.float32)
        x_bias = jnp.pad(x_bias, ((0, Lp - L), (0, Lp - L)), constant_values=-1e9)

    c_bias = None
    if cross_mask is not None:
        c_bias = jnp.where(cross_mask, 0.0, -1e9).astype(jnp.float32)
    if Lp != L or Sp != S:
        if c_bias is None:
            c_bias = jnp.zeros((L, S), jnp.float32)
        c_bias = jnp.pad(c_bias, ((0, Lp - L), (0, Sp - S)), constant_values=-1e9)

    xp = jnp.pad(x, ((0, 0), (0, Lp - L), (0, 0))) if Lp != L else x
    crossp = jnp.pad(cross, ((0, 0), (0, Sp - S), (0, 0))) if Sp != S else cross

    inputs = [xp.reshape(B * Lp, D), crossp.reshape(B * Sp, D)]
    in_specs = [pl.BlockSpec((B * Lp, D), lambda l: (0, 0)),
                pl.BlockSpec((B * Sp, D), lambda l: (0, 0))]
    if x_bias is not None:
        inputs.append(x_bias)
        in_specs.append(pl.BlockSpec((Lp, Lp), lambda l: (0, 0)))
    if c_bias is not None:
        inputs.append(c_bias)
        in_specs.append(pl.BlockSpec((Lp, Sp), lambda l: (0, 0)))

    # Per-layer stacked tensors: block (1, ...) indexed by the layer grid axis
    # (auto double-buffered: layer l+1 weights DMA while layer l computes).
    for name in ("wqkv_s", "wo_s", "wq_c", "wkv_c", "wo_c", "w1", "w2", "vec"):
        arr = params[name]
        inputs.append(arr)
        in_specs.append(pl.BlockSpec((1,) + arr.shape[1:], lambda l: (l, 0, 0)))

    has_norm = params.get("norm") is not None
    if has_norm:
        inputs.append(params["norm"])
        in_specs.append(pl.BlockSpec(params["norm"].shape, lambda l: (0, 0)))

    kernel = functools.partial(
        _decoder_stack_kernel, B=B, L=Lp, S=Sp, H=n_heads, dh=D // n_heads, NL=NL,
        DFF=DFF, has_x_mask=x_bias is not None, has_cross_mask=c_bias is not None,
        has_final_norm=has_norm, eps=eps)

    out = pl.pallas_call(
        kernel,
        out_shape=jax.ShapeDtypeStruct((B * Lp, D), x.dtype),
        grid=(NL,),
        in_specs=in_specs,
        out_specs=pl.BlockSpec((B * Lp, D), lambda l: (0, 0)),
        scratch_shapes=[pltpu.VMEM((B * Lp, D), jnp.float32)],
        compiler_params=pltpu.CompilerParams(
            dimension_semantics=("arbitrary",),       # layers are sequential (carried state)
            vmem_limit_bytes=64 * 1024 * 1024),
    )(*inputs)

    out = out.reshape(B, Lp, D)
    return out[:, :L, :] if Lp != L else out


# ----------------------------- parameter init -----------------------------

def init_params(key, num_layers, d_model, n_heads, d_ff, weight_dtype=jnp.bfloat16):
    D, DFF = d_model, d_ff
    dh = D // n_heads
    scale = 1.0 / math.sqrt(dh)
    layout, K = _vec_layout(D, DFF)

    def dense(k, fi, fo):
        return jax.random.normal(k, (fi, fo), jnp.float32) * 0.02

    stacks = {n: [] for n in ("wqkv_s", "wo_s", "wq_c", "wkv_c", "wo_c", "w1", "w2")}
    vecs = []
    for _ in range(num_layers):
        key, *ks = jax.random.split(key, 8)
        wqkv = dense(ks[0], D, 3 * D)
        # Fold the 1/sqrt(dh) attention scale into the Q projection columns (and scale the
        # Q bias too when importing real checkpoints; here biases are zero).
        wqkv = wqkv.at[:, :D].multiply(scale)
        stacks["wqkv_s"].append(wqkv)                       # merged Wq|Wk|Wv (self-attn)
        stacks["wo_s"].append(dense(ks[1], D, D))
        stacks["wq_c"].append(dense(ks[2], D, D) * scale)
        stacks["wkv_c"].append(dense(ks[3], D, 2 * D))      # merged Wk|Wv (cross-attn)
        stacks["wo_c"].append(dense(ks[4], D, D))
        stacks["w1"].append(dense(ks[5], D, DFF))
        stacks["w2"].append(dense(ks[6], DFF, D))

        vec = jnp.zeros((K,), jnp.float32)                  # biases = 0, LN beta = 0
        for g in ("ln1_g", "ln2_g", "ln3_g"):               # LN gamma = 1
            off, sz = layout[g]
            vec = vec.at[off:off + sz].set(1.0)
        vecs.append(vec)

    params = {n: jnp.stack(v).astype(weight_dtype) for n, v in stacks.items()}
    params["vec"] = jnp.stack(vecs)[:, None, :]             # (NL, 1, K) f32 packed biases/LN
    params["norm"] = jnp.concatenate(                        # final LayerNorm gamma|beta
        [jnp.ones((1, D), jnp.float32), jnp.zeros((1, D), jnp.float32)], axis=-1)
    return params


if __name__ == "__main__":
    B, L, S = 2, 8, 12          # batch, target seq, source (cross) seq
    D, H, DFF = 32, 4, 64       # d_model, n_heads, d_ff
    NUM_LAYERS = 2

    root = jax.random.PRNGKey(0)
    k_p, k_x, k_c = jax.random.split(root, 3)
    params = init_params(k_p, NUM_LAYERS, D, H, DFF)
    x = jax.random.normal(k_x, (B, L, D), jnp.float32)
    cross = jax.random.normal(k_c, (B, S, D), jnp.float32)

    out = decoder_forward(x, cross, params, H, x_mask=None, cross_mask=None)
    out = jax.block_until_ready(out)

    assert out.shape == (B, L, D) and out.dtype == jnp.float32
    assert bool(jnp.all(jnp.isfinite(out)))
    print("KERNEL_OK")
</pallas_src>

<mosaic_0001>
module attributes {stable_mosaic.version = 11 : i64} {
  func.func @_decoder_stack_kernel(%arg0: i32, %arg1: memref<16x32xf32, #tpu.memory_space<vmem>>, %arg2: memref<32x32xf32, #tpu.memory_space<vmem>>, %arg3: memref<8x16xf32, #tpu.memory_space<vmem>>, %arg4: memref<1x32x96xbf16, #tpu.memory_space<vmem>>, %arg5: memref<1x32x32xbf16, #tpu.memory_space<vmem>>, %arg6: memref<1x32x32xbf16, #tpu.memory_space<vmem>>, %arg7: memref<1x32x64xbf16, #tpu.memory_space<vmem>>, %arg8: memref<1x32x32xbf16, #tpu.memory_space<vmem>>, %arg9: memref<1x32x64xbf16, #tpu.memory_space<vmem>>, %arg10: memref<1x64x32xbf16, #tpu.memory_space<vmem>>, %arg11: memref<1x1x544xf32, #tpu.memory_space<vmem>>, %arg12: memref<1x64xf32, #tpu.memory_space<vmem>>, %arg13: memref<16x32xf32, #tpu.memory_space<vmem>>, %arg14: memref<16x32xf32, #tpu.memory_space<vmem>>) attributes {dimension_semantics = [#tpu.dimension_semantics<arbitrary>], iteration_bounds = array<i64: 2>, scalar_prefetch = 0 : i64, scratch_operands = 1 : i64, tpu.core_type = #tpu.core_type<tc>, window_params = [{pipeline_mode = #tpu.pipeline_mode<synchronous>, transform_indices = @transform_0, window_bounds = array<i64: 16, 32>}, {pipeline_mode = #tpu.pipeline_mode<synchronous>, transform_indices = @transform_1, window_bounds = array<i64: 32, 32>}, {pipeline_mode = #tpu.pipeline_mode<synchronous>, transform_indices = @transform_2, window_bounds = array<i64: 8, 16>}, {transform_indices = @transform_3, window_bounds = array<i64: 1, 32, 96>}, {transform_indices = @transform_4, window_bounds = array<i64: 1, 32, 32>}, {transform_indices = @transform_5, window_bounds = array<i64: 1, 32, 32>}, {transform_indices = @transform_6, window_bounds = array<i64: 1, 32, 64>}, {transform_indices = @transform_7, window_bounds = array<i64: 1, 32, 32>}, {transform_indices = @transform_8, window_bounds = array<i64: 1, 32, 64>}, {transform_indices = @transform_9, window_bounds = array<i64: 1, 64, 32>}, {transform_indices = @transform_10, window_bounds = array<i64: 1, 1, 544>}, {pipeline_mode = #tpu.pipeline_mode<synchronous>, transform_indices = @transform_11, window_bounds = array<i64: 1, 64>}, {pipeline_mode = #tpu.pipeline_mode<synchronous>, transform_indices = @transform_12, window_bounds = array<i64: 16, 32>}]} {
    %c0_i32 = arith.constant 0 : i32
    %0 = arith.cmpi eq, %arg0, %c0_i32 : i32
    %1 = arith.extui %0 : i1 to i32
    %c0_i32_0 = arith.constant 0 : i32
    %2 = arith.cmpi ne, %1, %c0_i32_0 : i32
    scf.if %2 {
      %c0_111 = arith.constant 0 : index
      %c0_112 = arith.constant 0 : index
      %322 = vector.load %arg1[%c0_111, %c0_112] : memref<16x32xf32, #tpu.memory_space<vmem>>, vector<16x32xf32>
      %c0_113 = arith.constant 0 : index
      %c0_114 = arith.constant 0 : index
      %323 = vector.load %arg14[%c0_113, %c0_114] : memref<16x32xf32, #tpu.memory_space<vmem>>, vector<16x32xf32>
      tpu.vector_store %arg14[%c0_113, %c0_114], %322 {strides = array<i32>} : memref<16x32xf32, #tpu.memory_space<vmem>>, vector<16x32xf32>,
    } else {
    }
    %c0 = arith.constant 0 : index
    %c0_1 = arith.constant 0 : index
    %3 = vector.load %arg14[%c0, %c0_1] : memref<16x32xf32, #tpu.memory_space<vmem>>, vector<16x32xf32>
    %c0_2 = arith.constant 0 : index
    %c0_3 = arith.constant 0 : index
    %c0_4 = arith.constant 0 : index
    %4 = vector.load %arg4[%c0_2, %c0_3, %c0_4] : memref<1x32x96xbf16, #tpu.memory_space<vmem>>, vector<1x32x96xbf16>
    %5 = vector.shape_cast %4 : vector<1x32x96xbf16> to vector<32x96xbf16>
    %6 = arith.truncf %3 : vector<16x32xf32> to vector<16x32xbf16>
    %cst = arith.constant dense<0.000000e+00> : vector<16x96xf32>
    %7 = tpu.matmul %6, %5, %cst {dimension_numbers = #tpu.dot_dimension_numbers<[1], [0], [0], [1], [0, 0, 1, 1], [], []>} : vector<16x32xbf16>, vector<32x96xbf16>, vector<16x96xf32> -> vector<16x96xf32>
    %c0_5 = arith.constant 0 : index
    %c0_6 = arith.constant 0 : index
    %c0_7 = arith.constant 0 : index
    %8 = vector.load %arg11[%c0_5, %c0_6, %c0_7] : memref<1x1x544xf32, #tpu.memory_space<vmem>>, vector<1x1x96xf32>
    %9 = vector.shape_cast %8 : vector<1x1x96xf32> to vector<1x96xf32>
    %10 = vector.broadcast %9 : vector<1x96xf32> to vector<16x96xf32>
    %11 = arith.addf %7, %10 : vector<16x96xf32>
    %12 = vector.extract_strided_slice %11 {offsets = [0, 0], sizes = [16, 32], strides = [1, 1]} : vector<16x96xf32> to vector<16x32xf32>
    %13 = vector.extract_strided_slice %11 {offsets = [0, 32], sizes = [16, 32], strides = [1, 1]} : vector<16x96xf32> to vector<16x32xf32>
    %14 = vector.extract_strided_slice %11 {offsets = [0, 64], sizes = [16, 32], strides = [1, 1]} : vector<16x96xf32> to vector<16x32xf32>
    %15 = vector.shape_cast %12 : vector<16x32xf32> to vector<2x8x32xf32>
    %16 = vector.shape_cast %13 : vector<16x32xf32> to vector<2x8x32xf32>
    %17 = vector.shape_cast %14 : vector<16x32xf32> to vector<2x8x32xf32>
    %18 = vector.extract_strided_slice %15 {offsets = [0, 0, 0], sizes = [2, 8, 8], strides = [1, 1, 1]} : vector<2x8x32xf32> to vector<2x8x8xf32>
    %19 = arith.truncf %18 : vector<2x8x8xf32> to vector<2x8x8xbf16>
    %20 = vector.extract_strided_slice %16 {offsets = [0, 0, 0], sizes = [2, 8, 8], strides = [1, 1, 1]} : vector<2x8x32xf32> to vector<2x8x8xf32>
    %21 = arith.truncf %20 : vector<2x8x8xf32> to vector<2x8x8xbf16>
    %22 = vector.extract_strided_slice %17 {offsets = [0, 0, 0], sizes = [2, 8, 8], strides = [1, 1, 1]} : vector<2x8x32xf32> to vector<2x8x8xf32>
    %23 = arith.truncf %22 : vector<2x8x8xf32> to vector<2x8x8xbf16>
    "tpu.trace_start"() <{level = 10 : i32, message = "bld,bkd->blk"}> : () -> ()
    %cst_8 = arith.constant dense<0.000000e+00> : vector<2x8x8xf32>
    %24 = tpu.matmul %19, %21, %cst_8 {dimension_numbers = #tpu.dot_dimension_numbers<[2], [2], [1], [1], [0, 0, 0, 1, 1, 1], [0], [0]>} : vector<2x8x8xbf16>, vector<2x8x8xbf16>, vector<2x8x8xf32> -> vector<2x8x8xf32>
    "tpu.trace_stop"() : () -> ()
    %cst_9 = arith.constant dense<0xFF800000> : vector<2x8xf32>
    %25 = vector.multi_reduction <maximumf>, %24, %cst_9 [2] : vector<2x8x8xf32> to vector<2x8xf32>
    %26 = vector.shape_cast %25 : vector<2x8xf32> to vector<2x8x1xf32>
    %27 = vector.broadcast %26 : vector<2x8x1xf32> to vector<2x8x8xf32>
    %28 = arith.subf %24, %27 : vector<2x8x8xf32>
    %29 = math.exp %28 : vector<2x8x8xf32>
    %cst_10 = arith.constant dense<0.000000e+00> : vector<2x8xf32>
    %30 = vector.multi_reduction <add>, %29, %cst_10 [2] : vector<2x8x8xf32> to vector<2x8xf32>
    %31 = vector.shape_cast %30 : vector<2x8xf32> to vector<2x8x1xf32>
    %32 = tpu.reciprocal %31 {approx = true} : vector<2x8x1xf32> -> vector<2x8x1xf32>
    %33 = vector.broadcast %32 : vector<2x8x1xf32> to vector<2x8x8xf32>
    %34 = arith.mulf %29, %33 : vector<2x8x8xf32>
    %35 = arith.truncf %34 : vector<2x8x8xf32> to vector<2x8x8xbf16>
    "tpu.trace_start"() <{level = 10 : i32, message = "blk,bkd->bld"}> : () -> ()
    %cst_11 = arith.constant dense<0.000000e+00> : vector<2x8x8xf32>
    %36 = tpu.matmul %35, %23, %cst_11 {dimension_numbers = #tpu.dot_dimension_numbers<[2], [1], [1], [2], [0, 0, 0, 1, 1, 2], [0], [0]>} : vector<2x8x8xbf16>, vector<2x8x8xbf16>, vector<2x8x8xf32> -> vector<2x8x8xf32>
    "tpu.trace_stop"() : () -> ()
    %37 = vector.extract_strided_slice %15 {offsets = [0, 0, 8], sizes = [2, 8, 8], strides = [1, 1, 1]} : vector<2x8x32xf32> to vector<2x8x8xf32>
    %38 = arith.truncf %37 : vector<2x8x8xf32> to vector<2x8x8xbf16>
    %39 = vector.extract_strided_slice %16 {offsets = [0, 0, 8], sizes = [2, 8, 8], strides = [1, 1, 1]} : vector<2x8x32xf32> to vector<2x8x8xf32>
    %40 = arith.truncf %39 : vector<2x8x8xf32> to vector<2x8x8xbf16>
    %41 = vector.extract_strided_slice %17 {offsets = [0, 0, 8], sizes = [2, 8, 8], strides = [1, 1, 1]} : vector<2x8x32xf32> to vector<2x8x8xf32>
    %42 = arith.truncf %41 : vector<2x8x8xf32> to vector<2x8x8xbf16>
    "tpu.trace_start"() <{level = 10 : i32, message = "bld,bkd->blk"}> : () -> ()
    %cst_12 = arith.constant dense<0.000000e+00> : vector<2x8x8xf32>
    %43 = tpu.matmul %38, %40, %cst_12 {dimension_numbers = #tpu.dot_dimension_numbers<[2], [2], [1], [1], [0, 0, 0, 1, 1, 1], [0], [0]>} : vector<2x8x8xbf16>, vector<2x8x8xbf16>, vector<2x8x8xf32> -> vector<2x8x8xf32>
    "tpu.trace_stop"() : () -> ()
    %cst_13 = arith.constant dense<0xFF800000> : vector<2x8xf32>
    %44 = vector.multi_reduction <maximumf>, %43, %cst_13 [2] : vector<2x8x8xf32> to vector<2x8xf32>
    %45 = vector.shape_cast %44 : vector<2x8xf32> to vector<2x8x1xf32>
    %46 = vector.broadcast %45 : vector<2x8x1xf32> to vector<2x8x8xf32>
    %47 = arith.subf %43, %46 : vector<2x8x8xf32>
    %48 = math.exp %47 : vector<2x8x8xf32>
    %cst_14 = arith.constant dense<0.000000e+00> : vector<2x8xf32>
    %49 = vector.multi_reduction <add>, %48, %cst_14 [2] : vector<2x8x8xf32> to vector<2x8xf32>
    %50 = vector.shape_cast %49 : vector<2x8xf32> to vector<2x8x1xf32>
    %51 = tpu.reciprocal %50 {approx = true} : vector<2x8x1xf32> -> vector<2x8x1xf32>
    %52 = vector.broadcast %51 : vector<2x8x1xf32> to vector<2x8x8xf32>
    %53 = arith.mulf %48, %52 : vector<2x8x8xf32>
    %54 = arith.truncf %53 : vector<2x8x8xf32> to vector<2x8x8xbf16>
    "tpu.trace_start"() <{level = 10 : i32, message = "blk,bkd->bld"}> : () -> ()
    %cst_15 = arith.constant dense<0.000000e+00> : vector<2x8x8xf32>
    %55 = tpu.matmul %54, %42, %cst_15 {dimension_numbers = #tpu.dot_dimension_numbers<[2], [1], [1], [2], [0, 0, 0, 1, 1, 2], [0], [0]>} : vector<2x8x8xbf16>, vector<2x8x8xbf16>, vector<2x8x8xf32> -> vector<2x8x8xf32>
    "tpu.trace_stop"() : () -> ()
    %56 = vector.extract_strided_slice %15 {offsets = [0, 0, 16], sizes = [2, 8, 8], strides = [1, 1, 1]} : vector<2x8x32xf32> to vector<2x8x8xf32>
    %57 = arith.truncf %56 : vector<2x8x8xf32> to vector<2x8x8xbf16>
    %58 = vector.extract_strided_slice %16 {offsets = [0, 0, 16], sizes = [2, 8, 8], strides = [1, 1, 1]} : vector<2x8x32xf32> to vector<2x8x8xf32>
    %59 = arith.truncf %58 : vector<2x8x8xf32> to vector<2x8x8xbf16>
    %60 = vector.extract_strided_slice %17 {offsets = [0, 0, 16], sizes = [2, 8, 8], strides = [1, 1, 1]} : vector<2x8x32xf32> to vector<2x8x8xf32>
    %61 = arith.truncf %60 : vector<2x8x8xf32> to vector<2x8x8xbf16>
    "tpu.trace_start"() <{level = 10 : i32, message = "bld,bkd->blk"}> : () -> ()
    %cst_16 = arith.constant dense<0.000000e+00> : vector<2x8x8xf32>
    %62 = tpu.matmul %57, %59, %cst_16 {dimension_numbers = #tpu.dot_dimension_numbers<[2], [2], [1], [1], [0, 0, 0, 1, 1, 1], [0], [0]>} : vector<2x8x8xbf16>, vector<2x8x8xbf16>, vector<2x8x8xf32> -> vector<2x8x8xf32>
    "tpu.trace_stop"() : () -> ()
    %cst_17 = arith.constant dense<0xFF800000> : vector<2x8xf32>
    %63 = vector.multi_reduction <maximumf>, %62, %cst_17 [2] : vector<2x8x8xf32> to vector<2x8xf32>
    %64 = vector.shape_cast %63 : vector<2x8xf32> to vector<2x8x1xf32>
    %65 = vector.broadcast %64 : vector<2x8x1xf32> to vector<2x8x8xf32>
    %66 = arith.subf %62, %65 : vector<2x8x8xf32>
    %67 = math.exp %66 : vector<2x8x8xf32>
    %cst_18 = arith.constant dense<0.000000e+00> : vector<2x8xf32>
    %68 = vector.multi_reduction <add>, %67, %cst_18 [2] : vector<2x8x8xf32> to vector<2x8xf32>
    %69 = vector.shape_cast %68 : vector<2x8xf32> to vector<2x8x1xf32>
    %70 = tpu.reciprocal %69 {approx = true} : vector<2x8x1xf32> -> vector<2x8x1xf32>
    %71 = vector.broadcast %70 : vector<2x8x1xf32> to vector<2x8x8xf32>
    %72 = arith.mulf %67, %71 : vector<2x8x8xf32>
    %73 = arith.truncf %72 : vector<2x8x8xf32> to vector<2x8x8xbf16>
    "tpu.trace_start"() <{level = 10 : i32, message = "blk,bkd->bld"}> : () -> ()
    %cst_19 = arith.constant dense<0.000000e+00> : vector<2x8x8xf32>
    %74 = tpu.matmul %73, %61, %cst_19 {dimension_numbers = #tpu.dot_dimension_numbers<[2], [1], [1], [2], [0, 0, 0, 1, 1, 2], [0], [0]>} : vector<2x8x8xbf16>, vector<2x8x8xbf16>, vector<2x8x8xf32> -> vector<2x8x8xf32>
    "tpu.trace_stop"() : () -> ()
    %75 = vector.extract_strided_slice %15 {offsets = [0, 0, 24], sizes = [2, 8, 8], strides = [1, 1, 1]} : vector<2x8x32xf32> to vector<2x8x8xf32>
    %76 = arith.truncf %75 : vector<2x8x8xf32> to vector<2x8x8xbf16>
    %77 = vector.extract_strided_slice %16 {offsets = [0, 0, 24], sizes = [2, 8, 8], strides = [1, 1, 1]} : vector<2x8x32xf32> to vector<2x8x8xf32>
    %78 = arith.truncf %77 : vector<2x8x8xf32> to vector<2x8x8xbf16>
    %79 = vector.extract_strided_slice %17 {offsets = [0, 0, 24], sizes = [2, 8, 8], strides = [1, 1, 1]} : vector<2x8x32xf32> to vector<2x8x8xf32>
    %80 = arith.truncf %79 : vector<2x8x8xf32> to vector<2x8x8xbf16>
    "tpu.trace_start"() <{level = 10 : i32, message = "bld,bkd->blk"}> : () -> ()
    %cst_20 = arith.constant dense<0.000000e+00> : vector<2x8x8xf32>
    %81 = tpu.matmul %76, %78, %cst_20 {dimension_numbers = #tpu.dot_dimension_numbers<[2], [2], [1], [1], [0, 0, 0, 1, 1, 1], [0], [0]>} : vector<2x8x8xbf16>, vector<2x8x8xbf16>, vector<2x8x8xf32> -> vector<2x8x8xf32>
    "tpu.trace_stop"() : () -> ()
    %cst_21 = arith.constant dense<0xFF800000> : vector<2x8xf32>
    %82 = vector.multi_reduction <maximumf>, %81, %cst_21 [2] : vector<2x8x8xf32> to vector<2x8xf32>
    %83 = vector.shape_cast %82 : vector<2x8xf32> to vector<2x8x1xf32>
    %84 = vector.broadcast %83 : vector<2x8x1xf32> to vector<2x8x8xf32>
    %85 = arith.subf %81, %84 : vector<2x8x8xf32>
    %86 = math.exp %85 : vector<2x8x8xf32>
    %cst_22 = arith.constant dense<0.000000e+00> : vector<2x8xf32>
    %87 = vector.multi_reduction <add>, %86, %cst_22 [2] : vector<2x8x8xf32> to vector<2x8xf32>
    %88 = vector.shape_cast %87 : vector<2x8xf32> to vector<2x8x1xf32>
    %89 = tpu.reciprocal %88 {approx = true} : vector<2x8x1xf32> -> vector<2x8x1xf32>
    %90 = vector.broadcast %89 : vector<2x8x1xf32> to vector<2x8x8xf32>
    %91 = arith.mulf %86, %90 : vector<2x8x8xf32>
    %92 = arith.truncf %91 : vector<2x8x8xf32> to vector<2x8x8xbf16>
    "tpu.trace_start"() <{level = 10 : i32, message = "blk,bkd->bld"}> : () -> ()
    %cst_23 = arith.constant dense<0.000000e+00> : vector<2x8x8xf32>
    %93 = tpu.matmul %92, %80, %cst_23 {dimension_numbers = #tpu.dot_dimension_numbers<[2], [1], [1], [2], [0, 0, 0, 1, 1, 2], [0], [0]>} : vector<2x8x8xbf16>, vector<2x8x8xbf16>, vector<2x8x8xf32> -> vector<2x8x8xf32>
    "tpu.trace_stop"() : () -> ()
    %94 = tpu.concatenate %36, %55, %74, %93 in 2 : vector<2x8x8xf32>, vector<2x8x8xf32>, vector<2x8x8xf32>, vector<2x8x8xf32> -> vector<2x8x32xf32>
    %95 = vector.shape_cast %94 : vector<2x8x32xf32> to vector<16x32xf32>
    %c0_24 = arith.constant 0 : index
    %c0_25 = arith.constant 0 : index
    %c0_26 = arith.constant 0 : index
    %96 = vector.load %arg5[%c0_24, %c0_25, %c0_26] : memref<1x32x32xbf16, #tpu.memory_space<vmem>>, vector<1x32x32xbf16>
    %97 = vector.shape_cast %96 : vector<1x32x32xbf16> to vector<32x32xbf16>
    %98 = arith.truncf %95 : vector<16x32xf32> to vector<16x32xbf16>
    %cst_27 = arith.constant dense<0.000000e+00> : vector<16x32xf32>
    %99 = tpu.matmul %98, %97, %cst_27 {dimension_numbers = #tpu.dot_dimension_numbers<[1], [0], [0], [1], [0, 0, 1, 1], [], []>} : vector<16x32xbf16>, vector<32x32xbf16>, vector<16x32xf32> -> vector<16x32xf32>
    %c0_28 = arith.constant 0 : index
    %c0_29 = arith.constant 0 : index
    %c96 = arith.constant 96 : index
    %100 = vector.load %arg11[%c0_28, %c0_29, %c96] : memref<1x1x544xf32, #tpu.memory_space<vmem>>, vector<1x1x32xf32>
    %101 = vector.shape_cast %100 : vector<1x1x32xf32> to vector<1x32xf32>
    %102 = vector.broadcast %101 : vector<1x32xf32> to vector<16x32xf32>
    %103 = arith.addf %99, %102 : vector<16x32xf32>
    %104 = arith.addf %3, %103 : vector<16x32xf32>
    %c0_30 = arith.constant 0 : index
    %c0_31 = arith.constant 0 : index
    %c128 = arith.constant 128 : index
    %105 = vector.load %arg11[%c0_30, %c0_31, %c128] : memref<1x1x544xf32, #tpu.memory_space<vmem>>, vector<1x1x32xf32>
    %106 = vector.shape_cast %105 : vector<1x1x32xf32> to vector<1x32xf32>
    %c0_32 = arith.constant 0 : index
    %c0_33 = arith.constant 0 : index
    %c160 = arith.constant 160 : index
    %107 = vector.load %arg11[%c0_32, %c0_33, %c160] : memref<1x1x544xf32, #tpu.memory_space<vmem>>, vector<1x1x32xf32>
    %108 = vector.shape_cast %107 : vector<1x1x32xf32> to vector<1x32xf32>
    %cst_34 = arith.constant dense<0.000000e+00> : vector<16xf32>
    %109 = vector.multi_reduction <add>, %104, %cst_34 [1] : vector<16x32xf32> to vector<16xf32>
    %110 = vector.shape_cast %109 : vector<16xf32> to vector<16x1xf32>
    %cst_35 = arith.constant 3.200000e+01 : f32
    %111 = vector.broadcast %cst_35 : f32 to vector<16x1xf32>
    %112 = arith.divf %110, %111 : vector<16x1xf32>
    %113 = vector.broadcast %112 : vector<16x1xf32> to vector<16x32xf32>
    %114 = arith.subf %104, %113 : vector<16x32xf32>
    %115 = arith.mulf %114, %114 : vector<16x32xf32>
    %cst_36 = arith.constant dense<0.000000e+00> : vector<16xf32>
    %116 = vector.multi_reduction <add>, %115, %cst_36 [1] : vector<16x32xf32> to vector<16xf32>
    %117 = vector.shape_cast %116 : vector<16xf32> to vector<16x1xf32>
    %cst_37 = arith.constant 3.200000e+01 : f32
    %118 = vector.broadcast %cst_37 : f32 to vector<16x1xf32>
    %119 = arith.divf %117, %118 : vector<16x1xf32>
    %120 = vector.broadcast %112 : vector<16x1xf32> to vector<16x32xf32>
    %121 = arith.subf %104, %120 : vector<16x32xf32>
    %cst_38 = arith.constant 9.99999974E-6 : f32
    %122 = vector.broadcast %cst_38 : f32 to vector<16x1xf32>
    %123 = arith.addf %119, %122 : vector<16x1xf32>
    %124 = math.rsqrt %123 : vector<16x1xf32>
    %125 = vector.broadcast %124 : vector<16x1xf32> to vector<16x32xf32>
    %126 = arith.mulf %121, %125 : vector<16x32xf32>
    %127 = vector.broadcast %106 : vector<1x32xf32> to vector<16x32xf32>
    %128 = arith.mulf %126, %127 : vector<16x32xf32>
    %129 = vector.broadcast %108 : vector<1x32xf32> to vector<16x32xf32>
    %130 = arith.addf %128, %129 : vector<16x32xf32>
    %c0_39 = arith.constant 0 : index
    %c0_40 = arith.constant 0 : index
    %c0_41 = arith.constant 0 : index
    %131 = vector.load %arg6[%c0_39, %c0_40, %c0_41] : memref<1x32x32xbf16, #tpu.memory_space<vmem>>, vector<1x32x32xbf16>
    %132 = vector.shape_cast %131 : vector<1x32x32xbf16> to vector<32x32xbf16>
    %133 = arith.truncf %130 : vector<16x32xf32> to vector<16x32xbf16>
    %cst_42 = arith.constant dense<0.000000e+00> : vector<16x32xf32>
    %134 = tpu.matmul %133, %132, %cst_42 {dimension_numbers = #tpu.dot_dimension_numbers<[1], [0], [0], [1], [0, 0, 1, 1], [], []>} : vector<16x32xbf16>, vector<32x32xbf16>, vector<16x32xf32> -> vector<16x32xf32>
    %c0_43 = arith.constant 0 : index
    %c0_44 = arith.constant 0 : index
    %c192 = arith.constant 192 : index
    %135 = vector.load %arg11[%c0_43, %c0_44, %c192] : memref<1x1x544xf32, #tpu.memory_space<vmem>>, vector<1x1x32xf32>
    %136 = vector.shape_cast %135 : vector<1x1x32xf32> to vector<1x32xf32>
    %137 = vector.broadcast %136 : vector<1x32xf32> to vector<16x32xf32>
    %138 = arith.addf %134, %137 : vector<16x32xf32>
    %c0_45 = arith.constant 0 : index
    %c0_46 = arith.constant 0 : index
    %139 = vector.load %arg2[%c0_45, %c0_46] : memref<32x32xf32, #tpu.memory_space<vmem>>, vector<32x32xf32>
    %c0_47 = arith.constant 0 : index
    %c0_48 = arith.constant 0 : index
    %c0_49 = arith.constant 0 : index
    %140 = vector.load %arg7[%c0_47, %c0_48, %c0_49] : memref<1x32x64xbf16, #tpu.memory_space<vmem>>, vector<1x32x64xbf16>
    %141 = vector.shape_cast %140 : vector<1x32x64xbf16> to vector<32x64xbf16>
    %142 = arith.truncf %139 : vector<32x32xf32> to vector<32x32xbf16>
    %cst_50 = arith.constant dense<0.000000e+00> : vector<32x64xf32>
    %143 = tpu.matmul %142, %141, %cst_50 {dimension_numbers = #tpu.dot_dimension_numbers<[1], [0], [0], [1], [0, 0, 1, 1], [], []>} : vector<32x32xbf16>, vector<32x64xbf16>, vector<32x64xf32> -> vector<32x64xf32>
    %c0_51 = arith.constant 0 : index
    %c0_52 = arith.constant 0 : index
    %c224 = arith.constant 224 : index
    %144 = vector.load %arg11[%c0_51, %c0_52, %c224] : memref<1x1x544xf32, #tpu.memory_space<vmem>>, vector<1x1x64xf32>
    %145 = vector.shape_cast %144 : vector<1x1x64xf32> to vector<1x64xf32>
    %146 = vector.broadcast %145 : vector<1x64xf32> to vector<32x64xf32>
    %147 = arith.addf %143, %146 : vector<32x64xf32>
    %148 = vector.extract_strided_slice %147 {offsets = [0, 0], sizes = [32, 32], strides = [1, 1]} : vector<32x64xf32> to vector<32x32xf32>
    %149 = vector.extract_strided_slice %147 {offsets = [0, 32], sizes = [32, 32], strides = [1, 1]} : vector<32x64xf32> to vector<32x32xf32>
    %150 = vector.shape_cast %138 : vector<16x32xf32> to vector<2x8x32xf32>
    %151 = vector.shape_cast %148 : vector<32x32xf32> to vector<2x16x32xf32>
    %152 = vector.shape_cast %149 : vector<32x32xf32> to vector<2x16x32xf32>
    %c0_53 = arith.constant 0 : index
    %c0_54 = arith.constant 0 : index
    %153 = vector.load %arg3[%c0_53, %c0_54] : memref<8x16xf32, #tpu.memory_space<vmem>>, vector<8x16xf32>
    %154 = vector.shape_cast %153 : vector<8x16xf32> to vector<1x8x16xf32>
    %155 = vector.broadcast %154 : vector<1x8x16xf32> to vector<2x8x16xf32>
    %156 = vector.extract_strided_slice %150 {offsets = [0, 0, 0], sizes = [2, 8, 8], strides = [1, 1, 1]} : vector<2x8x32xf32> to vector<2x8x8xf32>
    %157 = arith.truncf %156 : vector<2x8x8xf32> to vector<2x8x8xbf16>
    %158 = vector.extract_strided_slice %151 {offsets = [0, 0, 0], sizes = [2, 16, 8], strides = [1, 1, 1]} : vector<2x16x32xf32> to vector<2x16x8xf32>
    %159 = arith.truncf %158 : vector<2x16x8xf32> to vector<2x16x8xbf16>
    %160 = vector.extract_strided_slice %152 {offsets = [0, 0, 0], sizes = [2, 16, 8], strides = [1, 1, 1]} : vector<2x16x32xf32> to vector<2x16x8xf32>
    %161 = arith.truncf %160 : vector<2x16x8xf32> to vector<2x16x8xbf16>
    "tpu.trace_start"() <{level = 10 : i32, message = "bld,bkd->blk"}> : () -> ()
    %cst_55 = arith.constant dense<0.000000e+00> : vector<2x8x16xf32>
    %162 = tpu.matmul %157, %159, %cst_55 {dimension_numbers = #tpu.dot_dimension_numbers<[2], [2], [1], [1], [0, 0, 0, 1, 1, 1], [0], [0]>} : vector<2x8x8xbf16>, vector<2x16x8xbf16>, vector<2x8x16xf32> -> vector<2x8x16xf32>
    "tpu.trace_stop"() : () -> ()
    %163 = arith.addf %162, %155 : vector<2x8x16xf32>
    %cst_56 = arith.constant dense<0xFF800000> : vector<2x8xf32>
    %164 = vector.multi_reduction <maximumf>, %163, %cst_56 [2] : vector<2x8x16xf32> to vector<2x8xf32>
    %165 = vector.shape_cast %164 : vector<2x8xf32> to vector<2x8x1xf32>
    %166 = vector.broadcast %165 : vector<2x8x1xf32> to vector<2x8x16xf32>
    %167 = arith.subf %163, %166 : vector<2x8x16xf32>
    %168 = math.exp %167 : vector<2x8x16xf32>
    %cst_57 = arith.constant dense<0.000000e+00> : vector<2x8xf32>
    %169 = vector.multi_reduction <add>, %168, %cst_57 [2] : vector<2x8x16xf32> to vector<2x8xf32>
    %170 = vector.shape_cast %169 : vector<2x8xf32> to vector<2x8x1xf32>
    %171 = tpu.reciprocal %170 {approx = true} : vector<2x8x1xf32> -> vector<2x8x1xf32>
    %172 = vector.broadcast %171 : vector<2x8x1xf32> to vector<2x8x16xf32>
    %173 = arith.mulf %168, %172 : vector<2x8x16xf32>
    %174 = arith.truncf %173 : vector<2x8x16xf32> to vector<2x8x16xbf16>
    "tpu.trace_start"() <{level = 10 : i32, message = "blk,bkd->bld"}> : () -> ()
    %cst_58 = arith.constant dense<0.000000e+00> : vector<2x8x8xf32>
    %175 = tpu.matmul %174, %161, %cst_58 {dimension_numbers = #tpu.dot_dimension_numbers<[2], [1], [1], [2], [0, 0, 0, 1, 1, 2], [0], [0]>} : vector<2x8x16xbf16>, vector<2x16x8xbf16>, vector<2x8x8xf32> -> vector<2x8x8xf32>
    "tpu.trace_stop"() : () -> ()
    %176 = vector.extract_strided_slice %150 {offsets = [0, 0, 8], sizes = [2, 8, 8], strides = [1, 1, 1]} : vector<2x8x32xf32> to vector<2x8x8xf32>
    %177 = arith.truncf %176 : vector<2x8x8xf32> to vector<2x8x8xbf16>
    %178 = vector.extract_strided_slice %151 {offsets = [0, 0, 8], sizes = [2, 16, 8], strides = [1, 1, 1]} : vector<2x16x32xf32> to vector<2x16x8xf32>
    %179 = arith.truncf %178 : vector<2x16x8xf32> to vector<2x16x8xbf16>
    %180 = vector.extract_strided_slice %152 {offsets = [0, 0, 8], sizes = [2, 16, 8], strides = [1, 1, 1]} : vector<2x16x32xf32> to vector<2x16x8xf32>
    %181 = arith.truncf %180 : vector<2x16x8xf32> to vector<2x16x8xbf16>
    "tpu.trace_start"() <{level = 10 : i32, message = "bld,bkd->blk"}> : () -> ()
    %cst_59 = arith.constant dense<0.000000e+00> : vector<2x8x16xf32>
    %182 = tpu.matmul %177, %179, %cst_59 {dimension_numbers = #tpu.dot_dimension_numbers<[2], [2], [1], [1], [0, 0, 0, 1, 1, 1], [0], [0]>} : vector<2x8x8xbf16>, vector<2x16x8xbf16>, vector<2x8x16xf32> -> vector<2x8x16xf32>
    "tpu.trace_stop"() : () -> ()
    %183 = arith.addf %182, %155 : vector<2x8x16xf32>
    %cst_60 = arith.constant dense<0xFF800000> : vector<2x8xf32>
    %184 = vector.multi_reduction <maximumf>, %183, %cst_60 [2] : vector<2x8x16xf32> to vector<2x8xf32>
    %185 = vector.shape_cast %184 : vector<2x8xf32> to vector<2x8x1xf32>
    %186 = vector.broadcast %185 : vector<2x8x1xf32> to vector<2x8x16xf32>
    %187 = arith.subf %183, %186 : vector<2x8x16xf32>
    %188 = math.exp %187 : vector<2x8x16xf32>
    %cst_61 = arith.constant dense<0.000000e+00> : vector<2x8xf32>
    %189 = vector.multi_reduction <add>, %188, %cst_61 [2] : vector<2x8x16xf32> to vector<2x8xf32>
    %190 = vector.shape_cast %189 : vector<2x8xf32> to vector<2x8x1xf32>
    %191 = tpu.reciprocal %190 {approx = true} : vector<2x8x1xf32> -> vector<2x8x1xf32>
    %192 = vector.broadcast %191 : vector<2x8x1xf32> to vector<2x8x16xf32>
    %193 = arith.mulf %188, %192 : vector<2x8x16xf32>
    %194 = arith.truncf %193 : vector<2x8x16xf32> to vector<2x8x16xbf16>
    "tpu.trace_start"() <{level = 10 : i32, message = "blk,bkd->bld"}> : () -> ()
    %cst_62 = arith.constant dense<0.000000e+00> : vector<2x8x8xf32>
    %195 = tpu.matmul %194, %181, %cst_62 {dimension_numbers = #tpu.dot_dimension_numbers<[2], [1], [1], [2], [0, 0, 0, 1, 1, 2], [0], [0]>} : vector<2x8x16xbf16>, vector<2x16x8xbf16>, vector<2x8x8xf32> -> vector<2x8x8xf32>
    "tpu.trace_stop"() : () -> ()
    %196 = vector.extract_strided_slice %150 {offsets = [0, 0, 16], sizes = [2, 8, 8], strides = [1, 1, 1]} : vector<2x8x32xf32> to vector<2x8x8xf32>
    %197 = arith.truncf %196 : vector<2x8x8xf32> to vector<2x8x8xbf16>
    %198 = vector.extract_strided_slice %151 {offsets = [0, 0, 16], sizes = [2, 16, 8], strides = [1, 1, 1]} : vector<2x16x32xf32> to vector<2x16x8xf32>
    %199 = arith.truncf %198 : vector<2x16x8xf32> to vector<2x16x8xbf16>
    %200 = vector.extract_strided_slice %152 {offsets = [0, 0, 16], sizes = [2, 16, 8], strides = [1, 1, 1]} : vector<2x16x32xf32> to vector<2x16x8xf32>
    %201 = arith.truncf %200 : vector<2x16x8xf32> to vector<2x16x8xbf16>
    "tpu.trace_start"() <{level = 10 : i32, message = "bld,bkd->blk"}> : () -> ()
    %cst_63 = arith.constant dense<0.000000e+00> : vector<2x8x16xf32>
    %202 = tpu.matmul %197, %199, %cst_63 {dimension_numbers = #tpu.dot_dimension_numbers<[2], [2], [1], [1], [0, 0, 0, 1, 1, 1], [0], [0]>} : vector<2x8x8xbf16>, vector<2x16x8xbf16>, vector<2x8x16xf32> -> vector<2x8x16xf32>
    "tpu.trace_stop"() : () -> ()
    %203 = arith.addf %202, %155 : vector<2x8x16xf32>
    %cst_64 = arith.constant dense<0xFF800000> : vector<2x8xf32>
    %204 = vector.multi_reduction <maximumf>, %203, %cst_64 [2] : vector<2x8x16xf32> to vector<2x8xf32>
    %205 = vector.shape_cast %204 : vector<2x8xf32> to vector<2x8x1xf32>
    %206 = vector.broadcast %205 : vector<2x8x1xf32> to vector<2x8x16xf32>
    %207 = arith.subf %203, %206 : vector<2x8x16xf32>
    %208 = math.exp %207 : vector<2x8x16xf32>
    %cst_65 = arith.constant dense<0.000000e+00> : vector<2x8xf32>
    %209 = vector.multi_reduction <add>, %208, %cst_65 [2] : vector<2x8x16xf32> to vector<2x8xf32>
    %210 = vector.shape_cast %209 : vector<2x8xf32> to vector<2x8x1xf32>
    %211 = tpu.reciprocal %210 {approx = true} : vector<2x8x1xf32> -> vector<2x8x1xf32>
    %212 = vector.broadcast %211 : vector<2x8x1xf32> to vector<2x8x16xf32>
    %213 = arith.mulf %208, %212 : vector<2x8x16xf32>
    %214 = arith.truncf %213 : vector<2x8x16xf32> to vector<2x8x16xbf16>
    "tpu.trace_start"() <{level = 10 : i32, message = "blk,bkd->bld"}> : () -> ()
    %cst_66 = arith.constant dense<0.000000e+00> : vector<2x8x8xf32>
    %215 = tpu.matmul %214, %201, %cst_66 {dimension_numbers = #tpu.dot_dimension_numbers<[2], [1], [1], [2], [0, 0, 0, 1, 1, 2], [0], [0]>} : vector<2x8x16xbf16>, vector<2x16x8xbf16>, vector<2x8x8xf32> -> vector<2x8x8xf32>
    "tpu.trace_stop"() : () -> ()
    %216 = vector.extract_strided_slice %150 {offsets = [0, 0, 24], sizes = [2, 8, 8], strides = [1, 1, 1]} : vector<2x8x32xf32> to vector<2x8x8xf32>
    %217 = arith.truncf %216 : vector<2x8x8xf32> to vector<2x8x8xbf16>
    %218 = vector.extract_strided_slice %151 {offsets = [0, 0, 24], sizes = [2, 16, 8], strides = [1, 1, 1]} : vector<2x16x32xf32> to vector<2x16x8xf32>
    %219 = arith.truncf %218 : vector<2x16x8xf32> to vector<2x16x8xbf16>
    %220 = vector.extract_strided_slice %152 {offsets = [0, 0, 24], sizes = [2, 16, 8], strides = [1, 1, 1]} : vector<2x16x32xf32> to vector<2x16x8xf32>
    %221 = arith.truncf %220 : vector<2x16x8xf32> to vector<2x16x8xbf16>
    "tpu.trace_start"() <{level = 10 : i32, message = "bld,bkd->blk"}> : () -> ()
    %cst_67 = arith.constant dense<0.000000e+00> : vector<2x8x16xf32>
    %222 = tpu.matmul %217, %219, %cst_67 {dimension_numbers = #tpu.dot_dimension_numbers<[2], [2], [1], [1], [0, 0, 0, 1, 1, 1], [0], [0]>} : vector<2x8x8xbf16>, vector<2x16x8xbf16>, vector<2x8x16xf32> -> vector<2x8x16xf32>
    "tpu.trace_stop"() : () -> ()
    %223 = arith.addf %222, %155 : vector<2x8x16xf32>
    %cst_68 = arith.constant dense<0xFF800000> : vector<2x8xf32>
    %224 = vector.multi_reduction <maximumf>, %223, %cst_68 [2] : vector<2x8x16xf32> to vector<2x8xf32>
    %225 = vector.shape_cast %224 : vector<2x8xf32> to vector<2x8x1xf32>
    %226 = vector.broadcast %225 : vector<2x8x1xf32> to vector<2x8x16xf32>
    %227 = arith.subf %223, %226 : vector<2x8x16xf32>
    %228 = math.exp %227 : vector<2x8x16xf32>
    %cst_69 = arith.constant dense<0.000000e+00> : vector<2x8xf32>
    %229 = vector.multi_reduction <add>, %228, %cst_69 [2] : vector<2x8x16xf32> to vector<2x8xf32>
    %230 = vector.shape_cast %229 : vector<2x8xf32> to vector<2x8x1xf32>
    %231 = tpu.reciprocal %230 {approx = true} : vector<2x8x1xf32> -> vector<2x8x1xf32>
    %232 = vector.broadcast %231 : vector<2x8x1xf32> to vector<2x8x16xf32>
    %233 = arith.mulf %228, %232 : vector<2x8x16xf32>
    %234 = arith.truncf %233 : vector<2x8x16xf32> to vector<2x8x16xbf16>
    "tpu.trace_start"() <{level = 10 : i32, message = "blk,bkd->bld"}> : () -> ()
    %cst_70 = arith.constant dense<0.000000e+00> : vector<2x8x8xf32>
    %235 = tpu.matmul %234, %221, %cst_70 {dimension_numbers = #tpu.dot_dimension_numbers<[2], [1], [1], [2], [0, 0, 0, 1, 1, 2], [0], [0]>} : vector<2x8x16xbf16>, vector<2x16x8xbf16>, vector<2x8x8xf32> -> vector<2x8x8xf32>
    "tpu.trace_stop"() : () -> ()
    %236 = tpu.concatenate %175, %195, %215, %235 in 2 : vector<2x8x8xf32>, vector<2x8x8xf32>, vector<2x8x8xf32>, vector<2x8x8xf32> -> vector<2x8x32xf32>
    %237 = vector.shape_cast %236 : vector<2x8x32xf32> to vector<16x32xf32>
    %c0_71 = arith.constant 0 : index
    %c0_72 = arith.constant 0 : index
    %c0_73 = arith.constant 0 : index
    %238 = vector.load %arg8[%c0_71, %c0_72, %c0_73] : memref<1x32x32xbf16, #tpu.memory_space<vmem>>, vector<1x32x32xbf16>
    %239 = vector.shape_cast %238 : vector<1x32x32xbf16> to vector<32x32xbf16>
    %240 = arith.truncf %237 : vector<16x32xf32> to vector<16x32xbf16>
    %cst_74 = arith.constant dense<0.000000e+00> : vector<16x32xf32>
    %241 = tpu.matmul %240, %239, %cst_74 {dimension_numbers = #tpu.dot_dimension_numbers<[1], [0], [0], [1], [0, 0, 1, 1], [], []>} : vector<16x32xbf16>, vector<32x32xbf16>, vector<16x32xf32> -> vector<16x32xf32>
    %c0_75 = arith.constant 0 : index
    %c0_76 = arith.constant 0 : index
    %c288 = arith.constant 288 : index
    %242 = vector.load %arg11[%c0_75, %c0_76, %c288] : memref<1x1x544xf32, #tpu.memory_space<vmem>>, vector<1x1x32xf32>
    %243 = vector.shape_cast %242 : vector<1x1x32xf32> to vector<1x32xf32>
    %244 = vector.broadcast %243 : vector<1x32xf32> to vector<16x32xf32>
    %245 = arith.addf %241, %244 : vector<16x32xf32>
    %246 = arith.addf %130, %245 : vector<16x32xf32>
    %c0_77 = arith.constant 0 : index
    %c0_78 = arith.constant 0 : index
    %c320 = arith.constant 320 : index
    %247 = vector.load %arg11[%c0_77, %c0_78, %c320] : memref<1x1x544xf32, #tpu.memory_space<vmem>>, vector<1x1x32xf32>
    %248 = vector.shape_cast %247 : vector<1x1x32xf32> to vector<1x32xf32>
    %c0_79 = arith.constant 0 : index
    %c0_80 = arith.constant 0 : index
    %c352 = arith.constant 352 : index
    %249 = vector.load %arg11[%c0_79, %c0_80, %c352] : memref<1x1x544xf32, #tpu.memory_space<vmem>>, vector<1x1x32xf32>
    %250 = vector.shape_cast %249 : vector<1x1x32xf32> to vector<1x32xf32>
    %cst_81 = arith.constant dense<0.000000e+00> : vector<16xf32>
    %251 = vector.multi_reduction <add>, %246, %cst_81 [1] : vector<16x32xf32> to vector<16xf32>
    %252 = vector.shape_cast %251 : vector<16xf32> to vector<16x1xf32>
    %cst_82 = arith.constant 3.200000e+01 : f32
    %253 = vector.broadcast %cst_82 : f32 to vector<16x1xf32>
    %254 = arith.divf %252, %253 : vector<16x1xf32>
    %255 = vector.broadcast %254 : vector<16x1xf32> to vector<16x32xf32>
    %256 = arith.subf %246, %255 : vector<16x32xf32>
    %257 = arith.mulf %256, %256 : vector<16x32xf32>
    %cst_83 = arith.constant dense<0.000000e+00> : vector<16xf32>
    %258 = vector.multi_reduction <add>, %257, %cst_83 [1] : vector<16x32xf32> to vector<16xf32>
    %259 = vector.shape_cast %258 : vector<16xf32> to vector<16x1xf32>
    %cst_84 = arith.constant 3.200000e+01 : f32
    %260 = vector.broadcast %cst_84 : f32 to vector<16x1xf32>
    %261 = arith.divf %259, %260 : vector<16x1xf32>
    %262 = vector.broadcast %254 : vector<16x1xf32> to vector<16x32xf32>
    %263 = arith.subf %246, %262 : vector<16x32xf32>
    %cst_85 = arith.constant 9.99999974E-6 : f32
    %264 = vector.broadcast %cst_85 : f32 to vector<16x1xf32>
    %265 = arith.addf %261, %264 : vector<16x1xf32>
    %266 = math.rsqrt %265 : vector<16x1xf32>
    %267 = vector.broadcast %266 : vector<16x1xf32> to vector<16x32xf32>
    %268 = arith.mulf %263, %267 : vector<16x32xf32>
    %269 = vector.broadcast %248 : vector<1x32xf32> to vector<16x32xf32>
    %270 = arith.mulf %268, %269 : vector<16x32xf32>
    %271 = vector.broadcast %250 : vector<1x32xf32> to vector<16x32xf32>
    %272 = arith.addf %270, %271 : vector<16x32xf32>
    %c0_86 = arith.constant 0 : index
    %c0_87 = arith.constant 0 : index
    %c0_88 = arith.constant 0 : index
    %273 = vector.load %arg9[%c0_86, %c0_87, %c0_88] : memref<1x32x64xbf16, #tpu.memory_space<vmem>>, vector<1x32x64xbf16>
    %274 = vector.shape_cast %273 : vector<1x32x64xbf16> to vector<32x64xbf16>
    %275 = arith.truncf %272 : vector<16x32xf32> to vector<16x32xbf16>
    %cst_89 = arith.constant dense<0.000000e+00> : vector<16x64xf32>
    %276 = tpu.matmul %275, %274, %cst_89 {dimension_numbers = #tpu.dot_dimension_numbers<[1], [0], [0], [1], [0, 0, 1, 1], [], []>} : vector<16x32xbf16>, vector<32x64xbf16>, vector<16x64xf32> -> vector<16x64xf32>
    %c0_90 = arith.constant 0 : index
    %c0_91 = arith.constant 0 : index
    %c384 = arith.constant 384 : index
    %277 = vector.load %arg11[%c0_90, %c0_91, %c384] : memref<1x1x544xf32, #tpu.memory_space<vmem>>, vector<1x1x64xf32>
    %278 = vector.shape_cast %277 : vector<1x1x64xf32> to vector<1x64xf32>
    %279 = vector.broadcast %278 : vector<1x64xf32> to vector<16x64xf32>
    %280 = arith.addf %276, %279 : vector<16x64xf32>
    %cst_92 = arith.constant 0.000000e+00 : f32
    %281 = vector.broadcast %cst_92 : f32 to vector<16x64xf32>
    %282 = arith.maximumf %280, %281 : vector<16x64xf32>
    %c0_93 = arith.constant 0 : index
    %c0_94 = arith.constant 0 : index
    %c0_95 = arith.constant 0 : index
    %283 = vector.load %arg10[%c0_93, %c0_94, %c0_95] : memref<1x64x32xbf16, #tpu.memory_space<vmem>>, vector<1x64x32xbf16>
    %284 = vector.shape_cast %283 : vector<1x64x32xbf16> to vector<64x32xbf16>
    %285 = arith.truncf %282 : vector<16x64xf32> to vector<16x64xbf16>
    %cst_96 = arith.constant dense<0.000000e+00> : vector<16x32xf32>
    %286 = tpu.matmul %285, %284, %cst_96 {dimension_numbers = #tpu.dot_dimension_numbers<[1], [0], [0], [1], [0, 0, 1, 1], [], []>} : vector<16x64xbf16>, vector<64x32xbf16>, vector<16x32xf32> -> vector<16x32xf32>
    %c0_97 = arith.constant 0 : index
    %c0_98 = arith.constant 0 : index
    %c448 = arith.constant 448 : index
    %287 = vector.load %arg11[%c0_97, %c0_98, %c448] : memref<1x1x544xf32, #tpu.memory_space<vmem>>, vector<1x1x32xf32>
    %288 = vector.shape_cast %287 : vector<1x1x32xf32> to vector<1x32xf32>
    %289 = vector.broadcast %288 : vector<1x32xf32> to vector<16x32xf32>
    %290 = arith.addf %286, %289 : vector<16x32xf32>
    %291 = arith.addf %272, %290 : vector<16x32xf32>
    %c0_99 = arith.constant 0 : index
    %c0_100 = arith.constant 0 : index
    %c480 = arith.constant 480 : index
    %292 = vector.load %arg11[%c0_99, %c0_100, %c480] : memref<1x1x544xf32, #tpu.memory_space<vmem>>, vector<1x1x32xf32>
    %293 = vector.shape_cast %292 : vector<1x1x32xf32> to vector<1x32xf32>
    %c0_101 = arith.constant 0 : index
    %c0_102 = arith.constant 0 : index
    %c512 = arith.constant 512 : index
    %294 = vector.load %arg11[%c0_101, %c0_102, %c512] : memref<1x1x544xf32, #tpu.memory_space<vmem>>, vector<1x1x32xf32>
    %295 = vector.shape_cast %294 : vector<1x1x32xf32> to vector<1x32xf32>
    %cst_103 = arith.constant dense<0.000000e+00> : vector<16xf32>
    %296 = vector.multi_reduction <add>, %291, %cst_103 [1] : vector<16x32xf32> to vector<16xf32>
    %297 = vector.shape_cast %296 : vector<16xf32> to vector<16x1xf32>
    %cst_104 = arith.constant 3.200000e+01 : f32
    %298 = vector.broadcast %cst_104 : f32 to vector<16x1xf32>
    %299 = arith.divf %297, %298 : vector<16x1xf32>
    %300 = vector.broadcast %299 : vector<16x1xf32> to vector<16x32xf32>
    %301 = arith.subf %291, %300 : vector<16x32xf32>
    %302 = arith.mulf %301, %301 : vector<16x32xf32>
    %cst_105 = arith.constant dense<0.000000e+00> : vector<16xf32>
    %303 = vector.multi_reduction <add>, %302, %cst_105 [1] : vector<16x32xf32> to vector<16xf32>
    %304 = vector.shape_cast %303 : vector<16xf32> to vector<16x1xf32>
    %cst_106 = arith.constant 3.200000e+01 : f32
    %305 = vector.broadcast %cst_106 : f32 to vector<16x1xf32>
    %306 = arith.divf %304, %305 : vector<16x1xf32>
    %307 = vector.broadcast %299 : vector<16x1xf32> to vector<16x32xf32>
    %308 = arith.subf %291, %307 : vector<16x32xf32>
    %cst_107 = arith.constant 9.99999974E-6 : f32
    %309 = vector.broadcast %cst_107 : f32 to vector<16x1xf32>
    %310 = arith.addf %306, %309 : vector<16x1xf32>
    %311 = math.rsqrt %310 : vector<16x1xf32>
    %312 = vector.broadcast %311 : vector<16x1xf32> to vector<16x32xf32>
    %313 = arith.mulf %308, %312 : vector<16x32xf32>
    %314 = vector.broadcast %293 : vector<1x32xf32> to vector<16x32xf32>
    %315 = arith.mulf %313, %314 : vector<16x32xf32>
    %316 = vector.broadcast %295 : vector<1x32xf32> to vector<16x32xf32>
    %317 = arith.addf %315, %316 : vector<16x32xf32>
    %c0_108 = arith.constant 0 : index
    %c0_109 = arith.constant 0 : index
    %318 = vector.load %arg14[%c0_108, %c0_109] : memref<16x32xf32, #tpu.memory_space<vmem>>, vector<16x32xf32>
    tpu.vector_store %arg14[%c0_108, %c0_109], %317 {strides = array<i32>} : memref<16x32xf32, #tpu.memory_space<vmem>>, vector<16x32xf32>,
    %c1_i32 = arith.constant 1 : i32
    %319 = arith.cmpi eq, %arg0, %c1_i32 : i32
    %320 = arith.extui %319 : i1 to i32
    %c0_i32_110 = arith.constant 0 : i32
    %321 = arith.cmpi ne, %320, %c0_i32_110 : i32
    scf.if %321 {
      %c0_111 = arith.constant 0 : index
      %c0_112 = arith.constant 0 : index
      %322 = vector.load %arg12[%c0_111, %c0_112] : memref<1x64xf32, #tpu.memory_space<vmem>>, vector<1x32xf32>
      %c0_113 = arith.constant 0 : index
      %c32 = arith.constant 32 : index
      %323 = vector.load %arg12[%c0_113, %c32] : memref<1x64xf32, #tpu.memory_space<vmem>>, vector<1x32xf32>
      %cst_114 = arith.constant dense<0.000000e+00> : vector<16xf32>
      %324 = vector.multi_reduction <add>, %317, %cst_114 [1] : vector<16x32xf32> to vector<16xf32>
      %325 = vector.shape_cast %324 : vector<16xf32> to vector<16x1xf32>
      %cst_115 = arith.constant 3.200000e+01 : f32
      %326 = vector.broadcast %cst_115 : f32 to vector<16x1xf32>
      %327 = arith.divf %325, %326 : vector<16x1xf32>
      %328 = vector.broadcast %327 : vector<16x1xf32> to vector<16x32xf32>
      %329 = arith.subf %317, %328 : vector<16x32xf32>
      %330 = arith.mulf %329, %329 : vector<16x32xf32>
      %cst_116 = arith.constant dense<0.000000e+00> : vector<16xf32>
      %331 = vector.multi_reduction <add>, %330, %cst_116 [1] : vector<16x32xf32> to vector<16xf32>
      %332 = vector.shape_cast %331 : vector<16xf32> to vector<16x1xf32>
      %cst_117 = arith.constant 3.200000e+01 : f32
      %333 = vector.broadcast %cst_117 : f32 to vector<16x1xf32>
      %334 = arith.divf %332, %333 : vector<16x1xf32>
      %335 = vector.broadcast %327 : vector<16x1xf32> to vector<16x32xf32>
      %336 = arith.subf %317, %335 : vector<16x32xf32>
      %cst_118 = arith.constant 9.99999974E-6 : f32
      %337 = vector.broadcast %cst_118 : f32 to vector<16x1xf32>
      %338 = arith.addf %334, %337 : vector<16x1xf32>
      %339 = math.rsqrt %338 : vector<16x1xf32>
      %340 = vector.broadcast %339 : vector<16x1xf32> to vector<16x32xf32>
      %341 = arith.mulf %336, %340 : vector<16x32xf32>
      %342 = vector.broadcast %322 : vector<1x32xf32> to vector<16x32xf32>
      %343 = arith.mulf %341, %342 : vector<16x32xf32>
      %344 = vector.broadcast %323 : vector<1x32xf32> to vector<16x32xf32>
      %345 = arith.addf %343, %344 : vector<16x32xf32>
      %c0_119 = arith.constant 0 : index
      %c0_120 = arith.constant 0 : index
      %346 = vector.load %arg13[%c0_119, %c0_120] : memref<16x32xf32, #tpu.memory_space<vmem>>, vector<16x32xf32>
      tpu.vector_store %arg13[%c0_119, %c0_120], %345 {strides = array<i32>} : memref<16x32xf32, #tpu.memory_space<vmem>>, vector<16x32xf32>,
    } else {
    }
    return
  }
  func.func @transform_0(%arg0: i32) -> (i32, i32) {
    %c0_i32 = arith.constant 0 : i32
    %c0_i32_0 = arith.constant 0 : i32
    %c0_i32_1 = arith.constant 0 : i32
    return %c0_i32, %c0_i32_0 : i32, i32
  }
  func.func @transform_1(%arg0: i32) -> (i32, i32) {
    %c0_i32 = arith.constant 0 : i32
    %c0_i32_0 = arith.constant 0 : i32
    %c0_i32_1 = arith.constant 0 : i32
    return %c0_i32, %c0_i32_0 : i32, i32
  }
  func.func @transform_2(%arg0: i32) -> (i32, i32) {
    %c0_i32 = arith.constant 0 : i32
    %c0_i32_0 = arith.constant 0 : i32
    %c0_i32_1 = arith.constant 0 : i32
    return %c0_i32, %c0_i32_0 : i32, i32
  }
  func.func @transform_3(%arg0: i32) -> (i32, i32, i32) {
    %c0_i32 = arith.constant 0 : i32
    %c0_i32_0 = arith.constant 0 : i32
    %c0_i32_1 = arith.constant 0 : i32
    return %arg0, %c0_i32, %c0_i32_0 : i32, i32, i32
  }
  func.func @transform_4(%arg0: i32) -> (i32, i32, i32) {
    %c0_i32 = arith.constant 0 : i32
    %c0_i32_0 = arith.constant 0 : i32
    %c0_i32_1 = arith.constant 0 : i32
    return %arg0, %c0_i32, %c0_i32_0 : i32, i32, i32
  }
  func.func @transform_5(%arg0: i32) -> (i32, i32, i32) {
    %c0_i32 = arith.constant 0 : i32
    %c0_i32_0 = arith.constant 0 : i32
    %c0_i32_1 = arith.constant 0 : i32
    return %arg0, %c0_i32, %c0_i32_0 : i32, i32, i32
  }
  func.func @transform_6(%arg0: i32) -> (i32, i32, i32) {
    %c0_i32 = arith.constant 0 : i32
    %c0_i32_0 = arith.constant 0 : i32
    %c0_i32_1 = arith.constant 0 : i32
    return %arg0, %c0_i32, %c0_i32_0 : i32, i32, i32
  }
  func.func @transform_7(%arg0: i32) -> (i32, i32, i32) {
    %c0_i32 = arith.constant 0 : i32
    %c0_i32_0 = arith.constant 0 : i32
    %c0_i32_1 = arith.constant 0 : i32
    return %arg0, %c0_i32, %c0_i32_0 : i32, i32, i32
  }
  func.func @transform_8(%arg0: i32) -> (i32, i32, i32) {
    %c0_i32 = arith.constant 0 : i32
    %c0_i32_0 = arith.constant 0 : i32
    %c0_i32_1 = arith.constant 0 : i32
    return %arg0, %c0_i32, %c0_i32_0 : i32, i32, i32
  }
  func.func @transform_9(%arg0: i32) -> (i32, i32, i32) {
    %c0_i32 = arith.constant 0 : i32
    %c0_i32_0 = arith.constant 0 : i32
    %c0_i32_1 = arith.constant 0 : i32
    return %arg0, %c0_i32, %c0_i32_0 : i32, i32, i32
  }
  func.func @transform_10(%arg0: i32) -> (i32, i32, i32) {
    %c0_i32 = arith.constant 0 : i32
    %c0_i32_0 = arith.constant 0 : i32
    %c0_i32_1 = arith.constant 0 : i32
    return %arg0, %c0_i32, %c0_i32_0 : i32, i32, i32
  }
  func.func @transform_11(%arg0: i32) -> (i32, i32) {
    %c0_i32 = arith.constant 0 : i32
    %c0_i32_0 = arith.constant 0 : i32
    %c0_i32_1 = arith.constant 0 : i32
    return %c0_i32, %c0_i32_0 : i32, i32
  }
  func.func @transform_12(%arg0: i32) -> (i32, i32) {
    %c0_i32 = arith.constant 0 : i32
    %c0_i32_0 = arith.constant 0 : i32
    %c0_i32_1 = arith.constant 0 : i32
    return %c0_i32, %c0_i32_0 : i32, i32
  }
}

</mosaic_0001>

<llo_original>
// kernel: tpu_custom_call.1
$region0: #{tpu_custom_call.1}
  #allocation0 [shape = 'u32[]', space=smem, size = 0x4, offset = 0x4, fixed_abs, tag = 'smem constant byte address 0x4 - core index']
  #allocation1 [shape = 'u32[144,128]{1,0:T(1,128)}', space=vmem, size = 0x12000, scoped, tag = 'internal scratch']
  #allocation2 [shape = 'f32[16,32]{1,0:T(8,128)}', space=vmem, size = 0x2000, scoped, tag = 'scratch operand']
  %s0 = inlined_call_operand.hbm [shape: f32[16,32], index: 0, kind: input, shape index: {}]
  %s1 = inlined_call_operand.hbm [shape: f32[32,32], index: 1, kind: input, shape index: {}]
  %s2 = inlined_call_operand.hbm [shape: f32[8,16], index: 2, kind: input, shape index: {}]
  %s3 = inlined_call_operand.hbm [shape: bf16[2,32,96], index: 3, kind: input, shape index: {}]
  %s4 = inlined_call_operand.hbm [shape: bf16[2,32,32], index: 4, kind: input, shape index: {}]
  %s5 = inlined_call_operand.hbm [shape: bf16[2,32,32], index: 5, kind: input, shape index: {}]
  %s6 = inlined_call_operand.hbm [shape: bf16[2,32,64], index: 6, kind: input, shape index: {}]
  %s7 = inlined_call_operand.hbm [shape: bf16[2,32,32], index: 7, kind: input, shape index: {}]
  %s8 = inlined_call_operand.hbm [shape: bf16[2,32,64], index: 8, kind: input, shape index: {}]
  %s9 = inlined_call_operand.hbm [shape: bf16[2,64,32], index: 9, kind: input, shape index: {}]
  %s10 = inlined_call_operand.hbm [shape: f32[2,1,544], index: 10, kind: input, shape index: {}]
  %s11 = inlined_call_operand.hbm [shape: f32[1,64], index: 11, kind: input, shape index: {}]
  %s12 = inlined_call_operand.hbm [shape: f32[16,32], index: 12, kind: output, shape index: {}]
  %s13 = sld [smem:[#allocation0]]
  $region137: #{tpu_custom_call.1} parent=0
    _
  %s15 = ssub.s32 1, %s13
  %s16 = scalar_select 0, %s15, %s13
  $region1: #{tpu_custom_call.1} parent=0
    #allocation3 [shape = 'u8[8192]{0}', space=vmem, size = 0x2000, scoped, tag = 'input window, operand 0, single buffered']
    #allocation4 [shape = 's32[2]{0}', space=sflag, size = 0x8, scoped, tag = 'scoped memory for tpu_custom_call.1']
    #allocation5 [shape = 's32[2]{0}', space=sflag, size = 0x8, scoped, tag = 'scoped memory for tpu_custom_call.1']
    #allocation6 [shape = 'u8[16384]{0}', space=vmem, size = 0x4000, scoped, tag = 'input window, operand 1, single buffered']
    #allocation7 [shape = 's32[1]{0}', space=sflag, size = 0x4, scoped, tag = 'scoped memory for tpu_custom_call.1']
    #allocation8 [shape = 'u8[4096]{0}', space=vmem, size = 0x1000, scoped, tag = 'input window, operand 2, single buffered']
    #allocation9 [shape = 'u8[16384]{0}', space=vmem, size = 0x4000, scoped, tag = 'input window, operand 3']
    #allocation10 [shape = 's32[2]{0}', space=sflag, size = 0x8, scoped, tag = 'scoped memory for tpu_custom_call.1']
    #allocation11 [shape = 'u8[16384]{0}', space=vmem, size = 0x4000, scoped, tag = 'input window, operand 4']
    #allocation12 [shape = 'u8[16384]{0}', space=vmem, size = 0x4000, scoped, tag = 'input window, operand 5']
    #allocation13 [shape = 's32[2]{0}', space=sflag, size = 0x8, scoped, tag = 'scoped memory for tpu_custom_call.1']
    #allocation14 [shape = 'u8[16384]{0}', space=vmem, size = 0x4000, scoped, tag = 'input window, operand 6']
    #allocation15 [shape = 'u8[16384]{0}', space=vmem, size = 0x4000, scoped, tag = 'input window, operand 7']
    #allocation16 [shape = 's32[2]{0}', space=sflag, size = 0x8, scoped, tag = 'scoped memory for tpu_custom_call.1']
    #allocation17 [shape = 'u8[16384]{0}', space=vmem, size = 0x4000, scoped, tag = 'input window, operand 8']
    #allocation18 [shape = 'u8[32768]{0}', space=vmem, size = 0x8000, scoped, tag = 'input window, operand 9']
    #allocation19 [shape = 's32[2]{0}', space=sflag, size = 0x8, scoped, tag = 'scoped memory for tpu_custom_call.1']
    #allocation20 [shape = 'u8[5120]{0}', space=vmem, size = 0x1400, scoped, tag = 'input window, operand 10']
    #allocation21 [shape = 'u8[512]{0}', space=vmem, size = 0x400, scoped, tag = 'input window, operand 11, single buffered']
    #allocation22 [shape = 's32[1]{0}', space=sflag, size = 0x4, scoped, tag = 'scoped memory for tpu_custom_call.1']
    #allocation23 [shape = 'u8[8192]{0}', space=vmem, size = 0x2000, scoped, tag = 'output window, operand 0, single buffered']
    %17 = vsyncpa [#allocation4], 0
    %18 = vsyncpa [#allocation7], 0
    %19 = vsyncpa [#allocation10], 0
    %s20 = scalar_lea.sflag [#allocation10], 1
    %21 = vsyncpa %s20, 0
    %22 = vsyncpa [#allocation13], 0
    %s23 = scalar_lea.sflag [#allocation13], 1
    %24 = vsyncpa %s23, 0
    %25 = vsyncpa [#allocation16], 0
    %s26 = scalar_lea.sflag [#allocation16], 1
    %27 = vsyncpa %s26, 0
    %28 = vsyncpa [#allocation19], 0
    %s29 = scalar_lea.sflag [#allocation19], 1
    %30 = vsyncpa %s29, 0
    %31 = vsyncpa [#allocation22], 0
    %32 = vsyncpa [#allocation5], 0
    loop: start=0, step=1, limit=4
    $region2: #{tpu_custom_call.1} parent=1 // loop_pre_header
      _
    $region3: #{tpu_custom_call.1} parent=1 // loop_header
      %s34 = sphi 0, %s38
      %p35 = scmp.ge.s32.totalorder %s34, 4
      %s42 = sphi 0, %s42
      %s44 = sphi 0, %s42
      %s45 = sphi 0, %s44
      %s59 = sphi 0, %s45
      %s63 = sphi 0, %s63
      %s65 = sphi 0, %s63
      %s66 = sphi 0, %s65
      %s80 = sphi 0, %s66
      %s84 = sphi 0, %s84
      %s86 = sphi 0, %s84
      %s87 = sphi 0, %s86
      %s101 = sphi 0, %s87
      %s107 = sphi 0, %s109
      %s110 = sphi 0, %s107
      %s111 = sphi 0, %s110
      %s127 = sphi 0, %s111
      %s133 = sphi 0, %s135
      %s136 = sphi 0, %s133
      %s137 = sphi 0, %s136
      %s153 = sphi 0, %s137
      %s159 = sphi 0, %s161
      %s162 = sphi 0, %s159
      %s163 = sphi 0, %s162
      %s179 = sphi 0, %s163
      %s185 = sphi 0, %s187
      %s188 = sphi 0, %s185
      %s189 = sphi 0, %s188
      %s205 = sphi 0, %s189
      %s211 = sphi 0, %s213
      %s214 = sphi 0, %s211
      %s215 = sphi 0, %s214
      %s231 = sphi 0, %s215
      %s237 = sphi 0, %s239
      %s240 = sphi 0, %s237
      %s241 = sphi 0, %s240
      %s257 = sphi 0, %s241
      %s263 = sphi 0, %s265
      %s266 = sphi 0, %s263
      %s267 = sphi 0, %s266
      %s283 = sphi 0, %s267
      %s289 = sphi 0, %s291
      %s292 = sphi 0, %s289
      %s293 = sphi 0, %s292
      %s309 = sphi 0, %s293
      %s313 = sphi 0, %s313
      %s315 = sphi 0, %s313
      %s316 = sphi 0, %s315
      %s330 = sphi 0, %s316
      %s334 = sphi 0, %s334
      %s336 = sphi 0, %s334
      %s337 = sphi 0, %s336
      %s351 = sphi 0, %s337
    $region4: #{tpu_custom_call.1} parent=1 // loop_header_branch
      %37 = sbr.rel (%p35) target = $region8
    $region5: #{tpu_custom_call.1} parent=1 // loop_body
      %s39 = ssub.s32 %s34, 1
      %s40 = ssub.s32 %s34, 2
      %s41 = sadd.s32 %s34, 1
      %s43 = sadd.s32 %s42, 1
      %p46 = scmp.eq.s32.totalorder %s34, 1
      %p47 = scmp.ne.s32.totalorder %s42, %s44
      %p48 = scmp.eq.s32.totalorder %s34, 0
      %p49 = por %p47, %p48
      %p50 = scmp.ne.s32.totalorder %s42, %s44
      %p51 = scmp.eq.s32.totalorder %s39, 1
      %p52 = por %p50, %p51
      %p53 = scmp.ne.s32.totalorder %s44, %s45
      %p54 = scmp.eq.s32.totalorder %s39, 0
      %p55 = por %p53, %p54
      %p56 = scmp.ne.s32.totalorder %s44, %s45
      %p57 = scmp.eq.s32.totalorder %s40, 1
      %p58 = por %p56, %p57
      %p60 = scmp.ne.s32.totalorder %s45, %s59
      %p61 = scmp.eq.s32.totalorder %s40, 0
      %p62 = por %p60, %p61
      %s64 = sadd.s32 %s63, 1
      %p67 = scmp.eq.s32.totalorder %s34, 1
      %p68 = scmp.ne.s32.totalorder %s63, %s65
      %p69 = scmp.eq.s32.totalorder %s34, 0
      %p70 = por %p68, %p69
      %p71 = scmp.ne.s32.totalorder %s63, %s65
      %p72 = scmp.eq.s32.totalorder %s39, 1
      %p73 = por %p71, %p72
      %p74 = scmp.ne.s32.totalorder %s65, %s66
      %p75 = scmp.eq.s32.totalorder %s39, 0
      %p76 = por %p74, %p75
      %p77 = scmp.ne.s32.totalorder %s65, %s66
      %p78 = scmp.eq.s32.totalorder %s40, 1
      %p79 = por %p77, %p78
      %p81 = scmp.ne.s32.totalorder %s66, %s80
      %p82 = scmp.eq.s32.totalorder %s40, 0
      %p83 = por %p81, %p82
      %s85 = sadd.s32 %s84, 1
      %p88 = scmp.eq.s32.totalorder %s34, 1
      %p89 = scmp.ne.s32.totalorder %s84, %s86
      %p90 = scmp.eq.s32.totalorder %s34, 0
      %p91 = por %p89, %p90
      %p92 = scmp.ne.s32.totalorder %s84, %s86
      %p93 = scmp.eq.s32.totalorder %s39, 1
      %p94 = por %p92, %p93
      %p95 = scmp.ne.s32.totalorder %s86, %s87
      %p96 = scmp.eq.s32.totalorder %s39, 0
      %p97 = por %p95, %p96
      %p98 = scmp.ne.s32.totalorder %s86, %s87
      %p99 = scmp.eq.s32.totalorder %s40, 1
      %p100 = por %p98, %p99
      %p102 = scmp.ne.s32.totalorder %s87, %s101
      %p103 = scmp.eq.s32.totalorder %s40, 0
      %p104 = por %p102, %p103
      %s105 = ssub.s32 %s34, %s41
      %p106 = scmp.eq.s32.totalorder %s105, 0
      %s108 = sadd.s32 %s107, 1
      %s109 = scalar_select %p106, %s107, %s108
      %p112 = pneg %p106
      %p113 = scmp.eq.s32.totalorder %s34, 1
      %p114 = por %p112, %p113
      %p115 = scmp.ne.s32.totalorder %s107, %s110
      %p116 = scmp.eq.s32.totalorder %s34, 0
      %p117 = por %p115, %p116
      %p118 = scmp.ne.s32.totalorder %s107, %s110
      %p119 = scmp.eq.s32.totalorder %s39, 1
      %p120 = por %p118, %p119
      %p121 = scmp.ne.s32.totalorder %s110, %s111
      %p122 = scmp.eq.s32.totalorder %s39, 0
      %p123 = por %p121, %p122
      %p124 = scmp.ne.s32.totalorder %s110, %s111
      %p125 = scmp.eq.s32.totalorder %s40, 1
      %p126 = por %p124, %p125
      %p128 = scmp.ne.s32.totalorder %s111, %s127
      %p129 = scmp.eq.s32.totalorder %s40, 0
      %p130 = por %p128, %p129
      %s131 = ssub.s32 %s34, %s41
      %p132 = scmp.eq.s32.totalorder %s131, 0
      %s134 = sadd.s32 %s133, 1
      %s135 = scalar_select %p132, %s133, %s134
      %p138 = pneg %p132
      %p139 = scmp.eq.s32.totalorder %s34, 1
      %p140 = por %p138, %p139
      %p141 = scmp.ne.s32.totalorder %s133, %s136
      %p142 = scmp.eq.s32.totalorder %s34, 0
      %p143 = por %p141, %p142
      %p144 = scmp.ne.s32.totalorder %s133, %s136
      %p145 = scmp.eq.s32.totalorder %s39, 1
      %p146 = por %p144, %p145
      %p147 = scmp.ne.s32.totalorder %s136, %s137
      %p148 = scmp.eq.s32.totalorder %s39, 0
      %p149 = por %p147, %p148
      %p150 = scmp.ne.s32.totalorder %s136, %s137
      %p151 = scmp.eq.s32.totalorder %s40, 1
      %p152 = por %p150, %p151
      %p154 = scmp.ne.s32.totalorder %s137, %s153
      %p155 = scmp.eq.s32.totalorder %s40, 0
      %p156 = por %p154, %p155
      %s157 = ssub.s32 %s34, %s41
      %p158 = scmp.eq.s32.totalorder %s157, 0
      %s160 = sadd.s32 %s159, 1
      %s161 = scalar_select %p158, %s159, %s160
      %p164 = pneg %p158
      %p165 = scmp.eq.s32.totalorder %s34, 1
      %p166 = por %p164, %p165
      %p167 = scmp.ne.s32.totalorder %s159, %s162
      %p168 = scmp.eq.s32.totalorder %s34, 0
      %p169 = por %p167, %p168
      %p170 = scmp.ne.s32.totalorder %s159, %s162
      %p171 = scmp.eq.s32.totalorder %s39, 1
      %p172 = por %p170, %p171
      %p173 = scmp.ne.s32.totalorder %s162, %s163
      %p174 = scmp.eq.s32.totalorder %s39, 0
      %p175 = por %p173, %p174
      %p176 = scmp.ne.s32.totalorder %s162, %s163
      %p177 = scmp.eq.s32.totalorder %s40, 1
      %p178 = por %p176, %p177
      %p180 = scmp.ne.s32.totalorder %s163, %s179
      %p181 = scmp.eq.s32.totalorder %s40, 0
      %p182 = por %p180, %p181
      %s183 = ssub.s32 %s34, %s41
      %p184 = scmp.eq.s32.totalorder %s183, 0
      %s186 = sadd.s32 %s185, 1
      %s187 = scalar_select %p184, %s185, %s186
      %p190 = pneg %p184
      %p191 = scmp.eq.s32.totalorder %s34, 1
      %p192 = por %p190, %p191
      %p193 = scmp.ne.s32.totalorder %s185, %s188
      %p194 = scmp.eq.s32.totalorder %s34, 0
      %p195 = por %p193, %p194
      %p196 = scmp.ne.s32.totalorder %s185, %s188
      %p197 = scmp.eq.s32.totalorder %s39, 1
      %p198 = por %p196, %p197
      %p199 = scmp.ne.s32.totalorder %s188, %s189
      %p200 = scmp.eq.s32.totalorder %s39, 0
      %p201 = por %p199, %p200
      %p202 = scmp.ne.s32.totalorder %s188, %s189
      %p203 = scmp.eq.s32.totalorder %s40, 1
      %p204 = por %p202, %p203
      %p206 = scmp.ne.s32.totalorder %s189, %s205
      %p207 = scmp.eq.s32.totalorder %s40, 0
      %p208 = por %p206, %p207
      %s209 = ssub.s32 %s34, %s41
      %p210 = scmp.eq.s32.totalorder %s209, 0
      %s212 = sadd.s32 %s211, 1
      %s213 = scalar_select %p210, %s211, %s212
      %p216 = pneg %p210
      %p217 = scmp.eq.s32.totalorder %s34, 1
      %p218 = por %p216, %p217
      %p219 = scmp.ne.s32.totalorder %s211, %s214
      %p220 = scmp.eq.s32.totalorder %s34, 0
      %p221 = por %p219, %p220
      %p222 = scmp.ne.s32.totalorder %s211, %s214
      %p223 = scmp.eq.s32.totalorder %s39, 1
      %p224 = por %p222, %p223
      %p225 = scmp.ne.s32.totalorder %s214, %s215
      %p226 = scmp.eq.s32.totalorder %s39, 0
      %p227 = por %p225, %p226
      %p228 = scmp.ne.s32.totalorder %s214, %s215
      %p229 = scmp.eq.s32.totalorder %s40, 1
      %p230 = por %p228, %p229
      %p232 = scmp.ne.s32.totalorder %s215, %s231
      %p233 = scmp.eq.s32.totalorder %s40, 0
      %p234 = por %p232, %p233
      %s235 = ssub.s32 %s34, %s41
      %p236 = scmp.eq.s32.totalorder %s235, 0
      %s238 = sadd.s32 %s237, 1
      %s239 = scalar_select %p236, %s237, %s238
      %p242 = pneg %p236
      %p243 = scmp.eq.s32.totalorder %s34, 1
      %p244 = por %p242, %p243
      %p245 = scmp.ne.s32.totalorder %s237, %s240
      %p246 = scmp.eq.s32.totalorder %s34, 0
      %p247 = por %p245, %p246
      %p248 = scmp.ne.s32.totalorder %s237, %s240
      %p249 = scmp.eq.s32.totalorder %s39, 1
      %p250 = por %p248, %p249
      %p251 = scmp.ne.s32.totalorder %s240, %s241
      %p252 = scmp.eq.s32.totalorder %s39, 0
      %p253 = por %p251, %p252
      %p254 = scmp.ne.s32.totalorder %s240, %s241
      %p255 = scmp.eq.s32.totalorder %s40, 1
      %p256 = por %p254, %p255
      %p258 = scmp.ne.s32.totalorder %s241, %s257
      %p259 = scmp.eq.s32.totalorder %s40, 0
      %p260 = por %p258, %p259
      %s261 = ssub.s32 %s34, %s41
      %p262 = scmp.eq.s32.totalorder %s261, 0
      %s264 = sadd.s32 %s263, 1
      %s265 = scalar_select %p262, %s263, %s264
      %p268 = pneg %p262
      %p269 = scmp.eq.s32.totalorder %s34, 1
      %p270 = por %p268, %p269
      %p271 = scmp.ne.s32.totalorder %s263, %s266
      %p272 = scmp.eq.s32.totalorder %s34, 0
      %p273 = por %p271, %p272
      %p274 = scmp.ne.s32.totalorder %s263, %s266
      %p275 = scmp.eq.s32.totalorder %s39, 1
      %p276 = por %p274, %p275
      %p277 = scmp.ne.s32.totalorder %s266, %s267
      %p278 = scmp.eq.s32.totalorder %s39, 0
      %p279 = por %p277, %p278
      %p280 = scmp.ne.s32.totalorder %s266, %s267
      %p281 = scmp.eq.s32.totalorder %s40, 1
      %p282 = por %p280, %p281
      %p284 = scmp.ne.s32.totalorder %s267, %s283
      %p285 = scmp.eq.s32.totalorder %s40, 0
      %p286 = por %p284, %p285
      %s287 = ssub.s32 %s34, %s41
      %p288 = scmp.eq.s32.totalorder %s287, 0
      %s290 = sadd.s32 %s289, 1
      %s291 = scalar_select %p288, %s289, %s290
      %p294 = pneg %p288
      %p295 = scmp.eq.s32.totalorder %s34, 1
      %p296 = por %p294, %p295
      %p297 = scmp.ne.s32.totalorder %s289, %s292
      %p298 = scmp.eq.s32.totalorder %s34, 0
      %p299 = por %p297, %p298
      %p300 = scmp.ne.s32.totalorder %s289, %s292
      %p301 = scmp.eq.s32.totalorder %s39, 1
      %p302 = por %p300, %p301
      %p303 = scmp.ne.s32.totalorder %s292, %s293
      %p304 = scmp.eq.s32.totalorder %s39, 0
      %p305 = por %p303, %p304
      %p306 = scmp.ne.s32.totalorder %s292, %s293
      %p307 = scmp.eq.s32.totalorder %s40, 1
      %p308 = por %p306, %p307
      %p310 = scmp.ne.s32.totalorder %s293, %s309
      %p311 = scmp.eq.s32.totalorder %s40, 0
      %p312 = por %p310, %p311
      %s314 = sadd.s32 %s313, 1
      %p317 = scmp.eq.s32.totalorder %s34, 1
      %p318 = scmp.ne.s32.totalorder %s313, %s315
      %p319 = scmp.eq.s32.totalorder %s34, 0
      %p320 = por %p318, %p319
      %p321 = scmp.ne.s32.totalorder %s313, %s315
      %p322 = scmp.eq.s32.totalorder %s39, 1
      %p323 = por %p321, %p322
      %p324 = scmp.ne.s32.totalorder %s315, %s316
      %p325 = scmp.eq.s32.totalorder %s39, 0
      %p326 = por %p324, %p325
      %p327 = scmp.ne.s32.totalorder %s315, %s316
      %p328 = scmp.eq.s32.totalorder %s40, 1
      %p329 = por %p327, %p328
      %p331 = scmp.ne.s32.totalorder %s316, %s330
      %p332 = scmp.eq.s32.totalorder %s40, 0
      %p333 = por %p331, %p332
      %s335 = sadd.s32 %s334, 1
      %p338 = scmp.eq.s32.totalorder %s34, 1
      %p339 = scmp.ne.s32.totalorder %s334, %s336
      %p340 = scmp.eq.s32.totalorder %s34, 0
      %p341 = por %p339, %p340
      %p342 = scmp.ne.s32.totalorder %s334, %s336
      %p343 = scmp.eq.s32.totalorder %s39, 1
      %p344 = por %p342, %p343
      %p345 = scmp.ne.s32.totalorder %s336, %s337
      %p346 = scmp.eq.s32.totalorder %s39, 0
      %p347 = por %p345, %p346
      %p348 = scmp.ne.s32.totalorder %s336, %s337
      %p349 = scmp.eq.s32.totalorder %s40, 1
      %p350 = por %p348, %p349
      %p352 = scmp.ne.s32.totalorder %s337, %s351
      %p353 = scmp.eq.s32.totalorder %s40, 0
      %p354 = por %p352, %p353
      %p355 = scmp.le.s32.totalorder 1, %s34
      %p356 = scmp.lt.s32.totalorder %s34, 3
      %p357 = pnand %p355, %p356
      %p358 = pneg %p357
      // Predicated region
      $region9: #{tpu_custom_call.1} parent=5 // pred_check
        _
      $region10: #{tpu_custom_call.1} parent=5 // pred_check_branch
        %360 = sbr.rel (%p357) target = $region12
      $region11: #{tpu_custom_call.1} parent=5 // pred_region
        %s361 = ssub.s32 %s34, 1
        // Predicated region
        $region13: #{tpu_custom_call.1} parent=11 // pred_check
          %p362 = pneg %p55
        $region14: #{tpu_custom_call.1} parent=11 // pred_check_branch
          %364 = sbr.rel (%p362) target = $region16
        $region15: #{tpu_custom_call.1} parent=11 // pred_region
          %s366 = ssub.s32 256, 256
          %367 = vsyncadd [#allocation4], %s366
          %s368 = sshll.u32 [#allocation3], 4
          %s369 = int_to_ptr.vmem [resolvable:$true] %s368
          %374 = dma.hbm_to_vmem [thread:$0]  %s0, 256, %s369, [#allocation4], 128, 128, 8
        $region16: #{tpu_custom_call.1} parent=11 // pred_fallthru
          _
        // Predicated region
        $region17: #{tpu_custom_call.1} parent=11 // pred_check
          %p375 = pneg %p76
        $region18: #{tpu_custom_call.1} parent=11 // pred_check_branch
          %377 = sbr.rel (%p375) target = $region20
        $region19: #{tpu_custom_call.1} parent=11 // pred_region
          %s379 = ssub.s32 512, 512
          %380 = vsyncadd [#allocation7], %s379
          %s381 = sshll.u32 [#allocation6], 4
          %s382 = int_to_ptr.vmem [resolvable:$true] %s381
          %387 = dma.hbm_to_vmem [thread:$0]  %s1, 512, %s382, [#allocation7], 128, 128, 8
        $region20: #{tpu_custom_call.1} parent=11 // pred_fallthru
          _
        // Predicated region
        $region21: #{tpu_custom_call.1} parent=11 // pred_check
          %p388 = pneg %p97
        $region22: #{tpu_custom_call.1} parent=11 // pred_check_branch
          %390 = sbr.rel (%p388) target = $region24
        $region23: #{tpu_custom_call.1} parent=11 // pred_region
          %s392 = ssub.s32 128, 128
          %393 = vsyncadd [#allocation7], %s392
          %s395 = sshll.u32 [#allocation8], 4
          %s396 = int_to_ptr.vmem [resolvable:$true] %s395
          %398 = dma.hbm_to_vmem [thread:$0]  %s2, 128, %s396, [#allocation7]
        $region24: #{tpu_custom_call.1} parent=11 // pred_fallthru
          _
        // Predicated region
        $region25: #{tpu_custom_call.1} parent=11 // pred_check
          %p399 = pneg %p326
        $region26: #{tpu_custom_call.1} parent=11 // pred_check_branch
          %401 = sbr.rel (%p399) target = $region28
        $region27: #{tpu_custom_call.1} parent=11 // pred_region
          %s403 = ssub.s32 16, 16
          %404 = vsyncadd [#allocation22], %s403
          %s406 = sshll.u32 [#allocation21], 4
          %s407 = int_to_ptr.vmem [resolvable:$true] %s406
          %409 = dma.hbm_to_vmem [thread:$0]  %s11, 16, %s407, [#allocation22]
        $region28: #{tpu_custom_call.1} parent=11 // pred_fallthru
          _
      $region12: #{tpu_custom_call.1} parent=5 // pred_fallthru
        _
      %p410 = scmp.lt.s32.totalorder %s34, 2
      // Predicated region
      $region29: #{tpu_custom_call.1} parent=5 // pred_check
        %p411 = pneg %p410
      $region30: #{tpu_custom_call.1} parent=5 // pred_check_branch
        %413 = sbr.rel (%p411) target = $region32
      $region31: #{tpu_custom_call.1} parent=5 // pred_region
        // Predicated region
        $region33: #{tpu_custom_call.1} parent=31 // pred_check
          %p414 = pneg %p117
        $region34: #{tpu_custom_call.1} parent=31 // pred_check_branch
          %416 = sbr.rel (%p414) target = $region36
        $region35: #{tpu_custom_call.1} parent=31 // pred_region
          %s417 = sand.u32 %s34, 1
          %s418 = scalar_lea.sflag [#allocation10], %s417
          %s419 = sand.u32 %s107, 1
          %s420 = smul.addr %s419, 16
          %s421 = scalar_lea.vmem [#allocation9], %s420
          %s423 = ssub.s32 256, 256
          %424 = vsyncadd %s418, %s423
          %s425 = smul.addr %s34, 4
          %s426 = smul.addr %s425, 64
          %s427 = scalar_lea.hbm %s3, %s426
          %s428 = sshll.u32 %s421, 4
          %s429 = int_to_ptr.vmem [resolvable:$true] %s428
          %434 = dma.hbm_to_vmem [thread:$0]  %s427, 256, %s429, %s418, 64, 64, 4
        $region36: #{tpu_custom_call.1} parent=31 // pred_fallthru
          _
        // Predicated region
        $region37: #{tpu_custom_call.1} parent=31 // pred_check
          %p435 = pneg %p143
        $region38: #{tpu_custom_call.1} parent=31 // pred_check_branch
          %437 = sbr.rel (%p435) target = $region40
        $region39: #{tpu_custom_call.1} parent=31 // pred_region
          %s438 = sand.u32 %s34, 1
          %s439 = scalar_lea.sflag [#allocation10], %s438
          %s440 = sand.u32 %s133, 1
          %s441 = smul.addr %s440, 16
          %s442 = scalar_lea.vmem [#allocation11], %s441
          %s444 = ssub.s32 256, 256
          %445 = vsyncadd %s439, %s444
          %s446 = smul.addr %s34, 4
          %s447 = smul.addr %s446, 64
          %s448 = scalar_lea.hbm %s4, %s447
          %s449 = sshll.u32 %s442, 4
          %s450 = int_to_ptr.vmem [resolvable:$true] %s449
          %455 = dma.hbm_to_vmem [thread:$0]  %s448, 256, %s450, %s439, 64, 64, 4
        $region40: #{tpu_custom_call.1} parent=31 // pred_fallthru
          _
        // Predicated region
        $region41: #{tpu_custom_call.1} parent=31 // pred_check
          %p456 = pneg %p169
        $region42: #{tpu_custom_call.1} parent=31 // pred_check_branch
          %458 = sbr.rel (%p456) target = $region44
        $region43: #{tpu_custom_call.1} parent=31 // pred_region
          %s459 = sand.u32 %s34, 1
          %s460 = scalar_lea.sflag [#allocation13], %s459
          %s461 = sand.u32 %s159, 1
          %s462 = smul.addr %s461, 16
          %s463 = scalar_lea.vmem [#allocation12], %s462
          %s465 = ssub.s32 256, 256
          %466 = vsyncadd %s460, %s465
          %s467 = smul.addr %s34, 4
          %s468 = smul.addr %s467, 64
          %s469 = scalar_lea.hbm %s5, %s468
          %s470 = sshll.u32 %s463, 4
          %s471 = int_to_ptr.vmem [resolvable:$true] %s470
          %476 = dma.hbm_to_vmem [thread:$0]  %s469, 256, %s471, %s460, 64, 64, 4
        $region44: #{tpu_custom_call.1} parent=31 // pred_fallthru
          _
        // Predicated region
        $region45: #{tpu_custom_call.1} parent=31 // pred_check
          %p477 = pneg %p195
        $region46: #{tpu_custom_call.1} parent=31 // pred_check_branch
          %479 = sbr.rel (%p477) target = $region48
        $region47: #{tpu_custom_call.1} parent=31 // pred_region
          %s480 = sand.u32 %s34, 1
          %s481 = scalar_lea.sflag [#allocation13], %s480
          %s482 = sand.u32 %s185, 1
          %s483 = smul.addr %s482, 16
          %s484 = scalar_lea.vmem [#allocation14], %s483
          %s486 = ssub.s32 256, 256
          %487 = vsyncadd %s481, %s486
          %s488 = smul.addr %s34, 4
          %s489 = smul.addr %s488, 64
          %s490 = scalar_lea.hbm %s6, %s489
          %s491 = sshll.u32 %s484, 4
          %s492 = int_to_ptr.vmem [resolvable:$true] %s491
          %497 = dma.hbm_to_vmem [thread:$0]  %s490, 256, %s492, %s481, 64, 64, 4
        $region48: #{tpu_custom_call.1} parent=31 // pred_fallthru
          _
        // Predicated region
        $region49: #{tpu_custom_call.1} parent=31 // pred_check
          %p498 = pneg %p221
        $region50: #{tpu_custom_call.1} parent=31 // pred_check_branch
          %500 = sbr.rel (%p498) target = $region52
        $region51: #{tpu_custom_call.1} parent=31 // pred_region
          %s501 = sand.u32 %s34, 1
          %s502 = scalar_lea.sflag [#allocation16], %s501
          %s503 = sand.u32 %s211, 1
          %s504 = smul.addr %s503, 16
          %s505 = scalar_lea.vmem [#allocation15], %s504
          %s507 = ssub.s32 256, 256
          %508 = vsyncadd %s502, %s507
          %s509 = smul.addr %s34, 4
          %s510 = smul.addr %s509, 64
          %s511 = scalar_lea.hbm %s7, %s510
          %s512 = sshll.u32 %s505, 4
          %s513 = int_to_ptr.vmem [resolvable:$true] %s512
          %518 = dma.hbm_to_vmem [thread:$0]  %s511, 256, %s513, %s502, 64, 64, 4
        $region52: #{tpu_custom_call.1} parent=31 // pred_fallthru
          _
        // Predicated region
        $region53: #{tpu_custom_call.1} parent=31 // pred_check
          %p519 = pneg %p247
        $region54: #{tpu_custom_call.1} parent=31 // pred_check_branch
          %521 = sbr.rel (%p519) target = $region56
        $region55: #{tpu_custom_call.1} parent=31 // pred_region
          %s522 = sand.u32 %s34, 1
          %s523 = scalar_lea.sflag [#allocation16], %s522
          %s524 = sand.u32 %s237, 1
          %s525 = smul.addr %s524, 16
          %s526 = scalar_lea.vmem [#allocation17], %s525
          %s528 = ssub.s32 256, 256
          %529 = vsyncadd %s523, %s528
          %s530 = smul.addr %s34, 4
          %s531 = smul.addr %s530, 64
          %s532 = scalar_lea.hbm %s8, %s531
          %s533 = sshll.u32 %s526, 4
          %s534 = int_to_ptr.vmem [resolvable:$true] %s533
          %539 = dma.hbm_to_vmem [thread:$0]  %s532, 256, %s534, %s523, 64, 64, 4
        $region56: #{tpu_custom_call.1} parent=31 // pred_fallthru
          _
        // Predicated region
        $region57: #{tpu_custom_call.1} parent=31 // pred_check
          %p540 = pneg %p273
        $region58: #{tpu_custom_call.1} parent=31 // pred_check_branch
          %542 = sbr.rel (%p540) target = $region60
        $region59: #{tpu_custom_call.1} parent=31 // pred_region
          %s543 = sand.u32 %s34, 1
          %s544 = scalar_lea.sflag [#allocation19], %s543
          %s545 = sand.u32 %s263, 1
          %s546 = smul.addr %s545, 32
          %s547 = scalar_lea.vmem [#allocation18], %s546
          %s549 = ssub.s32 512, 512
          %550 = vsyncadd %s544, %s549
          %s551 = smul.addr %s34, 8
          %s552 = smul.addr %s551, 64
          %s553 = scalar_lea.hbm %s9, %s552
          %s554 = sshll.u32 %s547, 4
          %s555 = int_to_ptr.vmem [resolvable:$true] %s554
          %560 = dma.hbm_to_vmem [thread:$0]  %s553, 512, %s555, %s544, 64, 64, 4
        $region60: #{tpu_custom_call.1} parent=31 // pred_fallthru
          _
        // Predicated region
        $region61: #{tpu_custom_call.1} parent=31 // pred_check
          %p561 = pneg %p299
        $region62: #{tpu_custom_call.1} parent=31 // pred_check_branch
          %563 = sbr.rel (%p561) target = $region64
        $region63: #{tpu_custom_call.1} parent=31 // pred_region
          %s564 = sand.u32 %s34, 1
          %s565 = scalar_lea.sflag [#allocation19], %s564
          %s566 = sand.u32 %s289, 1
          %s567 = smul.addr %s566, 5
          %s568 = scalar_lea.vmem [#allocation20], %s567
          %s570 = ssub.s32 80, 80
          %571 = vsyncadd %s565, %s570
          %s572 = smul.addr %s34, 5
          %s573 = smul.addr %s572, 16
          %s574 = scalar_lea.hbm %s10, %s573
          %s576 = sshll.u32 %s568, 4
          %s577 = int_to_ptr.vmem [resolvable:$true] %s576
          %579 = dma.hbm_to_vmem [thread:$0]  %s574, 80, %s577, %s565
        $region64: #{tpu_custom_call.1} parent=31 // pred_fallthru
          _
      $region32: #{tpu_custom_call.1} parent=5 // pred_fallthru
        _
      %p580 = scmp.le.s32.totalorder 1, %s34
      %p581 = scmp.lt.s32.totalorder %s34, 3
      %p582 = pnand %p580, %p581
      %p583 = pneg %p582
      // Predicated region
      $region65: #{tpu_custom_call.1} parent=5 // pred_check
        _
      $region66: #{tpu_custom_call.1} parent=5 // pred_check_branch
        %585 = sbr.rel (%p582) target = $region68
      $region67: #{tpu_custom_call.1} parent=5 // pred_region
        %s586 = ssub.s32 %s34, 1
        // Predicated region
        $region69: #{tpu_custom_call.1} parent=67 // pred_check
          %p587 = pneg %p55
        $region70: #{tpu_custom_call.1} parent=67 // pred_check_branch
          %589 = sbr.rel (%p587) target = $region72
        $region71: #{tpu_custom_call.1} parent=67 // pred_region
          %590 = dma.done [#allocation4], 256
        $region72: #{tpu_custom_call.1} parent=67 // pred_fallthru
          _
        // Predicated region
        $region73: #{tpu_custom_call.1} parent=67 // pred_check
          %p591 = pneg %p76
        $region74: #{tpu_custom_call.1} parent=67 // pred_check_branch
          %593 = sbr.rel (%p591) target = $region76
        $region75: #{tpu_custom_call.1} parent=67 // pred_region
          %594 = dma.done [#allocation7], 512
        $region76: #{tpu_custom_call.1} parent=67 // pred_fallthru
          _
        // Predicated region
        $region77: #{tpu_custom_call.1} parent=67 // pred_check
          %p595 = pneg %p97
        $region78: #{tpu_custom_call.1} parent=67 // pred_check_branch
          %597 = sbr.rel (%p595) target = $region80
        $region79: #{tpu_custom_call.1} parent=67 // pred_region
          %598 = dma.done [#allocation7], 128
        $region80: #{tpu_custom_call.1} parent=67 // pred_fallthru
          _
        %s599 = sand.u32 %s39, 1
        %s600 = scalar_lea.sflag [#allocation10], %s599
        %s601 = sand.u32 %s110, 1
        %s602 = smul.addr %s601, 16
        %s603 = scalar_lea.vmem [#allocation9], %s602
        // Predicated region
        $region81: #{tpu_custom_call.1} parent=67 // pred_check
          %p604 = pneg %p123
        $region82: #{tpu_custom_call.1} parent=67 // pred_check_branch
          %606 = sbr.rel (%p604) target = $region84
        $region83: #{tpu_custom_call.1} parent=67 // pred_region
          %607 = dma.done %s600, 256
        $region84: #{tpu_custom_call.1} parent=67 // pred_fallthru
          _
        %s608 = sand.u32 %s39, 1
        %s609 = scalar_lea.sflag [#allocation10], %s608
        %s610 = sand.u32 %s136, 1
        %s611 = smul.addr %s610, 16
        %s612 = scalar_lea.vmem [#allocation11], %s611
        // Predicated region
        $region85: #{tpu_custom_call.1} parent=67 // pred_check
          %p613 = pneg %p149
        $region86: #{tpu_custom_call.1} parent=67 // pred_check_branch
          %615 = sbr.rel (%p613) target = $region88
        $region87: #{tpu_custom_call.1} parent=67 // pred_region
          %616 = dma.done %s609, 256
        $region88: #{tpu_custom_call.1} parent=67 // pred_fallthru
          _
        %s617 = sand.u32 %s39, 1
        %s618 = scalar_lea.sflag [#allocation13], %s617
        %s619 = sand.u32 %s162, 1
        %s620 = smul.addr %s619, 16
        %s621 = scalar_lea.vmem [#allocation12], %s620
        // Predicated region
        $region89: #{tpu_custom_call.1} parent=67 // pred_check
          %p622 = pneg %p175
        $region90: #{tpu_custom_call.1} parent=67 // pred_check_branch
          %624 = sbr.rel (%p622) target = $region92
        $region91: #{tpu_custom_call.1} parent=67 // pred_region
          %625 = dma.done %s618, 256
        $region92: #{tpu_custom_call.1} parent=67 // pred_fallthru
          _
        %s626 = sand.u32 %s39, 1
        %s627 = scalar_lea.sflag [#allocation13], %s626
        %s628 = sand.u32 %s188, 1
        %s629 = smul.addr %s628, 16
        %s630 = scalar_lea.vmem [#allocation14], %s629
        // Predicated region
        $region93: #{tpu_custom_call.1} parent=67 // pred_check
          %p631 = pneg %p201
        $region94: #{tpu_custom_call.1} parent=67 // pred_check_branch
          %633 = sbr.rel (%p631) target = $region96
        $region95: #{tpu_custom_call.1} parent=67 // pred_region
          %634 = dma.done %s627, 256
        $region96: #{tpu_custom_call.1} parent=67 // pred_fallthru
          _
        %s635 = sand.u32 %s39, 1
        %s636 = scalar_lea.sflag [#allocation16], %s635
        %s637 = sand.u32 %s214, 1
        %s638 = smul.addr %s637, 16
        %s639 = scalar_lea.vmem [#allocation15], %s638
        // Predicated region
        $region97: #{tpu_custom_call.1} parent=67 // pred_check
          %p640 = pneg %p227
        $region98: #{tpu_custom_call.1} parent=67 // pred_check_branch
          %642 = sbr.rel (%p640) target = $region100
        $region99: #{tpu_custom_call.1} parent=67 // pred_region
          %643 = dma.done %s636, 256
        $region100: #{tpu_custom_call.1} parent=67 // pred_fallthru
          _
        %s644 = sand.u32 %s39, 1
        %s645 = scalar_lea.sflag [#allocation16], %s644
        %s646 = sand.u32 %s240, 1
        %s647 = smul.addr %s646, 16
        %s648 = scalar_lea.vmem [#allocation17], %s647
        // Predicated region
        $region101: #{tpu_custom_call.1} parent=67 // pred_check
          %p649 = pneg %p253
        $region102: #{tpu_custom_call.1} parent=67 // pred_check_branch
          %651 = sbr.rel (%p649) target = $region104
        $region103: #{tpu_custom_call.1} parent=67 // pred_region
          %652 = dma.done %s645, 256
        $region104: #{tpu_custom_call.1} parent=67 // pred_fallthru
          _
        %s653 = sand.u32 %s39, 1
        %s654 = scalar_lea.sflag [#allocation19], %s653
        %s655 = sand.u32 %s266, 1
        %s656 = smul.addr %s655, 32
        %s657 = scalar_lea.vmem [#allocation18], %s656
        // Predicated region
        $region105: #{tpu_custom_call.1} parent=67 // pred_check
          %p658 = pneg %p279
        $region106: #{tpu_custom_call.1} parent=67 // pred_check_branch
          %660 = sbr.rel (%p658) target = $region108
        $region107: #{tpu_custom_call.1} parent=67 // pred_region
          %661 = dma.done %s654, 512
        $region108: #{tpu_custom_call.1} parent=67 // pred_fallthru
          _
        %s662 = sand.u32 %s39, 1
        %s663 = scalar_lea.sflag [#allocation19], %s662
        %s664 = sand.u32 %s292, 1
        %s665 = smul.addr %s664, 5
        %s666 = scalar_lea.vmem [#allocation20], %s665
        // Predicated region
        $region109: #{tpu_custom_call.1} parent=67 // pred_check
          %p667 = pneg %p305
        $region110: #{tpu_custom_call.1} parent=67 // pred_check_branch
          %669 = sbr.rel (%p667) target = $region112
        $region111: #{tpu_custom_call.1} parent=67 // pred_region
          %670 = dma.done %s663, 80
        $region112: #{tpu_custom_call.1} parent=67 // pred_fallthru
          _
        // Predicated region
        $region113: #{tpu_custom_call.1} parent=67 // pred_check
          %p671 = pneg %p326
        $region114: #{tpu_custom_call.1} parent=67 // pred_check_branch
          %673 = sbr.rel (%p671) target = $region116
        $region115: #{tpu_custom_call.1} parent=67 // pred_region
          %674 = dma.done [#allocation22], 16
        $region116: #{tpu_custom_call.1} parent=67 // pred_fallthru
          _
        %p675 = pneg %p55
        %p676 = pneg %p52
        %p677 = pneg %p76
        %p678 = pneg %p73
        %p679 = pneg %p97
        %p680 = pneg %p94
        %s681 = sand.u32 %s39, 1
        %s682 = scalar_lea.sflag [#allocation10], %s681
        %s683 = sand.u32 %s110, 1
        %s684 = smul.addr %s683, 16
        %s685 = scalar_lea.vmem [#allocation9], %s684
        %p686 = pneg %p123
        %p687 = pneg %p120
        %s688 = sand.u32 %s39, 1
        %s689 = scalar_lea.sflag [#allocation10], %s688
        %s690 = sand.u32 %s136, 1
        %s691 = smul.addr %s690, 16
        %s692 = scalar_lea.vmem [#allocation11], %s691
        %p693 = pneg %p149
        %p694 = pneg %p146
        %s695 = sand.u32 %s39, 1
        %s696 = scalar_lea.sflag [#allocation13], %s695
        %s697 = sand.u32 %s162, 1
        %s698 = smul.addr %s697, 16
        %s699 = scalar_lea.vmem [#allocation12], %s698
        %p700 = pneg %p175
        %p701 = pneg %p172
        %s702 = sand.u32 %s39, 1
        %s703 = scalar_lea.sflag [#allocation13], %s702
        %s704 = sand.u32 %s188, 1
        %s705 = smul.addr %s704, 16
        %s706 = scalar_lea.vmem [#allocation14], %s705
        %p707 = pneg %p201
        %p708 = pneg %p198
        %s709 = sand.u32 %s39, 1
        %s710 = scalar_lea.sflag [#allocation16], %s709
        %s711 = sand.u32 %s214, 1
        %s712 = smul.addr %s711, 16
        %s713 = scalar_lea.vmem [#allocation15], %s712
        %p714 = pneg %p227
        %p715 = pneg %p224
        %s716 = sand.u32 %s39, 1
        %s717 = scalar_lea.sflag [#allocation16], %s716
        %s718 = sand.u32 %s240, 1
        %s719 = smul.addr %s718, 16
        %s720 = scalar_lea.vmem [#allocation17], %s719
        %p721 = pneg %p253
        %p722 = pneg %p250
        %s723 = sand.u32 %s39, 1
        %s724 = scalar_lea.sflag [#allocation19], %s723
        %s725 = sand.u32 %s266, 1
        %s726 = smul.addr %s725, 32
        %s727 = scalar_lea.vmem [#allocation18], %s726
        %p728 = pneg %p279
        %p729 = pneg %p276
        %s730 = sand.u32 %s39, 1
        %s731 = scalar_lea.sflag [#allocation19], %s730
        %s732 = sand.u32 %s292, 1
        %s733 = smul.addr %s732, 5
        %s734 = scalar_lea.vmem [#allocation20], %s733
        %p735 = pneg %p305
        %p736 = pneg %p302
        %p737 = pneg %p326
        %p738 = pneg %p323
        %p739 = pneg %p347
        %p740 = pneg %p344
        %p742 = scmp.eq.s32.totalorder %s39, 0
        // Predicated region
        $region117: #{tpu_custom_call.1} parent=67 // pred_check
          %p743 = pneg %p742
        $region118: #{tpu_custom_call.1} parent=67 // pred_check_branch
          %745 = sbr.rel (%p743) target = $region120
        $region119: #{tpu_custom_call.1} parent=67 // pred_region
          %v746 = vld [vmem:[#allocation3] sm:$0xff]
          %v747 = vld [vmem:[#allocation3 + $0x8] sm:$0xff]
          %vm748 = vcmask 261120
          %749 = vst.msk [vmem:[#allocation2] sm:$0xff] %vm748, %v746
          %750 = vst.msk [vmem:[#allocation2 + $0x8] sm:$0xff] %vm748, %v747
        $region120: #{tpu_custom_call.1} parent=67 // pred_fallthru
          _
        %v751 = vld [vmem:[#allocation2] sm:$0xff]
        %v752 = vld [vmem:[#allocation2 + $0x8] sm:$0xff]
        %v753 = vld [vmem:[%s603] sm:$0xf]
        %v754 = vld [vmem:[%s603 + $0x4] sm:$0xf]
        %v755 = vld [vmem:[%s603 + $0x8] sm:$0xf]
        %v756 = vld [vmem:[%s603 + $0xc] sm:$0xf]
        %v757 = vpack.c.bf16 %v752, %v751
        %v758 = vld [vmem:[%s666] sm:$0x1]
        %v760 = vlaneseq
        %v761 = vshrl.u32 %v760, 7
        %v762 = vsub.s32 0, %v761
        %v763 = vrot.slane %v758, %v762
        %v769 = vunpack.c.l.b16 %v753
        %v770 = vunpack.c.l.b16 %v754
        %v771 = vunpack.c.l.b16 %v755
        %v772 = vunpack.c.l.b16 %v756
        %v773 = vpack.c.b16 %v770, %v769
        %v774 = vpack.c.b16 %v772, %v771
        %vm777 = vcmask 261120
        %v779 = vsel %vm777, %v757, 0
        %781 = vmatprep.subr.bf16.mxu0 0
        %782 = vmatpush1.bf16.msra.mxu0 %v773
        %783 = vmatprep.subr.bf16.mxu0 0
        %784 = vmatpush1.bf16.msra.mxu0 %v774
        %785 = vmatprep.subr.bf16.mxu0 0
        %786 = vmatpush1.bf16.msra.mxu0 0
        %787 = vmatprep.subr.bf16.mxu0 0
        %788 = vmatpush1.bf16.msra.mxu0 0
        %789 = vmatprep.subr.bf16.mxu0 0
        %790 = vmatpush1.bf16.msra.mxu0 0
        %791 = vmatprep.subr.bf16.mxu0 0
        %792 = vmatpush1.bf16.msra.mxu0 0
        %793 = vmatprep.subr.bf16.mxu0 0
        %794 = vmatpush1.bf16.msra.mxu0 0
        %795 = vmatprep.subr.bf16.mxu0 0
        %796 = vmatpush1.bf16.msra.mxu0 0
        %797 = vmatprep.subr.bf16.mxu0 0
        %798 = vmatpush1.bf16.msra.mxu0 0
        %799 = vmatprep.subr.bf16.mxu0 0
        %800 = vmatpush1.bf16.msra.mxu0 0
        %801 = vmatprep.subr.bf16.mxu0 0
        %802 = vmatpush1.bf16.msra.mxu0 0
        %803 = vmatprep.subr.bf16.mxu0 0
        %804 = vmatpush1.bf16.msra.mxu0 0
        %805 = vmatprep.subr.bf16.mxu0 0
        %806 = vmatpush1.bf16.msra.mxu0 0
        %807 = vmatprep.subr.bf16.mxu0 0
        %808 = vmatpush1.bf16.msra.mxu0 0
        %809 = vmatprep.subr.bf16.mxu0 0
        %810 = vmatpush1.bf16.msra.mxu0 0
        %811 = vmatprep.subr.bf16.mxu0 0
        %812 = vmatpush1.bf16.msra.mxu0 0
        %813 = vmatprep.mubr.bf16.mxu0 0
        %814 = vmatmul.mubr.bf16.gmra.mrb[0].mxu0 %v779
        %v815 = vpop.f32.mrb[0].mxu0
        %v816 = vadd.f32 %v763, %v815
        %v817 = vpop.f32.mrb[0].mxu0
        %v818 = vpop.f32.mrb[0].mxu0
        %v819 = vadd.f32 %v763, %v818
        %v820 = vpop.f32.mrb[0].mxu0
        %821 = vdwg.mxu0
        %v822 = vpack.c.bf16 %v816, %v816
        %v823 = vpack.c.bf16 %v819, %v819
        %825 = vrot.lane.b32.xlu0 %v822, 96
        %v826 = vpop.permute.xlu0 %825
        %vm827 = vcmask 64512
        %v829 = vsel %vm827, %v822, 0
        %v832 = vsel %vm827, %v826, 0
        %834 = vmatprep.subr.bf16.mxu0 0
        %835 = vmatpush1.bf16.xpose.msra.mxu0 %v832
        %836 = vmatprep.subr.bf16.mxu0 0
        %837 = vmatpush1.bf16.xpose.msra.mxu0 0
        %838 = vmatprep.subr.bf16.mxu0 0
        %839 = vmatpush1.bf16.xpose.msra.mxu0 0
        %840 = vmatprep.subr.bf16.mxu0 0
        %841 = vmatpush1.bf16.xpose.msra.mxu0 0
        %842 = vmatprep.subr.bf16.mxu0 0
        %843 = vmatpush1.bf16.xpose.msra.mxu0 0
        %844 = vmatprep.subr.bf16.mxu0 0
        %845 = vmatpush1.bf16.xpose.msra.mxu0 0
        %846 = vmatprep.subr.bf16.mxu0 0
        %847 = vmatpush1.bf16.xpose.msra.mxu0 0
        %848 = vmatprep.subr.bf16.mxu0 0
        %849 = vmatpush1.bf16.xpose.msra.mxu0 0
        %850 = vmatprep.subr.bf16.mxu0 0
        %851 = vmatpush1.bf16.xpose.msra.mxu0 0
        %852 = vmatprep.subr.bf16.mxu0 0
        %853 = vmatpush1.bf16.xpose.msra.mxu0 0
        %854 = vmatprep.subr.bf16.mxu0 0
        %855 = vmatpush1.bf16.xpose.msra.mxu0 0
        %856 = vmatprep.subr.bf16.mxu0 0
        %857 = vmatpush1.bf16.xpose.msra.mxu0 0
        %858 = vmatprep.subr.bf16.mxu0 0
        %859 = vmatpush1.bf16.xpose.msra.mxu0 0
        %860 = vmatprep.subr.bf16.mxu0 0
        %861 = vmatpush1.bf16.xpose.msra.mxu0 0
        %862 = vmatprep.subr.bf16.mxu0 0
        %863 = vmatpush1.bf16.xpose.msra.mxu0 0
        %864 = vmatprep.subr.bf16.mxu0 0
        %865 = vmatpush1.bf16.xpose.msra.mxu0 0
        %866 = vmatprep.mubr.bf16.mxu0 0
        %867 = vmatmul.mubr.bf16.gmra.mrb[0].mxu0 %v829
        %v868 = vpop.f32.mrb[0].mxu0
        %v869 = vadd.f32 0.0, %v868
        %v870 = vpop.f32.mrb[0].mxu0
        %v871 = vpop.f32.mrb[0].mxu0
        %v872 = vpop.f32.mrb[0].mxu0
        %873 = vdwg.mxu0
        %875 = vrot.lane.b32.xlu0 %v823, 96
        %v876 = vpop.permute.xlu0 %875
        %v878 = vsel %vm827, %v823, 0
        %v881 = vsel %vm827, %v876, 0
        %883 = vmatprep.subr.bf16.mxu0 0
        %884 = vmatpush1.bf16.xpose.msra.mxu0 %v881
        %885 = vmatprep.subr.bf16.mxu0 0
        %886 = vmatpush1.bf16.xpose.msra.mxu0 0
        %887 = vmatprep.subr.bf16.mxu0 0
        %888 = vmatpush1.bf16.xpose.msra.mxu0 0
        %889 = vmatprep.subr.bf16.mxu0 0
        %890 = vmatpush1.bf16.xpose.msra.mxu0 0
        %891 = vmatprep.subr.bf16.mxu0 0
        %892 = vmatpush1.bf16.xpose.msra.mxu0 0
        %893 = vmatprep.subr.bf16.mxu0 0
        %894 = vmatpush1.bf16.xpose.msra.mxu0 0
        %895 = vmatprep.subr.bf16.mxu0 0
        %896 = vmatpush1.bf16.xpose.msra.mxu0 0
        %897 = vmatprep.subr.bf16.mxu0 0
        %898 = vmatpush1.bf16.xpose.msra.mxu0 0
        %899 = vmatprep.subr.bf16.mxu0 0
        %900 = vmatpush1.bf16.xpose.msra.mxu0 0
        %901 = vmatprep.subr.bf16.mxu0 0
        %902 = vmatpush1.bf16.xpose.msra.mxu0 0
        %903 = vmatprep.subr.bf16.mxu0 0
        %904 = vmatpush1.bf16.xpose.msra.mxu0 0
        %905 = vmatprep.subr.bf16.mxu0 0
        %906 = vmatpush1.bf16.xpose.msra.mxu0 0
        %907 = vmatprep.subr.bf16.mxu0 0
        %908 = vmatpush1.bf16.xpose.msra.mxu0 0
        %909 = vmatprep.subr.bf16.mxu0 0
        %910 = vmatpush1.bf16.xpose.msra.mxu0 0
        %911 = vmatprep.subr.bf16.mxu0 0
        %912 = vmatpush1.bf16.xpose.msra.mxu0 0
        %913 = vmatprep.subr.bf16.mxu0 0
        %914 = vmatpush1.bf16.xpose.msra.mxu0 0
        %915 = vmatprep.mubr.bf16.mxu0 0
        %916 = vmatmul.mubr.bf16.gmra.mrb[0].mxu0 %v878
        %v917 = vpop.f32.mrb[0].mxu0
        %v918 = vadd.f32 0.0, %v917
        %v919 = vpop.f32.mrb[0].mxu0
        %v920 = vpop.f32.mrb[0].mxu0
        %v921 = vpop.f32.mrb[0].mxu0
        %922 = vdwg.mxu0
        %v923 = vsel %vm827, %v869, -inf
        %924 = vmax.xlane.f32.xlu0 %v923
        %v925 = vpop.xlane.xlu0 %924
        %v926 = vsel %vm827, %v918, -inf
        %927 = vmax.xlane.f32.xlu0 %v926
        %v928 = vpop.xlane.xlu0 %927
        %v929 = vsub.f32 %v869, %v925
        %v930 = vsub.f32 %v918, %v928
        %v931 = vmul.f32 %v929, 1.442695
        %v932 = vpow.pop %v931
        %v933 = vmul.f32 %v930, 1.442695
        %v934 = vpow.pop %v933
        %v935 = vsel %vm827, %v932, 0.0
        %936 = vadd.xlane.f32.xlu0 %v935
        %v937 = vpop.xlane.xlu0 %936
        %v938 = vsel %vm827, %v934, 0.0
        %939 = vadd.xlane.f32.xlu0 %v938
        %v940 = vpop.xlane.xlu0 %939
        %v941 = vrcp.pop %v937
        %v942 = vrcp.pop %v940
        %v943 = vmul.f32 %v932, %v941
        %v944 = vmul.f32 %v934, %v942
        %v945 = vpack.c.bf16 %v943, %v943
        %v946 = vpack.c.bf16 %v944, %v944
        %947 = vrot.lane.b32.xlu0 %v822, 64
        %v948 = vpop.permute.xlu0 %947
        %v950 = vsel %vm827, %v945, 0
        %vm952 = vcmask 1043456
        %v954 = vsel %vm952, %v948, 0
        %956 = vmatprep.subr.bf16.mxu0 0
        %957 = vmatpush1.bf16.msra.mxu0 %v954
        %958 = vmatprep.subr.bf16.mxu0 0
        %959 = vmatpush1.bf16.msra.mxu0 0
        %960 = vmatprep.subr.bf16.mxu0 0
        %961 = vmatpush1.bf16.msra.mxu0 0
        %962 = vmatprep.subr.bf16.mxu0 0
        %963 = vmatpush1.bf16.msra.mxu0 0
        %964 = vmatprep.subr.bf16.mxu0 0
        %965 = vmatpush1.bf16.msra.mxu0 0
        %966 = vmatprep.subr.bf16.mxu0 0
        %967 = vmatpush1.bf16.msra.mxu0 0
        %968 = vmatprep.subr.bf16.mxu0 0
        %969 = vmatpush1.bf16.msra.mxu0 0
        %970 = vmatprep.subr.bf16.mxu0 0
        %971 = vmatpush1.bf16.msra.mxu0 0
        %972 = vmatprep.subr.bf16.mxu0 0
        %973 = vmatpush1.bf16.msra.mxu0 0
        %974 = vmatprep.subr.bf16.mxu0 0
        %975 = vmatpush1.bf16.msra.mxu0 0
        %976 = vmatprep.subr.bf16.mxu0 0
        %977 = vmatpush1.bf16.msra.mxu0 0
        %978 = vmatprep.subr.bf16.mxu0 0
        %979 = vmatpush1.bf16.msra.mxu0 0
        %980 = vmatprep.subr.bf16.mxu0 0
        %981 = vmatpush1.bf16.msra.mxu0 0
        %982 = vmatprep.subr.bf16.mxu0 0
        %983 = vmatpush1.bf16.msra.mxu0 0
        %984 = vmatprep.subr.bf16.mxu0 0
        %985 = vmatpush1.bf16.msra.mxu0 0
        %986 = vmatprep.subr.bf16.mxu0 0
        %987 = vmatpush1.bf16.msra.mxu0 0
        %988 = vmatprep.mubr.bf16.mxu0 0
        %989 = vmatmul.mubr.bf16.gmra.mrb[0].mxu0 %v950
        %v990 = vpop.f32.mrb[0].mxu0
        %v991 = vadd.f32 0.0, %v990
        %v992 = vpop.f32.mrb[0].mxu0
        %v993 = vpop.f32.mrb[0].mxu0
        %v994 = vpop.f32.mrb[0].mxu0
        %995 = vdwg.mxu0
        %996 = vrot.lane.b32.xlu0 %v823, 64
        %v997 = vpop.permute.xlu0 %996
        %v999 = vsel %vm827, %v946, 0
        %v1002 = vsel %vm952, %v997, 0
        %1004 = vmatprep.subr.bf16.mxu0 0
        %1005 = vmatpush1.bf16.msra.mxu0 %v1002
        %1006 = vmatprep.subr.bf16.mxu0 0
        %1007 = vmatpush1.bf16.msra.mxu0 0
        %1008 = vmatprep.subr.bf16.mxu0 0
        %1009 = vmatpush1.bf16.msra.mxu0 0
        %1010 = vmatprep.subr.bf16.mxu0 0
        %1011 = vmatpush1.bf16.msra.mxu0 0
        %1012 = vmatprep.subr.bf16.mxu0 0
        %1013 = vmatpush1.bf16.msra.mxu0 0
        %1014 = vmatprep.subr.bf16.mxu0 0
        %1015 = vmatpush1.bf16.msra.mxu0 0
        %1016 = vmatprep.subr.bf16.mxu0 0
        %1017 = vmatpush1.bf16.msra.mxu0 0
        %1018 = vmatprep.subr.bf16.mxu0 0
        %1019 = vmatpush1.bf16.msra.mxu0 0
        %1020 = vmatprep.subr.bf16.mxu0 0
        %1021 = vmatpush1.bf16.msra.mxu0 0
        %1022 = vmatprep.subr.bf16.mxu0 0
        %1023 = vmatpush1.bf16.msra.mxu0 0
        %1024 = vmatprep.subr.bf16.mxu0 0
        %1025 = vmatpush1.bf16.msra.mxu0 0
        %1026 = vmatprep.subr.bf16.mxu0 0
        %1027 = vmatpush1.bf16.msra.mxu0 0
        %1028 = vmatprep.subr.bf16.mxu0 0
        %1029 = vmatpush1.bf16.msra.mxu0 0
        %1030 = vmatprep.subr.bf16.mxu0 0
        %1031 = vmatpush1.bf16.msra.mxu0 0
        %1032 = vmatprep.subr.bf16.mxu0 0
        %1033 = vmatpush1.bf16.msra.mxu0 0
        %1034 = vmatprep.subr.bf16.mxu0 0
        %1035 = vmatpush1.bf16.msra.mxu0 0
        %1036 = vmatprep.mubr.bf16.mxu0 0
        %1037 = vmatmul.mubr.bf16.gmra.mrb[0].mxu0 %v999
        %v1038 = vpop.f32.mrb[0].mxu0
        %v1039 = vadd.f32 0.0, %v1038
        %v1040 = vpop.f32.mrb[0].mxu0
        %v1041 = vpop.f32.mrb[0].mxu0
        %v1042 = vpop.f32.mrb[0].mxu0
        %1043 = vdwg.mxu0
        %1044 = vrot.lane.b32.xlu0 %v822, 120
        %v1045 = vpop.permute.xlu0 %1044
        %1046 = vrot.lane.b32.xlu0 %v822, 88
        %v1047 = vpop.permute.xlu0 %1046
        %v1049 = vsel %vm827, %v1045, 0
        %v1052 = vsel %vm827, %v1047, 0
        %1054 = vmatprep.subr.bf16.mxu0 0
        %1055 = vmatpush1.bf16.xpose.msra.mxu0 %v1052
        %1056 = vmatprep.subr.bf16.mxu0 0
        %1057 = vmatpush1.bf16.xpose.msra.mxu0 0
        %1058 = vmatprep.subr.bf16.mxu0 0
        %1059 = vmatpush1.bf16.xpose.msra.mxu0 0
        %1060 = vmatprep.subr.bf16.mxu0 0
        %1061 = vmatpush1.bf16.xpose.msra.mxu0 0
        %1062 = vmatprep.subr.bf16.mxu0 0
        %1063 = vmatpush1.bf16.xpose.msra.mxu0 0
        %1064 = vmatprep.subr.bf16.mxu0 0
        %1065 = vmatpush1.bf16.xpose.msra.mxu0 0
        %1066 = vmatprep.subr.bf16.mxu0 0
        %1067 = vmatpush1.bf16.xpose.msra.mxu0 0
        %1068 = vmatprep.subr.bf16.mxu0 0
        %1069 = vmatpush1.bf16.xpose.msra.mxu0 0
        %1070 = vmatprep.subr.bf16.mxu0 0
        %1071 = vmatpush1.bf16.xpose.msra.mxu0 0
        %1072 = vmatprep.subr.bf16.mxu0 0
        %1073 = vmatpush1.bf16.xpose.msra.mxu0 0
        %1074 = vmatprep.subr.bf16.mxu0 0
        %1075 = vmatpush1.bf16.xpose.msra.mxu0 0
        %1076 = vmatprep.subr.bf16.mxu0 0
        %1077 = vmatpush1.bf16.xpose.msra.mxu0 0
        %1078 = vmatprep.subr.bf16.mxu0 0
        %1079 = vmatpush1.bf16.xpose.msra.mxu0 0
        %1080 = vmatprep.subr.bf16.mxu0 0
        %1081 = vmatpush1.bf16.xpose.msra.mxu0 0
        %1082 = vmatprep.subr.bf16.mxu0 0
        %1083 = vmatpush1.bf16.xpose.msra.mxu0 0
        %1084 = vmatprep.subr.bf16.mxu0 0
        %1085 = vmatpush1.bf16.xpose.msra.mxu0 0
        %1086 = vmatprep.mubr.bf16.mxu0 0
        %1087 = vmatmul.mubr.bf16.gmra.mrb[0].mxu0 %v1049
        %v1088 = vpop.f32.mrb[0].mxu0
        %v1089 = vadd.f32 0.0, %v1088
        %v1090 = vpop.f32.mrb[0].mxu0
        %v1091 = vpop.f32.mrb[0].mxu0
        %v1092 = vpop.f32.mrb[0].mxu0
        %1093 = vdwg.mxu0
        %1094 = vrot.lane.b32.xlu0 %v823, 120
        %v1095 = vpop.permute.xlu0 %1094
        %1096 = vrot.lane.b32.xlu0 %v823, 88
        %v1097 = vpop.permute.xlu0 %1096
        %v1099 = vsel %vm827, %v1095, 0
        %v1102 = vsel %vm827, %v1097, 0
        %1104 = vmatprep.subr.bf16.mxu0 0
        %1105 = vmatpush1.bf16.xpose.msra.mxu0 %v1102
        %1106 = vmatprep.subr.bf16.mxu0 0
        %1107 = vmatpush1.bf16.xpose.msra.mxu0 0
        %1108 = vmatprep.subr.bf16.mxu0 0
        %1109 = vmatpush1.bf16.xpose.msra.mxu0 0
        %1110 = vmatprep.subr.bf16.mxu0 0
        %1111 = vmatpush1.bf16.xpose.msra.mxu0 0
        %1112 = vmatprep.subr.bf16.mxu0 0
        %1113 = vmatpush1.bf16.xpose.msra.mxu0 0
        %1114 = vmatprep.subr.bf16.mxu0 0
        %1115 = vmatpush1.bf16.xpose.msra.mxu0 0
        %1116 = vmatprep.subr.bf16.mxu0 0
        %1117 = vmatpush1.bf16.xpose.msra.mxu0 0
        %1118 = vmatprep.subr.bf16.mxu0 0
        %1119 = vmatpush1.bf16.xpose.msra.mxu0 0
        %1120 = vmatprep.subr.bf16.mxu0 0
        %1121 = vmatpush1.bf16.xpose.msra.mxu0 0
        %1122 = vmatprep.subr.bf16.mxu0 0
        %1123 = vmatpush1.bf16.xpose.msra.mxu0 0
        %1124 = vmatprep.subr.bf16.mxu0 0
        %1125 = vmatpush1.bf16.xpose.msra.mxu0 0
        %1126 = vmatprep.subr.bf16.mxu0 0
        %1127 = vmatpush1.bf16.xpose.msra.mxu0 0
        %1128 = vmatprep.subr.bf16.mxu0 0
        %1129 = vmatpush1.bf16.xpose.msra.mxu0 0
        %1130 = vmatprep.subr.bf16.mxu0 0
        %1131 = vmatpush1.bf16.xpose.msra.mxu0 0
        %1132 = vmatprep.subr.bf16.mxu0 0
        %1133 = vmatpush1.bf16.xpose.msra.mxu0 0
        %1134 = vmatprep.subr.bf16.mxu0 0
        %1135 = vmatpush1.bf16.xpose.msra.mxu0 0
        %1136 = vmatprep.mubr.bf16.mxu0 0
        %1137 = vmatmul.mubr.bf16.gmra.mrb[0].mxu0 %v1099
        %v1138 = vpop.f32.mrb[0].mxu0
        %v1139 = vadd.f32 0.0, %v1138
        %v1140 = vpop.f32.mrb[0].mxu0
        %v1141 = vpop.f32.mrb[0].mxu0
        %v1142 = vpop.f32.mrb[0].mxu0
        %1143 = vdwg.mxu0
        %v1144 = vsel %vm827, %v1089, -inf
        %1145 = vmax.xlane.f32.xlu0 %v1144
        %v1146 = vpop.xlane.xlu0 %1145
        %v1147 = vsel %vm827, %v1139, -inf
        %1148 = vmax.xlane.f32.xlu0 %v1147
        %v1149 = vpop.xlane.xlu0 %1148
        %v1150 = vsub.f32 %v1089, %v1146
        %v1151 = vsub.f32 %v1139, %v1149
        %v1152 = vmul.f32 %v1150, 1.442695
        %v1153 = vpow.pop %v1152
        %v1154 = vmul.f32 %v1151, 1.442695
        %v1155 = vpow.pop %v1154
        %v1156 = vsel %vm827, %v1153, 0.0
        %1157 = vadd.xlane.f32.xlu0 %v1156
        %v1158 = vpop.xlane.xlu0 %1157
        %v1159 = vsel %vm827, %v1155, 0.0
        %1160 = vadd.xlane.f32.xlu0 %v1159
        %v1161 = vpop.xlane.xlu0 %1160
        %v1162 = vrcp.pop %v1158
        %v1163 = vrcp.pop %v1161
        %v1164 = vmul.f32 %v1153, %v1162
        %v1165 = vmul.f32 %v1155, %v1163
        %v1166 = vpack.c.bf16 %v1164, %v1164
        %v1167 = vpack.c.bf16 %v1165, %v1165
        %1168 = vrot.lane.b32.xlu0 %v822, 56
        %v1169 = vpop.permute.xlu0 %1168
        %v1171 = vsel %vm827, %v1166, 0
        %v1174 = vsel %vm952, %v1169, 0
        %1176 = vmatprep.subr.bf16.mxu0 0
        %1177 = vmatpush1.bf16.msra.mxu0 %v1174
        %1178 = vmatprep.subr.bf16.mxu0 0
        %1179 = vmatpush1.bf16.msra.mxu0 0
        %1180 = vmatprep.subr.bf16.mxu0 0
        %1181 = vmatpush1.bf16.msra.mxu0 0
        %1182 = vmatprep.subr.bf16.mxu0 0
        %1183 = vmatpush1.bf16.msra.mxu0 0
        %1184 = vmatprep.subr.bf16.mxu0 0
        %1185 = vmatpush1.bf16.msra.mxu0 0
        %1186 = vmatprep.subr.bf16.mxu0 0
        %1187 = vmatpush1.bf16.msra.mxu0 0
        %1188 = vmatprep.subr.bf16.mxu0 0
        %1189 = vmatpush1.bf16.msra.mxu0 0
        %1190 = vmatprep.subr.bf16.mxu0 0
        %1191 = vmatpush1.bf16.msra.mxu0 0
        %1192 = vmatprep.subr.bf16.mxu0 0
        %1193 = vmatpush1.bf16.msra.mxu0 0
        %1194 = vmatprep.subr.bf16.mxu0 0
        %1195 = vmatpush1.bf16.msra.mxu0 0
        %1196 = vmatprep.subr.bf16.mxu0 0
        %1197 = vmatpush1.bf16.msra.mxu0 0
        %1198 = vmatprep.subr.bf16.mxu0 0
        %1199 = vmatpush1.bf16.msra.mxu0 0
        %1200 = vmatprep.subr.bf16.mxu0 0
        %1201 = vmatpush1.bf16.msra.mxu0 0
        %1202 = vmatprep.subr.bf16.mxu0 0
        %1203 = vmatpush1.bf16.msra.mxu0 0
        %1204 = vmatprep.subr.bf16.mxu0 0
        %1205 = vmatpush1.bf16.msra.mxu0 0
        %1206 = vmatprep.subr.bf16.mxu0 0
        %1207 = vmatpush1.bf16.msra.mxu0 0
        %1208 = vmatprep.mubr.bf16.mxu0 0
        %1209 = vmatmul.mubr.bf16.gmra.mrb[0].mxu0 %v1171
        %v1210 = vpop.f32.mrb[0].mxu0
        %v1211 = vadd.f32 0.0, %v1210
        %v1212 = vpop.f32.mrb[0].mxu0
        %v1213 = vpop.f32.mrb[0].mxu0
        %v1214 = vpop.f32.mrb[0].mxu0
        %1215 = vdwg.mxu0
        %1216 = vrot.lane.b32.xlu0 %v823, 56
        %v1217 = vpop.permute.xlu0 %1216
        %v1219 = vsel %vm827, %v1167, 0
        %v1222 = vsel %vm952, %v1217, 0
        %1224 = vmatprep.subr.bf16.mxu0 0
        %1225 = vmatpush1.bf16.msra.mxu0 %v1222
        %1226 = vmatprep.subr.bf16.mxu0 0
        %1227 = vmatpush1.bf16.msra.mxu0 0
        %1228 = vmatprep.subr.bf16.mxu0 0
        %1229 = vmatpush1.bf16.msra.mxu0 0
        %1230 = vmatprep.subr.bf16.mxu0 0
        %1231 = vmatpush1.bf16.msra.mxu0 0
        %1232 = vmatprep.subr.bf16.mxu0 0
        %1233 = vmatpush1.bf16.msra.mxu0 0
        %1234 = vmatprep.subr.bf16.mxu0 0
        %1235 = vmatpush1.bf16.msra.mxu0 0
        %1236 = vmatprep.subr.bf16.mxu0 0
        %1237 = vmatpush1.bf16.msra.mxu0 0
        %1238 = vmatprep.subr.bf16.mxu0 0
        %1239 = vmatpush1.bf16.msra.mxu0 0
        %1240 = vmatprep.subr.bf16.mxu0 0
        %1241 = vmatpush1.bf16.msra.mxu0 0
        %1242 = vmatprep.subr.bf16.mxu0 0
        %1243 = vmatpush1.bf16.msra.mxu0 0
        %1244 = vmatprep.subr.bf16.mxu0 0
        %1245 = vmatpush1.bf16.msra.mxu0 0
        %1246 = vmatprep.subr.bf16.mxu0 0
        %1247 = vmatpush1.bf16.msra.mxu0 0
        %1248 = vmatprep.subr.bf16.mxu0 0
        %1249 = vmatpush1.bf16.msra.mxu0 0
        %1250 = vmatprep.subr.bf16.mxu0 0
        %1251 = vmatpush1.bf16.msra.mxu0 0
        %1252 = vmatprep.subr.bf16.mxu0 0
        %1253 = vmatpush1.bf16.msra.mxu0 0
        %1254 = vmatprep.subr.bf16.mxu0 0
        %1255 = vmatpush1.bf16.msra.mxu0 0
        %1256 = vmatprep.mubr.bf16.mxu0 0
        %1257 = vmatmul.mubr.bf16.gmra.mrb[0].mxu0 %v1219
        %v1258 = vpop.f32.mrb[0].mxu0
        %v1259 = vadd.f32 0.0, %v1258
        %v1260 = vpop.f32.mrb[0].mxu0
        %v1261 = vpop.f32.mrb[0].mxu0
        %v1262 = vpop.f32.mrb[0].mxu0
        %1263 = vdwg.mxu0
        %1264 = vrot.lane.b32.xlu0 %v822, 112
        %v1265 = vpop.permute.xlu0 %1264
        %1266 = vrot.lane.b32.xlu0 %v822, 80
        %v1267 = vpop.permute.xlu0 %1266
        %v1269 = vsel %vm827, %v1265, 0
        %v1272 = vsel %vm827, %v1267, 0
        %1274 = vmatprep.subr.bf16.mxu0 0
        %1275 = vmatpush1.bf16.xpose.msra.mxu0 %v1272
        %1276 = vmatprep.subr.bf16.mxu0 0
        %1277 = vmatpush1.bf16.xpose.msra.mxu0 0
        %1278 = vmatprep.subr.bf16.mxu0 0
        %1279 = vmatpush1.bf16.xpose.msra.mxu0 0
        %1280 = vmatprep.subr.bf16.mxu0 0
        %1281 = vmatpush1.bf16.xpose.msra.mxu0 0
        %1282 = vmatprep.subr.bf16.mxu0 0
        %1283 = vmatpush1.bf16.xpose.msra.mxu0 0
        %1284 = vmatprep.subr.bf16.mxu0 0
        %1285 = vmatpush1.bf16.xpose.msra.mxu0 0
        %1286 = vmatprep.subr.bf16.mxu0 0
        %1287 = vmatpush1.bf16.xpose.msra.mxu0 0
        %1288 = vmatprep.subr.bf16.mxu0 0
        %1289 = vmatpush1.bf16.xpose.msra.mxu0 0
        %1290 = vmatprep.subr.bf16.mxu0 0
        %1291 = vmatpush1.bf16.xpose.msra.mxu0 0
        %1292 = vmatprep.subr.bf16.mxu0 0
        %1293 = vmatpush1.bf16.xpose.msra.mxu0 0
        %1294 = vmatprep.subr.bf16.mxu0 0
        %1295 = vmatpush1.bf16.xpose.msra.mxu0 0
        %1296 = vmatprep.subr.bf16.mxu0 0
        %1297 = vmatpush1.bf16.xpose.msra.mxu0 0
        %1298 = vmatprep.subr.bf16.mxu0 0
        %1299 = vmatpush1.bf16.xpose.msra.mxu0 0
        %1300 = vmatprep.subr.bf16.mxu0 0
        %1301 = vmatpush1.bf16.xpose.msra.mxu0 0
        %1302 = vmatprep.subr.bf16.mxu0 0
        %1303 = vmatpush1.bf16.xpose.msra.mxu0 0
        %1304 = vmatprep.subr.bf16.mxu0 0
        %1305 = vmatpush1.bf16.xpose.msra.mxu0 0
        %1306 = vmatprep.mubr.bf16.mxu0 0
        %1307 = vmatmul.mubr.bf16.gmra.mrb[0].mxu0 %v1269
        %v1308 = vpop.f32.mrb[0].mxu0
        %v1309 = vadd.f32 0.0, %v1308
        %v1310 = vpop.f32.mrb[0].mxu0
        %v1311 = vpop.f32.mrb[0].mxu0
        %v1312 = vpop.f32.mrb[0].mxu0
        %1313 = vdwg.mxu0
        %1314 = vrot.lane.b32.xlu0 %v823, 112
        %v1315 = vpop.permute.xlu0 %1314
        %1316 = vrot.lane.b32.xlu0 %v823, 80
        %v1317 = vpop.permute.xlu0 %1316
        %v1319 = vsel %vm827, %v1315, 0
        %v1322 = vsel %vm827, %v1317, 0
        %1324 = vmatprep.subr.bf16.mxu0 0
        %1325 = vmatpush1.bf16.xpose.msra.mxu0 %v1322
        %1326 = vmatprep.subr.bf16.mxu0 0
        %1327 = vmatpush1.bf16.xpose.msra.mxu0 0
        %1328 = vmatprep.subr.bf16.mxu0 0
        %1329 = vmatpush1.bf16.xpose.msra.mxu0 0
        %1330 = vmatprep.subr.bf16.mxu0 0
        %1331 = vmatpush1.bf16.xpose.msra.mxu0 0
        %1332 = vmatprep.subr.bf16.mxu0 0
        %1333 = vmatpush1.bf16.xpose.msra.mxu0 0
        %1334 = vmatprep.subr.bf16.mxu0 0
        %1335 = vmatpush1.bf16.xpose.msra.mxu0 0
        %1336 = vmatprep.subr.bf16.mxu0 0
        %1337 = vmatpush1.bf16.xpose.msra.mxu0 0
        %1338 = vmatprep.subr.bf16.mxu0 0
        %1339 = vmatpush1.bf16.xpose.msra.mxu0 0
        %1340 = vmatprep.subr.bf16.mxu0 0
        %1341 = vmatpush1.bf16.xpose.msra.mxu0 0
        %1342 = vmatprep.subr.bf16.mxu0 0
        %1343 = vmatpush1.bf16.xpose.msra.mxu0 0
        %1344 = vmatprep.subr.bf16.mxu0 0
        %1345 = vmatpush1.bf16.xpose.msra.mxu0 0
        %1346 = vmatprep.subr.bf16.mxu0 0
        %1347 = vmatpush1.bf16.xpose.msra.mxu0 0
        %1348 = vmatprep.subr.bf16.mxu0 0
        %1349 = vmatpush1.bf16.xpose.msra.mxu0 0
        %1350 = vmatprep.subr.bf16.mxu0 0
        %1351 = vmatpush1.bf16.xpose.msra.mxu0 0
        %1352 = vmatprep.subr.bf16.mxu0 0
        %1353 = vmatpush1.bf16.xpose.msra.mxu0 0
        %1354 = vmatprep.subr.bf16.mxu0 0
        %1355 = vmatpush1.bf16.xpose.msra.mxu0 0
        %1356 = vmatprep.mubr.bf16.mxu0 0
        %1357 = vmatmul.mubr.bf16.gmra.mrb[0].mxu0 %v1319
        %v1358 = vpop.f32.mrb[0].mxu0
        %v1359 = vadd.f32 0.0, %v1358
        %v1360 = vpop.f32.mrb[0].mxu0
        %v1361 = vpop.f32.mrb[0].mxu0
        %v1362 = vpop.f32.mrb[0].mxu0
        %1363 = vdwg.mxu0
        %v1364 = vsel %vm827, %v1309, -inf
        %1365 = vmax.xlane.f32.xlu0 %v1364
        %v1366 = vpop.xlane.xlu0 %1365
        %v1367 = vsel %vm827, %v1359, -inf
        %1368 = vmax.xlane.f32.xlu0 %v1367
        %v1369 = vpop.xlane.xlu0 %1368
        %v1370 = vsub.f32 %v1309, %v1366
        %v1371 = vsub.f32 %v1359, %v1369
        %v1372 = vmul.f32 %v1370, 1.442695
        %v1373 = vpow.pop %v1372
        %v1374 = vmul.f32 %v1371, 1.442695
        %v1375 = vpow.pop %v1374
        %v1376 = vsel %vm827, %v1373, 0.0
        %1377 = vadd.xlane.f32.xlu0 %v1376
        %v1378 = vpop.xlane.xlu0 %1377
        %v1379 = vsel %vm827, %v1375, 0.0
        %1380 = vadd.xlane.f32.xlu0 %v1379
        %v1381 = vpop.xlane.xlu0 %1380
        %v1382 = vrcp.pop %v1378
        %v1383 = vrcp.pop %v1381
        %v1384 = vmul.f32 %v1373, %v1382
        %v1385 = vmul.f32 %v1375, %v1383
        %v1386 = vpack.c.bf16 %v1384, %v1384
        %v1387 = vpack.c.bf16 %v1385, %v1385
        %1388 = vrot.lane.b32.xlu0 %v822, 48
        %v1389 = vpop.permute.xlu0 %1388
        %v1391 = vsel %vm827, %v1386, 0
        %v1394 = vsel %vm952, %v1389, 0
        %1396 = vmatprep.subr.bf16.mxu0 0
        %1397 = vmatpush1.bf16.msra.mxu0 %v1394
        %1398 = vmatprep.subr.bf16.mxu0 0
        %1399 = vmatpush1.bf16.msra.mxu0 0
        %1400 = vmatprep.subr.bf16.mxu0 0
        %1401 = vmatpush1.bf16.msra.mxu0 0
        %1402 = vmatprep.subr.bf16.mxu0 0
        %1403 = vmatpush1.bf16.msra.mxu0 0
        %1404 = vmatprep.subr.bf16.mxu0 0
        %1405 = vmatpush1.bf16.msra.mxu0 0
        %1406 = vmatprep.subr.bf16.mxu0 0
        %1407 = vmatpush1.bf16.msra.mxu0 0
        %1408 = vmatprep.subr.bf16.mxu0 0
        %1409 = vmatpush1.bf16.msra.mxu0 0
        %1410 = vmatprep.subr.bf16.mxu0 0
        %1411 = vmatpush1.bf16.msra.mxu0 0
        %1412 = vmatprep.subr.bf16.mxu0 0
        %1413 = vmatpush1.bf16.msra.mxu0 0
        %1414 = vmatprep.subr.bf16.mxu0 0
        %1415 = vmatpush1.bf16.msra.mxu0 0
        %1416 = vmatprep.subr.bf16.mxu0 0
        %1417 = vmatpush1.bf16.msra.mxu0 0
        %1418 = vmatprep.subr.bf16.mxu0 0
        %1419 = vmatpush1.bf16.msra.mxu0 0
        %1420 = vmatprep.subr.bf16.mxu0 0
        %1421 = vmatpush1.bf16.msra.mxu0 0
        %1422 = vmatprep.subr.bf16.mxu0 0
        %1423 = vmatpush1.bf16.msra.mxu0 0
        %1424 = vmatprep.subr.bf16.mxu0 0
        %1425 = vmatpush1.bf16.msra.mxu0 0
        %1426 = vmatprep.subr.bf16.mxu0 0
        %1427 = vmatpush1.bf16.msra.mxu0 0
        %1428 = vmatprep.mubr.bf16.mxu0 0
        %1429 = vmatmul.mubr.bf16.gmra.mrb[0].mxu0 %v1391
        %v1430 = vpop.f32.mrb[0].mxu0
        %v1431 = vadd.f32 0.0, %v1430
        %v1432 = vpop.f32.mrb[0].mxu0
        %v1433 = vpop.f32.mrb[0].mxu0
        %v1434 = vpop.f32.mrb[0].mxu0
        %1435 = vdwg.mxu0
        %1436 = vrot.lane.b32.xlu0 %v823, 48
        %v1437 = vpop.permute.xlu0 %1436
        %v1439 = vsel %vm827, %v1387, 0
        %v1442 = vsel %vm952, %v1437, 0
        %1444 = vmatprep.subr.bf16.mxu0 0
        %1445 = vmatpush1.bf16.msra.mxu0 %v1442
        %1446 = vmatprep.subr.bf16.mxu0 0
        %1447 = vmatpush1.bf16.msra.mxu0 0
        %1448 = vmatprep.subr.bf16.mxu0 0
        %1449 = vmatpush1.bf16.msra.mxu0 0
        %1450 = vmatprep.subr.bf16.mxu0 0
        %1451 = vmatpush1.bf16.msra.mxu0 0
        %1452 = vmatprep.subr.bf16.mxu0 0
        %1453 = vmatpush1.bf16.msra.mxu0 0
        %1454 = vmatprep.subr.bf16.mxu0 0
        %1455 = vmatpush1.bf16.msra.mxu0 0
        %1456 = vmatprep.subr.bf16.mxu0 0
        %1457 = vmatpush1.bf16.msra.mxu0 0
        %1458 = vmatprep.subr.bf16.mxu0 0
        %1459 = vmatpush1.bf16.msra.mxu0 0
        %1460 = vmatprep.subr.bf16.mxu0 0
        %1461 = vmatpush1.bf16.msra.mxu0 0
        %1462 = vmatprep.subr.bf16.mxu0 0
        %1463 = vmatpush1.bf16.msra.mxu0 0
        %1464 = vmatprep.subr.bf16.mxu0 0
        %1465 = vmatpush1.bf16.msra.mxu0 0
        %1466 = vmatprep.subr.bf16.mxu0 0
        %1467 = vmatpush1.bf16.msra.mxu0 0
        %1468 = vmatprep.subr.bf16.mxu0 0
        %1469 = vmatpush1.bf16.msra.mxu0 0
        %1470 = vmatprep.subr.bf16.mxu0 0
        %1471 = vmatpush1.bf16.msra.mxu0 0
        %1472 = vmatprep.subr.bf16.mxu0 0
        %1473 = vmatpush1.bf16.msra.mxu0 0
        %1474 = vmatprep.subr.bf16.mxu0 0
        %1475 = vmatpush1.bf16.msra.mxu0 0
        %1476 = vmatprep.mubr.bf16.mxu0 0
        %1477 = vmatmul.mubr.bf16.gmra.mrb[0].mxu0 %v1439
        %v1478 = vpop.f32.mrb[0].mxu0
        %v1479 = vadd.f32 0.0, %v1478
        %v1480 = vpop.f32.mrb[0].mxu0
        %v1481 = vpop.f32.mrb[0].mxu0
        %v1482 = vpop.f32.mrb[0].mxu0
        %1483 = vdwg.mxu0
        %1484 = vrot.lane.b32.xlu0 %v822, 104
        %v1485 = vpop.permute.xlu0 %1484
        %1486 = vrot.lane.b32.xlu0 %v822, 72
        %v1487 = vpop.permute.xlu0 %1486
        %v1489 = vsel %vm827, %v1485, 0
        %v1492 = vsel %vm827, %v1487, 0
        %1494 = vmatprep.subr.bf16.mxu0 0
        %1495 = vmatpush1.bf16.xpose.msra.mxu0 %v1492
        %1496 = vmatprep.subr.bf16.mxu0 0
        %1497 = vmatpush1.bf16.xpose.msra.mxu0 0
        %1498 = vmatprep.subr.bf16.mxu0 0
        %1499 = vmatpush1.bf16.xpose.msra.mxu0 0
        %1500 = vmatprep.subr.bf16.mxu0 0
        %1501 = vmatpush1.bf16.xpose.msra.mxu0 0
        %1502 = vmatprep.subr.bf16.mxu0 0
        %1503 = vmatpush1.bf16.xpose.msra.mxu0 0
        %1504 = vmatprep.subr.bf16.mxu0 0
        %1505 = vmatpush1.bf16.xpose.msra.mxu0 0
        %1506 = vmatprep.subr.bf16.mxu0 0
        %1507 = vmatpush1.bf16.xpose.msra.mxu0 0
        %1508 = vmatprep.subr.bf16.mxu0 0
        %1509 = vmatpush1.bf16.xpose.msra.mxu0 0
        %1510 = vmatprep.subr.bf16.mxu0 0
        %1511 = vmatpush1.bf16.xpose.msra.mxu0 0
        %1512 = vmatprep.subr.bf16.mxu0 0
        %1513 = vmatpush1.bf16.xpose.msra.mxu0 0
        %1514 = vmatprep.subr.bf16.mxu0 0
        %1515 = vmatpush1.bf16.xpose.msra.mxu0 0
        %1516 = vmatprep.subr.bf16.mxu0 0
        %1517 = vmatpush1.bf16.xpose.msra.mxu0 0
        %1518 = vmatprep.subr.bf16.mxu0 0
        %1519 = vmatpush1.bf16.xpose.msra.mxu0 0
        %1520 = vmatprep.subr.bf16.mxu0 0
        %1521 = vmatpush1.bf16.xpose.msra.mxu0 0
        %1522 = vmatprep.subr.bf16.mxu0 0
        %1523 = vmatpush1.bf16.xpose.msra.mxu0 0
        %1524 = vmatprep.subr.bf16.mxu0 0
        %1525 = vmatpush1.bf16.xpose.msra.mxu0 0
        %1526 = vmatprep.mubr.bf16.mxu0 0
        %1527 = vmatmul.mubr.bf16.gmra.mrb[0].mxu0 %v1489
        %v1528 = vpop.f32.mrb[0].mxu0
        %v1529 = vadd.f32 0.0, %v1528
        %v1530 = vpop.f32.mrb[0].mxu0
        %v1531 = vpop.f32.mrb[0].mxu0
        %v1532 = vpop.f32.mrb[0].mxu0
        %1533 = vdwg.mxu0
        %1534 = vrot.lane.b32.xlu0 %v823, 104
        %v1535 = vpop.permute.xlu0 %1534
        %1536 = vrot.lane.b32.xlu0 %v823, 72
        %v1537 = vpop.permute.xlu0 %1536
        %v1539 = vsel %vm827, %v1535, 0
        %v1542 = vsel %vm827, %v1537, 0
        %1544 = vmatprep.subr.bf16.mxu0 0
        %1545 = vmatpush1.bf16.xpose.msra.mxu0 %v1542
        %1546 = vmatprep.subr.bf16.mxu0 0
        %1547 = vmatpush1.bf16.xpose.msra.mxu0 0
        %1548 = vmatprep.subr.bf16.mxu0 0
        %1549 = vmatpush1.bf16.xpose.msra.mxu0 0
        %1550 = vmatprep.subr.bf16.mxu0 0
        %1551 = vmatpush1.bf16.xpose.msra.mxu0 0
        %1552 = vmatprep.subr.bf16.mxu0 0
        %1553 = vmatpush1.bf16.xpose.msra.mxu0 0
        %1554 = vmatprep.subr.bf16.mxu0 0
        %1555 = vmatpush1.bf16.xpose.msra.mxu0 0
        %1556 = vmatprep.subr.bf16.mxu0 0
        %1557 = vmatpush1.bf16.xpose.msra.mxu0 0
        %1558 = vmatprep.subr.bf16.mxu0 0
        %1559 = vmatpush1.bf16.xpose.msra.mxu0 0
        %1560 = vmatprep.subr.bf16.mxu0 0
        %1561 = vmatpush1.bf16.xpose.msra.mxu0 0
        %1562 = vmatprep.subr.bf16.mxu0 0
        %1563 = vmatpush1.bf16.xpose.msra.mxu0 0
        %1564 = vmatprep.subr.bf16.mxu0 0
        %1565 = vmatpush1.bf16.xpose.msra.mxu0 0
        %1566 = vmatprep.subr.bf16.mxu0 0
        %1567 = vmatpush1.bf16.xpose.msra.mxu0 0
        %1568 = vmatprep.subr.bf16.mxu0 0
        %1569 = vmatpush1.bf16.xpose.msra.mxu0 0
        %1570 = vmatprep.subr.bf16.mxu0 0
        %1571 = vmatpush1.bf16.xpose.msra.mxu0 0
        %1572 = vmatprep.subr.bf16.mxu0 0
        %1573 = vmatpush1.bf16.xpose.msra.mxu0 0
        %1574 = vmatprep.subr.bf16.mxu0 0
        %1575 = vmatpush1.bf16.xpose.msra.mxu0 0
        %1576 = vmatprep.mubr.bf16.mxu0 0
        %1577 = vmatmul.mubr.bf16.gmra.mrb[0].mxu0 %v1539
        %v1578 = vpop.f32.mrb[0].mxu0
        %v1579 = vadd.f32 0.0, %v1578
        %v1580 = vpop.f32.mrb[0].mxu0
        %v1581 = vpop.f32.mrb[0].mxu0
        %v1582 = vpop.f32.mrb[0].mxu0
        %1583 = vdwg.mxu0
        %v1584 = vsel %vm827, %v1529, -inf
        %1585 = vmax.xlane.f32.xlu0 %v1584
        %v1586 = vpop.xlane.xlu0 %1585
        %v1587 = vsel %vm827, %v1579, -inf
        %1588 = vmax.xlane.f32.xlu0 %v1587
        %v1589 = vpop.xlane.xlu0 %1588
        %v1590 = vsub.f32 %v1529, %v1586
        %v1591 = vsub.f32 %v1579, %v1589
        %v1592 = vmul.f32 %v1590, 1.442695
        %v1593 = vpow.pop %v1592
        %v1594 = vmul.f32 %v1591, 1.442695
        %v1595 = vpow.pop %v1594
        %v1596 = vsel %vm827, %v1593, 0.0
        %1597 = vadd.xlane.f32.xlu0 %v1596
        %v1598 = vpop.xlane.xlu0 %1597
        %v1599 = vsel %vm827, %v1595, 0.0
        %1600 = vadd.xlane.f32.xlu0 %v1599
        %v1601 = vpop.xlane.xlu0 %1600
        %v1602 = vrcp.pop %v1598
        %v1603 = vrcp.pop %v1601
        %v1604 = vmul.f32 %v1593, %v1602
        %v1605 = vmul.f32 %v1595, %v1603
        %v1606 = vpack.c.bf16 %v1604, %v1604
        %v1607 = vpack.c.bf16 %v1605, %v1605
        %1608 = vrot.lane.b32.xlu0 %v822, 40
        %v1609 = vpop.permute.xlu0 %1608
        %v1611 = vsel %vm827, %v1606, 0
        %v1614 = vsel %vm952, %v1609, 0
        %1616 = vmatprep.subr.bf16.mxu0 0
        %1617 = vmatpush1.bf16.msra.mxu0 %v1614
        %1618 = vmatprep.subr.bf16.mxu0 0
        %1619 = vmatpush1.bf16.msra.mxu0 0
        %1620 = vmatprep.subr.bf16.mxu0 0
        %1621 = vmatpush1.bf16.msra.mxu0 0
        %1622 = vmatprep.subr.bf16.mxu0 0
        %1623 = vmatpush1.bf16.msra.mxu0 0
        %1624 = vmatprep.subr.bf16.mxu0 0
        %1625 = vmatpush1.bf16.msra.mxu0 0
        %1626 = vmatprep.subr.bf16.mxu0 0
        %1627 = vmatpush1.bf16.msra.mxu0 0
        %1628 = vmatprep.subr.bf16.mxu0 0
        %1629 = vmatpush1.bf16.msra.mxu0 0
        %1630 = vmatprep.subr.bf16.mxu0 0
        %1631 = vmatpush1.bf16.msra.mxu0 0
        %1632 = vmatprep.subr.bf16.mxu0 0
        %1633 = vmatpush1.bf16.msra.mxu0 0
        %1634 = vmatprep.subr.bf16.mxu0 0
        %1635 = vmatpush1.bf16.msra.mxu0 0
        %1636 = vmatprep.subr.bf16.mxu0 0
        %1637 = vmatpush1.bf16.msra.mxu0 0
        %1638 = vmatprep.subr.bf16.mxu0 0
        %1639 = vmatpush1.bf16.msra.mxu0 0
        %1640 = vmatprep.subr.bf16.mxu0 0
        %1641 = vmatpush1.bf16.msra.mxu0 0
        %1642 = vmatprep.subr.bf16.mxu0 0
        %1643 = vmatpush1.bf16.msra.mxu0 0
        %1644 = vmatprep.subr.bf16.mxu0 0
        %1645 = vmatpush1.bf16.msra.mxu0 0
        %1646 = vmatprep.subr.bf16.mxu0 0
        %1647 = vmatpush1.bf16.msra.mxu0 0
        %1648 = vmatprep.mubr.bf16.mxu0 0
        %1649 = vmatmul.mubr.bf16.gmra.mrb[0].mxu0 %v1611
        %v1650 = vpop.f32.mrb[0].mxu0
        %v1651 = vadd.f32 0.0, %v1650
        %v1652 = vpop.f32.mrb[0].mxu0
        %v1653 = vpop.f32.mrb[0].mxu0
        %v1654 = vpop.f32.mrb[0].mxu0
        %1655 = vdwg.mxu0
        %1656 = vrot.lane.b32.xlu0 %v823, 40
        %v1657 = vpop.permute.xlu0 %1656
        %v1659 = vsel %vm827, %v1607, 0
        %v1662 = vsel %vm952, %v1657, 0
        %1664 = vmatprep.subr.bf16.mxu0 0
        %1665 = vmatpush1.bf16.msra.mxu0 %v1662
        %1666 = vmatprep.subr.bf16.mxu0 0
        %1667 = vmatpush1.bf16.msra.mxu0 0
        %1668 = vmatprep.subr.bf16.mxu0 0
        %1669 = vmatpush1.bf16.msra.mxu0 0
        %1670 = vmatprep.subr.bf16.mxu0 0
        %1671 = vmatpush1.bf16.msra.mxu0 0
        %1672 = vmatprep.subr.bf16.mxu0 0
        %1673 = vmatpush1.bf16.msra.mxu0 0
        %1674 = vmatprep.subr.bf16.mxu0 0
        %1675 = vmatpush1.bf16.msra.mxu0 0
        %1676 = vmatprep.subr.bf16.mxu0 0
        %1677 = vmatpush1.bf16.msra.mxu0 0
        %1678 = vmatprep.subr.bf16.mxu0 0
        %1679 = vmatpush1.bf16.msra.mxu0 0
        %1680 = vmatprep.subr.bf16.mxu0 0
        %1681 = vmatpush1.bf16.msra.mxu0 0
        %1682 = vmatprep.subr.bf16.mxu0 0
        %1683 = vmatpush1.bf16.msra.mxu0 0
        %1684 = vmatprep.subr.bf16.mxu0 0
        %1685 = vmatpush1.bf16.msra.mxu0 0
        %1686 = vmatprep.subr.bf16.mxu0 0
        %1687 = vmatpush1.bf16.msra.mxu0 0
        %1688 = vmatprep.subr.bf16.mxu0 0
        %1689 = vmatpush1.bf16.msra.mxu0 0
        %1690 = vmatprep.subr.bf16.mxu0 0
        %1691 = vmatpush1.bf16.msra.mxu0 0
        %1692 = vmatprep.subr.bf16.mxu0 0
        %1693 = vmatpush1.bf16.msra.mxu0 0
        %1694 = vmatprep.subr.bf16.mxu0 0
        %1695 = vmatpush1.bf16.msra.mxu0 0
        %1696 = vmatprep.mubr.bf16.mxu0 0
        %1697 = vmatmul.mubr.bf16.gmra.mrb[0].mxu0 %v1659
        %v1698 = vpop.f32.mrb[0].mxu0
        %v1699 = vadd.f32 0.0, %v1698
        %v1700 = vpop.f32.mrb[0].mxu0
        %v1701 = vpop.f32.mrb[0].mxu0
        %v1702 = vpop.f32.mrb[0].mxu0
        %1703 = vdwg.mxu0
        %1706 = vrot.lane.b32.xlu0 %v1211, 8
        %v1707 = vpop.permute.xlu0 %1706
        %1708 = vrot.lane.b32.xlu0 %v1259, 8
        %v1709 = vpop.permute.xlu0 %1708
        %1714 = vrot.lane.b32.xlu0 %v1431, 16
        %v1715 = vpop.permute.xlu0 %1714
        %1716 = vrot.lane.b32.xlu0 %v1479, 16
        %v1717 = vpop.permute.xlu0 %1716
        %1722 = vrot.lane.b32.xlu0 %v1651, 24
        %v1723 = vpop.permute.xlu0 %1722
        %1724 = vrot.lane.b32.xlu0 %v1699, 24
        %v1725 = vpop.permute.xlu0 %1724
        %v1728 = vsel %vm827, %v991, %v1707
        %v1729 = vsel %vm827, %v1039, %v1709
        %vm1730 = vcmask 130048
        %v1731 = vsel %vm1730, %v1728, %v1715
        %v1732 = vsel %vm1730, %v1729, %v1717
        %vm1733 = vcmask 195584
        %v1734 = vsel %vm1733, %v1731, %v1723
        %v1735 = vsel %vm1733, %v1732, %v1725
        %v1736 = vld [vmem:[%s612] sm:$0xf]
        %v1737 = vld [vmem:[%s612 + $0x4] sm:$0xf]
        %v1738 = vld [vmem:[%s612 + $0x8] sm:$0xf]
        %v1739 = vld [vmem:[%s612 + $0xc] sm:$0xf]
        %v1740 = vpack.c.bf16 %v1735, %v1734
        %v1741 = vld [vmem:[%s666] sm:$0x1]
        %v1743 = vlaneseq
        %v1744 = vshrl.u32 %v1743, 7
        %v1745 = vsub.s32 0, %v1744
        %v1746 = vrot.slane %v1741, %v1745
        %v1751 = vunpack.c.l.b16 %v1736
        %v1752 = vunpack.c.l.b16 %v1737
        %v1753 = vunpack.c.l.b16 %v1738
        %v1754 = vunpack.c.l.b16 %v1739
        %v1755 = vpack.c.b16 %v1752, %v1751
        %v1756 = vpack.c.b16 %v1754, %v1753
        %1759 = vrot.lane.b32.xlu0 %v1746, 32
        %v1760 = vpop.permute.xlu0 %1759
        %v1763 = vsel %vm777, %v1740, 0
        %1765 = vmatprep.subr.bf16.mxu0 0
        %1766 = vmatpush1.bf16.msra.mxu0 %v1755
        %1767 = vmatprep.subr.bf16.mxu0 0
        %1768 = vmatpush1.bf16.msra.mxu0 %v1756
        %1769 = vmatprep.subr.bf16.mxu0 0
        %1770 = vmatpush1.bf16.msra.mxu0 0
        %1771 = vmatprep.subr.bf16.mxu0 0
        %1772 = vmatpush1.bf16.msra.mxu0 0
        %1773 = vmatprep.subr.bf16.mxu0 0
        %1774 = vmatpush1.bf16.msra.mxu0 0
        %1775 = vmatprep.subr.bf16.mxu0 0
        %1776 = vmatpush1.bf16.msra.mxu0 0
        %1777 = vmatprep.subr.bf16.mxu0 0
        %1778 = vmatpush1.bf16.msra.mxu0 0
        %1779 = vmatprep.subr.bf16.mxu0 0
        %1780 = vmatpush1.bf16.msra.mxu0 0
        %1781 = vmatprep.subr.bf16.mxu0 0
        %1782 = vmatpush1.bf16.msra.mxu0 0
        %1783 = vmatprep.subr.bf16.mxu0 0
        %1784 = vmatpush1.bf16.msra.mxu0 0
        %1785 = vmatprep.subr.bf16.mxu0 0
        %1786 = vmatpush1.bf16.msra.mxu0 0
        %1787 = vmatprep.subr.bf16.mxu0 0
        %1788 = vmatpush1.bf16.msra.mxu0 0
        %1789 = vmatprep.subr.bf16.mxu0 0
        %1790 = vmatpush1.bf16.msra.mxu0 0
        %1791 = vmatprep.subr.bf16.mxu0 0
        %1792 = vmatpush1.bf16.msra.mxu0 0
        %1793 = vmatprep.subr.bf16.mxu0 0
        %1794 = vmatpush1.bf16.msra.mxu0 0
        %1795 = vmatprep.subr.bf16.mxu0 0
        %1796 = vmatpush1.bf16.msra.mxu0 0
        %1797 = vmatprep.mubr.bf16.mxu0 0
        %1798 = vmatmul.mubr.bf16.gmra.mrb[0].mxu0 %v1763
        %v1799 = vpop.f32.mrb[0].mxu0
        %v1800 = vadd.f32 %v1760, %v1799
        %v1801 = vpop.f32.mrb[0].mxu0
        %v1802 = vpop.f32.mrb[0].mxu0
        %v1803 = vadd.f32 %v1760, %v1802
        %v1804 = vpop.f32.mrb[0].mxu0
        %1805 = vdwg.mxu0
        %v1806 = vadd.f32 %v751, %v1800
        %v1807 = vadd.f32 %v752, %v1803
        %v1808 = vld [vmem:[%s666 + $0x1] sm:$0x1]
        %v1809 = vsel %vm777, %v1806, 0.0
        %1810 = vadd.xlane.f32.xlu0 %v1809
        %v1811 = vpop.xlane.xlu0 %1810
        %v1812 = vsel %vm777, %v1807, 0.0
        %1813 = vadd.xlane.f32.xlu0 %v1812
        %v1814 = vpop.xlane.xlu0 %1813
        %v1815 = vrcp.pop 32.0
        %v1816 = vmul.f32 %v1811, %v1815
        %v1817 = vmul.f32 %v1814, %v1815
        %v1818 = vsub.f32 %v1806, %v1816
        %v1819 = vsub.f32 %v1807, %v1817
        %v1820 = vmul.f32 %v1818, %v1818
        %v1821 = vmul.f32 %v1819, %v1819
        %v1822 = vsel %vm777, %v1820, 0.0
        %1823 = vadd.xlane.f32.xlu0 %v1822
        %v1824 = vpop.xlane.xlu0 %1823
        %v1825 = vsel %vm777, %v1821, 0.0
        %1826 = vadd.xlane.f32.xlu0 %v1825
        %v1827 = vpop.xlane.xlu0 %1826
        %v1828 = vmul.f32 %v1824, %v1815
        %v1829 = vmul.f32 %v1827, %v1815
        %v1830 = vadd.f32 %v1828, 1e-05
        %v1831 = vadd.f32 %v1829, 1e-05
        %v1832 = vrsqrt.pop %v1830
        %v1833 = vrsqrt.pop %v1831
        %v1834 = vmul.f32 %v1818, %v1832
        %v1835 = vmul.f32 %v1819, %v1833
        %v1837 = vlaneseq
        %v1838 = vshrl.u32 %v1837, 7
        %v1839 = vsub.s32 0, %v1838
        %v1840 = vrot.slane %v1808, %v1839
        %v1842 = vmul.f32 %v1834, %v1840
        %v1843 = vmul.f32 %v1835, %v1840
        %1844 = vrot.lane.b32.xlu0 %v1840, 96
        %v1845 = vpop.permute.xlu0 %1844
        %v1847 = vadd.f32 %v1842, %v1845
        %v1848 = vadd.f32 %v1843, %v1845
        %v1849 = vld [vmem:[%s621] sm:$0xf]
        %v1850 = vld [vmem:[%s621 + $0x4] sm:$0xf]
        %v1851 = vld [vmem:[%s621 + $0x8] sm:$0xf]
        %v1852 = vld [vmem:[%s621 + $0xc] sm:$0xf]
        %v1853 = vpack.c.bf16 %v1848, %v1847
        %v1858 = vunpack.c.l.b16 %v1849
        %v1859 = vunpack.c.l.b16 %v1850
        %v1860 = vunpack.c.l.b16 %v1851
        %v1861 = vunpack.c.l.b16 %v1852
        %v1862 = vpack.c.b16 %v1859, %v1858
        %v1863 = vpack.c.b16 %v1861, %v1860
        %1866 = vrot.lane.b32.xlu0 %v1840, 64
        %v1867 = vpop.permute.xlu0 %1866
        %v1870 = vsel %vm777, %v1853, 0
        %1872 = vmatprep.subr.bf16.mxu0 0
        %1873 = vmatpush1.bf16.msra.mxu0 %v1862
        %1874 = vmatprep.subr.bf16.mxu0 0
        %1875 = vmatpush1.bf16.msra.mxu0 %v1863
        %1876 = vmatprep.subr.bf16.mxu0 0
        %1877 = vmatpush1.bf16.msra.mxu0 0
        %1878 = vmatprep.subr.bf16.mxu0 0
        %1879 = vmatpush1.bf16.msra.mxu0 0
        %1880 = vmatprep.subr.bf16.mxu0 0
        %1881 = vmatpush1.bf16.msra.mxu0 0
        %1882 = vmatprep.subr.bf16.mxu0 0
        %1883 = vmatpush1.bf16.msra.mxu0 0
        %1884 = vmatprep.subr.bf16.mxu0 0
        %1885 = vmatpush1.bf16.msra.mxu0 0
        %1886 = vmatprep.subr.bf16.mxu0 0
        %1887 = vmatpush1.bf16.msra.mxu0 0
        %1888 = vmatprep.subr.bf16.mxu0 0
        %1889 = vmatpush1.bf16.msra.mxu0 0
        %1890 = vmatprep.subr.bf16.mxu0 0
        %1891 = vmatpush1.bf16.msra.mxu0 0
        %1892 = vmatprep.subr.bf16.mxu0 0
        %1893 = vmatpush1.bf16.msra.mxu0 0
        %1894 = vmatprep.subr.bf16.mxu0 0
        %1895 = vmatpush1.bf16.msra.mxu0 0
        %1896 = vmatprep.subr.bf16.mxu0 0
        %1897 = vmatpush1.bf16.msra.mxu0 0
        %1898 = vmatprep.subr.bf16.mxu0 0
        %1899 = vmatpush1.bf16.msra.mxu0 0
        %1900 = vmatprep.subr.bf16.mxu0 0
        %1901 = vmatpush1.bf16.msra.mxu0 0
        %1902 = vmatprep.subr.bf16.mxu0 0
        %1903 = vmatpush1.bf16.msra.mxu0 0
        %1904 = vmatprep.mubr.bf16.mxu0 0
        %1905 = vmatmul.mubr.bf16.gmra.mrb[0].mxu0 %v1870
        %v1906 = vpop.f32.mrb[0].mxu0
        %v1907 = vadd.f32 %v1867, %v1906
        %v1908 = vpop.f32.mrb[0].mxu0
        %v1909 = vpop.f32.mrb[0].mxu0
        %v1910 = vadd.f32 %v1867, %v1909
        %v1911 = vpop.f32.mrb[0].mxu0
        %1912 = vdwg.mxu0
        %v1913 = vld [vmem:[#allocation6] sm:$0xff]
        %v1914 = vld [vmem:[#allocation6 + $0x8] sm:$0xff]
        %v1915 = vld [vmem:[#allocation6 + $0x10] sm:$0xff]
        %v1916 = vld [vmem:[#allocation6 + $0x18] sm:$0xff]
        %v1917 = vld [vmem:[%s630] sm:$0xf]
        %v1918 = vld [vmem:[%s630 + $0x4] sm:$0xf]
        %v1919 = vld [vmem:[%s630 + $0x8] sm:$0xf]
        %v1920 = vld [vmem:[%s630 + $0xc] sm:$0xf]
        %v1921 = vpack.c.bf16 %v1914, %v1913
        %v1922 = vpack.c.bf16 %v1916, %v1915
        %v1923 = vld [vmem:[%s666 + $0x1] sm:$0x3]
        %v1925 = vlaneseq
        %v1926 = vshrl.u32 %v1925, 7
        %v1927 = vsub.s32 0, %v1926
        %v1928 = vrot.slane %v1923, %v1927
        %v1929 = vlaneseq
        %v1930 = vshrl.u32 %v1929, 7
        %v1931 = vsub.s32 1, %v1930
        %v1932 = vrot.slane %v1923, %v1931
        %v1937 = vunpack.c.l.b16 %v1917
        %v1938 = vunpack.c.l.b16 %v1918
        %v1939 = vunpack.c.l.b16 %v1919
        %v1940 = vunpack.c.l.b16 %v1920
        %v1941 = vpack.c.b16 %v1938, %v1937
        %v1942 = vpack.c.b16 %v1940, %v1939
        %1945 = vrot.lane.b32.xlu0 %v1928, 32
        %v1946 = vpop.permute.xlu0 %1945
        %1947 = vrot.lane.b32.xlu0 %v1932, 32
        %v1948 = vpop.permute.xlu0 %1947
        %v1949 = vsel %vm777, %v1946, %v1948
        %v1952 = vsel %vm777, %v1921, 0
        %v1955 = vsel %vm777, %v1922, 0
        %1957 = vmatprep.subr.bf16.mxu0 0
        %1958 = vmatpush1.bf16.msra.mxu0 %v1941
        %1959 = vmatprep.subr.bf16.mxu0 0
        %1960 = vmatpush1.bf16.msra.mxu0 %v1942
        %1961 = vmatprep.subr.bf16.mxu0 0
        %1962 = vmatpush1.bf16.msra.mxu0 0
        %1963 = vmatprep.subr.bf16.mxu0 0
        %1964 = vmatpush1.bf16.msra.mxu0 0
        %1965 = vmatprep.subr.bf16.mxu0 0
        %1966 = vmatpush1.bf16.msra.mxu0 0
        %1967 = vmatprep.subr.bf16.mxu0 0
        %1968 = vmatpush1.bf16.msra.mxu0 0
        %1969 = vmatprep.subr.bf16.mxu0 0
        %1970 = vmatpush1.bf16.msra.mxu0 0
        %1971 = vmatprep.subr.bf16.mxu0 0
        %1972 = vmatpush1.bf16.msra.mxu0 0
        %1973 = vmatprep.subr.bf16.mxu0 0
        %1974 = vmatpush1.bf16.msra.mxu0 0
        %1975 = vmatprep.subr.bf16.mxu0 0
        %1976 = vmatpush1.bf16.msra.mxu0 0
        %1977 = vmatprep.subr.bf16.mxu0 0
        %1978 = vmatpush1.bf16.msra.mxu0 0
        %1979 = vmatprep.subr.bf16.mxu0 0
        %1980 = vmatpush1.bf16.msra.mxu0 0
        %1981 = vmatprep.subr.bf16.mxu0 0
        %1982 = vmatpush1.bf16.msra.mxu0 0
        %1983 = vmatprep.subr.bf16.mxu0 0
        %1984 = vmatpush1.bf16.msra.mxu0 0
        %1985 = vmatprep.subr.bf16.mxu0 0
        %1986 = vmatpush1.bf16.msra.mxu0 0
        %1987 = vmatprep.subr.bf16.mxu0 0
        %1988 = vmatpush1.bf16.msra.mxu0 0
        %1989 = vmatprep.mubr.bf16.mxu0 0
        %1990 = vmatmul.mubr.bf16.gmra.mrb[0].mxu0 %v1952
        %v1991 = vpop.f32.mrb[0].mxu0
        %v1992 = vadd.f32 %v1949, %v1991
        %v1993 = vpop.f32.mrb[0].mxu0
        %v1994 = vpop.f32.mrb[0].mxu0
        %v1995 = vadd.f32 %v1949, %v1994
        %v1996 = vpop.f32.mrb[0].mxu0
        %1997 = vmatprep.mubr.bf16.mxu0 0
        %1998 = vmatmul.mubr.bf16.gmra.mrb[0].mxu0 %v1955
        %v1999 = vpop.f32.mrb[0].mxu0
        %v2000 = vadd.f32 %v1949, %v1999
        %v2001 = vpop.f32.mrb[0].mxu0
        %v2002 = vpop.f32.mrb[0].mxu0
        %v2003 = vadd.f32 %v1949, %v2002
        %v2004 = vpop.f32.mrb[0].mxu0
        %2005 = vdwg.mxu0
        %v2006 = vld [vmem:[#allocation8] sm:$0xff]
        %v2007 = vpack.c.bf16 %v1907, %v1907
        %v2008 = vpack.c.bf16 %v1910, %v1910
        %v2009 = vpack.c.bf16 %v1995, %v1992
        %v2010 = vpack.c.bf16 %v2003, %v2000
        %v2012 = vsel %vm827, %v2007, 0
        %v2015 = vsel %vm827, %v2009, 0
        %2017 = vmatprep.subr.bf16.mxu0 0
        %2018 = vmatpush1.bf16.xpose.msra.mxu0 %v2015
        %2019 = vmatprep.subr.bf16.mxu0 0
        %2020 = vmatpush1.bf16.xpose.msra.mxu0 0
        %2021 = vmatprep.subr.bf16.mxu0 0
        %2022 = vmatpush1.bf16.xpose.msra.mxu0 0
        %2023 = vmatprep.subr.bf16.mxu0 0
        %2024 = vmatpush1.bf16.xpose.msra.mxu0 0
        %2025 = vmatprep.subr.bf16.mxu0 0
        %2026 = vmatpush1.bf16.xpose.msra.mxu0 0
        %2027 = vmatprep.subr.bf16.mxu0 0
        %2028 = vmatpush1.bf16.xpose.msra.mxu0 0
        %2029 = vmatprep.subr.bf16.mxu0 0
        %2030 = vmatpush1.bf16.xpose.msra.mxu0 0
        %2031 = vmatprep.subr.bf16.mxu0 0
        %2032 = vmatpush1.bf16.xpose.msra.mxu0 0
        %2033 = vmatprep.subr.bf16.mxu0 0
        %2034 = vmatpush1.bf16.xpose.msra.mxu0 0
        %2035 = vmatprep.subr.bf16.mxu0 0
        %2036 = vmatpush1.bf16.xpose.msra.mxu0 0
        %2037 = vmatprep.subr.bf16.mxu0 0
        %2038 = vmatpush1.bf16.xpose.msra.mxu0 0
        %2039 = vmatprep.subr.bf16.mxu0 0
        %2040 = vmatpush1.bf16.xpose.msra.mxu0 0
        %2041 = vmatprep.subr.bf16.mxu0 0
        %2042 = vmatpush1.bf16.xpose.msra.mxu0 0
        %2043 = vmatprep.subr.bf16.mxu0 0
        %2044 = vmatpush1.bf16.xpose.msra.mxu0 0
        %2045 = vmatprep.subr.bf16.mxu0 0
        %2046 = vmatpush1.bf16.xpose.msra.mxu0 0
        %2047 = vmatprep.subr.bf16.mxu0 0
        %2048 = vmatpush1.bf16.xpose.msra.mxu0 0
        %2049 = vmatprep.mubr.bf16.mxu0 0
        %2050 = vmatmul.mubr.bf16.gmra.mrb[0].mxu0 %v2012
        %v2051 = vpop.f32.mrb[0].mxu0
        %v2052 = vadd.f32 %v2006, %v2051
        %v2053 = vpop.f32.mrb[0].mxu0
        %v2054 = vpop.f32.mrb[0].mxu0
        %v2055 = vpop.f32.mrb[0].mxu0
        %2056 = vdwg.mxu0
        %v2058 = vsel %vm827, %v2008, 0
        %v2061 = vsel %vm827, %v2010, 0
        %2063 = vmatprep.subr.bf16.mxu0 0
        %2064 = vmatpush1.bf16.xpose.msra.mxu0 %v2061
        %2065 = vmatprep.subr.bf16.mxu0 0
        %2066 = vmatpush1.bf16.xpose.msra.mxu0 0
        %2067 = vmatprep.subr.bf16.mxu0 0
        %2068 = vmatpush1.bf16.xpose.msra.mxu0 0
        %2069 = vmatprep.subr.bf16.mxu0 0
        %2070 = vmatpush1.bf16.xpose.msra.mxu0 0
        %2071 = vmatprep.subr.bf16.mxu0 0
        %2072 = vmatpush1.bf16.xpose.msra.mxu0 0
        %2073 = vmatprep.subr.bf16.mxu0 0
        %2074 = vmatpush1.bf16.xpose.msra.mxu0 0
        %2075 = vmatprep.subr.bf16.mxu0 0
        %2076 = vmatpush1.bf16.xpose.msra.mxu0 0
        %2077 = vmatprep.subr.bf16.mxu0 0
        %2078 = vmatpush1.bf16.xpose.msra.mxu0 0
        %2079 = vmatprep.subr.bf16.mxu0 0
        %2080 = vmatpush1.bf16.xpose.msra.mxu0 0
        %2081 = vmatprep.subr.bf16.mxu0 0
        %2082 = vmatpush1.bf16.xpose.msra.mxu0 0
        %2083 = vmatprep.subr.bf16.mxu0 0
        %2084 = vmatpush1.bf16.xpose.msra.mxu0 0
        %2085 = vmatprep.subr.bf16.mxu0 0
        %2086 = vmatpush1.bf16.xpose.msra.mxu0 0
        %2087 = vmatprep.subr.bf16.mxu0 0
        %2088 = vmatpush1.bf16.xpose.msra.mxu0 0
        %2089 = vmatprep.subr.bf16.mxu0 0
        %2090 = vmatpush1.bf16.xpose.msra.mxu0 0
        %2091 = vmatprep.subr.bf16.mxu0 0
        %2092 = vmatpush1.bf16.xpose.msra.mxu0 0
        %2093 = vmatprep.subr.bf16.mxu0 0
        %2094 = vmatpush1.bf16.xpose.msra.mxu0 0
        %2095 = vmatprep.mubr.bf16.mxu0 0
        %2096 = vmatmul.mubr.bf16.gmra.mrb[0].mxu0 %v2058
        %v2097 = vpop.f32.mrb[0].mxu0
        %v2098 = vadd.f32 %v2006, %v2097
        %v2099 = vpop.f32.mrb[0].mxu0
        %v2100 = vpop.f32.mrb[0].mxu0
        %v2101 = vpop.f32.mrb[0].mxu0
        %2102 = vdwg.mxu0
        %v2103 = vsel %vm1730, %v2052, -inf
        %2104 = vmax.xlane.f32.xlu0 %v2103
        %v2105 = vpop.xlane.xlu0 %2104
        %v2106 = vsel %vm1730, %v2098, -inf
        %2107 = vmax.xlane.f32.xlu0 %v2106
        %v2108 = vpop.xlane.xlu0 %2107
        %v2109 = vsub.f32 %v2052, %v2105
        %v2110 = vsub.f32 %v2098, %v2108
        %v2111 = vmul.f32 %v2109, 1.442695
        %v2112 = vpow.pop %v2111
        %v2113 = vmul.f32 %v2110, 1.442695
        %v2114 = vpow.pop %v2113
        %v2115 = vsel %vm1730, %v2112, 0.0
        %2116 = vadd.xlane.f32.xlu0 %v2115
        %v2117 = vpop.xlane.xlu0 %2116
        %v2118 = vsel %vm1730, %v2114, 0.0
        %2119 = vadd.xlane.f32.xlu0 %v2118
        %v2120 = vpop.xlane.xlu0 %2119
        %v2121 = vrcp.pop %v2117
        %v2122 = vrcp.pop %v2120
        %v2123 = vmul.f32 %v2112, %v2121
        %v2124 = vmul.f32 %v2114, %v2122
        %v2125 = vpack.c.bf16 %v2123, %v2123
        %v2126 = vpack.c.bf16 %v2124, %v2124
        %2128 = vrot.lane.b32.xlu0 %v2009, 96
        %v2129 = vpop.permute.xlu0 %2128
        %v2132 = vsel %vm1730, %v2125, 0
        %2134 = vmatprep.subr.bf16.mxu0 0
        %2135 = vmatpush1.bf16.msra.mxu0 %v2129
        %2136 = vmatprep.subr.bf16.mxu0 0
        %2137 = vmatpush1.bf16.msra.mxu0 0
        %2138 = vmatprep.subr.bf16.mxu0 0
        %2139 = vmatpush1.bf16.msra.mxu0 0
        %2140 = vmatprep.subr.bf16.mxu0 0
        %2141 = vmatpush1.bf16.msra.mxu0 0
        %2142 = vmatprep.subr.bf16.mxu0 0
        %2143 = vmatpush1.bf16.msra.mxu0 0
        %2144 = vmatprep.subr.bf16.mxu0 0
        %2145 = vmatpush1.bf16.msra.mxu0 0
        %2146 = vmatprep.subr.bf16.mxu0 0
        %2147 = vmatpush1.bf16.msra.mxu0 0
        %2148 = vmatprep.subr.bf16.mxu0 0
        %2149 = vmatpush1.bf16.msra.mxu0 0
        %2150 = vmatprep.subr.bf16.mxu0 0
        %2151 = vmatpush1.bf16.msra.mxu0 0
        %2152 = vmatprep.subr.bf16.mxu0 0
        %2153 = vmatpush1.bf16.msra.mxu0 0
        %2154 = vmatprep.subr.bf16.mxu0 0
        %2155 = vmatpush1.bf16.msra.mxu0 0
        %2156 = vmatprep.subr.bf16.mxu0 0
        %2157 = vmatpush1.bf16.msra.mxu0 0
        %2158 = vmatprep.subr.bf16.mxu0 0
        %2159 = vmatpush1.bf16.msra.mxu0 0
        %2160 = vmatprep.subr.bf16.mxu0 0
        %2161 = vmatpush1.bf16.msra.mxu0 0
        %2162 = vmatprep.subr.bf16.mxu0 0
        %2163 = vmatpush1.bf16.msra.mxu0 0
        %2164 = vmatprep.subr.bf16.mxu0 0
        %2165 = vmatpush1.bf16.msra.mxu0 0
        %2166 = vmatprep.mubr.bf16.mxu0 0
        %2167 = vmatmul.mubr.bf16.gmra.mrb[0].mxu0 %v2132
        %v2168 = vpop.f32.mrb[0].mxu0
        %v2169 = vadd.f32 0.0, %v2168
        %v2170 = vpop.f32.mrb[0].mxu0
        %v2171 = vpop.f32.mrb[0].mxu0
        %v2172 = vpop.f32.mrb[0].mxu0
        %2173 = vdwg.mxu0
        %2175 = vrot.lane.b32.xlu0 %v2010, 96
        %v2176 = vpop.permute.xlu0 %2175
        %v2179 = vsel %vm1730, %v2126, 0
        %2181 = vmatprep.subr.bf16.mxu0 0
        %2182 = vmatpush1.bf16.msra.mxu0 %v2176
        %2183 = vmatprep.subr.bf16.mxu0 0
        %2184 = vmatpush1.bf16.msra.mxu0 0
        %2185 = vmatprep.subr.bf16.mxu0 0
        %2186 = vmatpush1.bf16.msra.mxu0 0
        %2187 = vmatprep.subr.bf16.mxu0 0
        %2188 = vmatpush1.bf16.msra.mxu0 0
        %2189 = vmatprep.subr.bf16.mxu0 0
        %2190 = vmatpush1.bf16.msra.mxu0 0
        %2191 = vmatprep.subr.bf16.mxu0 0
        %2192 = vmatpush1.bf16.msra.mxu0 0
        %2193 = vmatprep.subr.bf16.mxu0 0
        %2194 = vmatpush1.bf16.msra.mxu0 0
        %2195 = vmatprep.subr.bf16.mxu0 0
        %2196 = vmatpush1.bf16.msra.mxu0 0
        %2197 = vmatprep.subr.bf16.mxu0 0
        %2198 = vmatpush1.bf16.msra.mxu0 0
        %2199 = vmatprep.subr.bf16.mxu0 0
        %2200 = vmatpush1.bf16.msra.mxu0 0
        %2201 = vmatprep.subr.bf16.mxu0 0
        %2202 = vmatpush1.bf16.msra.mxu0 0
        %2203 = vmatprep.subr.bf16.mxu0 0
        %2204 = vmatpush1.bf16.msra.mxu0 0
        %2205 = vmatprep.subr.bf16.mxu0 0
        %2206 = vmatpush1.bf16.msra.mxu0 0
        %2207 = vmatprep.subr.bf16.mxu0 0
        %2208 = vmatpush1.bf16.msra.mxu0 0
        %2209 = vmatprep.subr.bf16.mxu0 0
        %2210 = vmatpush1.bf16.msra.mxu0 0
        %2211 = vmatprep.subr.bf16.mxu0 0
        %2212 = vmatpush1.bf16.msra.mxu0 0
        %2213 = vmatprep.mubr.bf16.mxu0 0
        %2214 = vmatmul.mubr.bf16.gmra.mrb[0].mxu0 %v2179
        %v2215 = vpop.f32.mrb[0].mxu0
        %v2216 = vadd.f32 0.0, %v2215
        %v2217 = vpop.f32.mrb[0].mxu0
        %v2218 = vpop.f32.mrb[0].mxu0
        %v2219 = vpop.f32.mrb[0].mxu0
        %2220 = vdwg.mxu0
        %2222 = vrot.lane.b32.xlu0 %v2007, 120
        %v2223 = vpop.permute.xlu0 %2222
        %2224 = vrot.lane.b32.xlu0 %v2009, 120
        %v2225 = vpop.permute.xlu0 %2224
        %v2227 = vsel %vm827, %v2223, 0
        %v2230 = vsel %vm827, %v2225, 0
        %2232 = vmatprep.subr.bf16.mxu0 0
        %2233 = vmatpush1.bf16.xpose.msra.mxu0 %v2230
        %2234 = vmatprep.subr.bf16.mxu0 0
        %2235 = vmatpush1.bf16.xpose.msra.mxu0 0
        %2236 = vmatprep.subr.bf16.mxu0 0
        %2237 = vmatpush1.bf16.xpose.msra.mxu0 0
        %2238 = vmatprep.subr.bf16.mxu0 0
        %2239 = vmatpush1.bf16.xpose.msra.mxu0 0
        %2240 = vmatprep.subr.bf16.mxu0 0
        %2241 = vmatpush1.bf16.xpose.msra.mxu0 0
        %2242 = vmatprep.subr.bf16.mxu0 0
        %2243 = vmatpush1.bf16.xpose.msra.mxu0 0
        %2244 = vmatprep.subr.bf16.mxu0 0
        %2245 = vmatpush1.bf16.xpose.msra.mxu0 0
        %2246 = vmatprep.subr.bf16.mxu0 0
        %2247 = vmatpush1.bf16.xpose.msra.mxu0 0
        %2248 = vmatprep.subr.bf16.mxu0 0
        %2249 = vmatpush1.bf16.xpose.msra.mxu0 0
        %2250 = vmatprep.subr.bf16.mxu0 0
        %2251 = vmatpush1.bf16.xpose.msra.mxu0 0
        %2252 = vmatprep.subr.bf16.mxu0 0
        %2253 = vmatpush1.bf16.xpose.msra.mxu0 0
        %2254 = vmatprep.subr.bf16.mxu0 0
        %2255 = vmatpush1.bf16.xpose.msra.mxu0 0
        %2256 = vmatprep.subr.bf16.mxu0 0
        %2257 = vmatpush1.bf16.xpose.msra.mxu0 0
        %2258 = vmatprep.subr.bf16.mxu0 0
        %2259 = vmatpush1.bf16.xpose.msra.mxu0 0
        %2260 = vmatprep.subr.bf16.mxu0 0
        %2261 = vmatpush1.bf16.xpose.msra.mxu0 0
        %2262 = vmatprep.subr.bf16.mxu0 0
        %2263 = vmatpush1.bf16.xpose.msra.mxu0 0
        %2264 = vmatprep.mubr.bf16.mxu0 0
        %2265 = vmatmul.mubr.bf16.gmra.mrb[0].mxu0 %v2227
        %v2266 = vpop.f32.mrb[0].mxu0
        %v2267 = vadd.f32 %v2006, %v2266
        %v2268 = vpop.f32.mrb[0].mxu0
        %v2269 = vpop.f32.mrb[0].mxu0
        %v2270 = vpop.f32.mrb[0].mxu0
        %2271 = vdwg.mxu0
        %2273 = vrot.lane.b32.xlu0 %v2008, 120
        %v2274 = vpop.permute.xlu0 %2273
        %2275 = vrot.lane.b32.xlu0 %v2010, 120
        %v2276 = vpop.permute.xlu0 %2275
        %v2278 = vsel %vm827, %v2274, 0
        %v2281 = vsel %vm827, %v2276, 0
        %2283 = vmatprep.subr.bf16.mxu0 0
        %2284 = vmatpush1.bf16.xpose.msra.mxu0 %v2281
        %2285 = vmatprep.subr.bf16.mxu0 0
        %2286 = vmatpush1.bf16.xpose.msra.mxu0 0
        %2287 = vmatprep.subr.bf16.mxu0 0
        %2288 = vmatpush1.bf16.xpose.msra.mxu0 0
        %2289 = vmatprep.subr.bf16.mxu0 0
        %2290 = vmatpush1.bf16.xpose.msra.mxu0 0
        %2291 = vmatprep.subr.bf16.mxu0 0
        %2292 = vmatpush1.bf16.xpose.msra.mxu0 0
        %2293 = vmatprep.subr.bf16.mxu0 0
        %2294 = vmatpush1.bf16.xpose.msra.mxu0 0
        %2295 = vmatprep.subr.bf16.mxu0 0
        %2296 = vmatpush1.bf16.xpose.msra.mxu0 0
        %2297 = vmatprep.subr.bf16.mxu0 0
        %2298 = vmatpush1.bf16.xpose.msra.mxu0 0
        %2299 = vmatprep.subr.bf16.mxu0 0
        %2300 = vmatpush1.bf16.xpose.msra.mxu0 0
        %2301 = vmatprep.subr.bf16.mxu0 0
        %2302 = vmatpush1.bf16.xpose.msra.mxu0 0
        %2303 = vmatprep.subr.bf16.mxu0 0
        %2304 = vmatpush1.bf16.xpose.msra.mxu0 0
        %2305 = vmatprep.subr.bf16.mxu0 0
        %2306 = vmatpush1.bf16.xpose.msra.mxu0 0
        %2307 = vmatprep.subr.bf16.mxu0 0
        %2308 = vmatpush1.bf16.xpose.msra.mxu0 0
        %2309 = vmatprep.subr.bf16.mxu0 0
        %2310 = vmatpush1.bf16.xpose.msra.mxu0 0
        %2311 = vmatprep.subr.bf16.mxu0 0
        %2312 = vmatpush1.bf16.xpose.msra.mxu0 0
        %2313 = vmatprep.subr.bf16.mxu0 0
        %2314 = vmatpush1.bf16.xpose.msra.mxu0 0
        %2315 = vmatprep.mubr.bf16.mxu0 0
        %2316 = vmatmul.mubr.bf16.gmra.mrb[0].mxu0 %v2278
        %v2317 = vpop.f32.mrb[0].mxu0
        %v2318 = vadd.f32 %v2006, %v2317
        %v2319 = vpop.f32.mrb[0].mxu0
        %v2320 = vpop.f32.mrb[0].mxu0
        %v2321 = vpop.f32.mrb[0].mxu0
        %2322 = vdwg.mxu0
        %v2323 = vsel %vm1730, %v2267, -inf
        %2324 = vmax.xlane.f32.xlu0 %v2323
        %v2325 = vpop.xlane.xlu0 %2324
        %v2326 = vsel %vm1730, %v2318, -inf
        %2327 = vmax.xlane.f32.xlu0 %v2326
        %v2328 = vpop.xlane.xlu0 %2327
        %v2329 = vsub.f32 %v2267, %v2325
        %v2330 = vsub.f32 %v2318, %v2328
        %v2331 = vmul.f32 %v2329, 1.442695
        %v2332 = vpow.pop %v2331
        %v2333 = vmul.f32 %v2330, 1.442695
        %v2334 = vpow.pop %v2333
        %v2335 = vsel %vm1730, %v2332, 0.0
        %2336 = vadd.xlane.f32.xlu0 %v2335
        %v2337 = vpop.xlane.xlu0 %2336
        %v2338 = vsel %vm1730, %v2334, 0.0
        %2339 = vadd.xlane.f32.xlu0 %v2338
        %v2340 = vpop.xlane.xlu0 %2339
        %v2341 = vrcp.pop %v2337
        %v2342 = vrcp.pop %v2340
        %v2343 = vmul.f32 %v2332, %v2341
        %v2344 = vmul.f32 %v2334, %v2342
        %v2345 = vpack.c.bf16 %v2343, %v2343
        %v2346 = vpack.c.bf16 %v2344, %v2344
        %2347 = vrot.lane.b32.xlu0 %v2009, 88
        %v2348 = vpop.permute.xlu0 %2347
        %v2351 = vsel %vm1730, %v2345, 0
        %2353 = vmatprep.subr.bf16.mxu0 0
        %2354 = vmatpush1.bf16.msra.mxu0 %v2348
        %2355 = vmatprep.subr.bf16.mxu0 0
        %2356 = vmatpush1.bf16.msra.mxu0 0
        %2357 = vmatprep.subr.bf16.mxu0 0
        %2358 = vmatpush1.bf16.msra.mxu0 0
        %2359 = vmatprep.subr.bf16.mxu0 0
        %2360 = vmatpush1.bf16.msra.mxu0 0
        %2361 = vmatprep.subr.bf16.mxu0 0
        %2362 = vmatpush1.bf16.msra.mxu0 0
        %2363 = vmatprep.subr.bf16.mxu0 0
        %2364 = vmatpush1.bf16.msra.mxu0 0
        %2365 = vmatprep.subr.bf16.mxu0 0
        %2366 = vmatpush1.bf16.msra.mxu0 0
        %2367 = vmatprep.subr.bf16.mxu0 0
        %2368 = vmatpush1.bf16.msra.mxu0 0
        %2369 = vmatprep.subr.bf16.mxu0 0
        %2370 = vmatpush1.bf16.msra.mxu0 0
        %2371 = vmatprep.subr.bf16.mxu0 0
        %2372 = vmatpush1.bf16.msra.mxu0 0
        %2373 = vmatprep.subr.bf16.mxu0 0
        %2374 = vmatpush1.bf16.msra.mxu0 0
        %2375 = vmatprep.subr.bf16.mxu0 0
        %2376 = vmatpush1.bf16.msra.mxu0 0
        %2377 = vmatprep.subr.bf16.mxu0 0
        %2378 = vmatpush1.bf16.msra.mxu0 0
        %2379 = vmatprep.subr.bf16.mxu0 0
        %2380 = vmatpush1.bf16.msra.mxu0 0
        %2381 = vmatprep.subr.bf16.mxu0 0
        %2382 = vmatpush1.bf16.msra.mxu0 0
        %2383 = vmatprep.subr.bf16.mxu0 0
        %2384 = vmatpush1.bf16.msra.mxu0 0
        %2385 = vmatprep.mubr.bf16.mxu0 0
        %2386 = vmatmul.mubr.bf16.gmra.mrb[0].mxu0 %v2351
        %v2387 = vpop.f32.mrb[0].mxu0
        %v2388 = vadd.f32 0.0, %v2387
        %v2389 = vpop.f32.mrb[0].mxu0
        %v2390 = vpop.f32.mrb[0].mxu0
        %v2391 = vpop.f32.mrb[0].mxu0
        %2392 = vdwg.mxu0
        %2393 = vrot.lane.b32.xlu0 %v2010, 88
        %v2394 = vpop.permute.xlu0 %2393
        %v2397 = vsel %vm1730, %v2346, 0
        %2399 = vmatprep.subr.bf16.mxu0 0
        %2400 = vmatpush1.bf16.msra.mxu0 %v2394
        %2401 = vmatprep.subr.bf16.mxu0 0
        %2402 = vmatpush1.bf16.msra.mxu0 0
        %2403 = vmatprep.subr.bf16.mxu0 0
        %2404 = vmatpush1.bf16.msra.mxu0 0
        %2405 = vmatprep.subr.bf16.mxu0 0
        %2406 = vmatpush1.bf16.msra.mxu0 0
        %2407 = vmatprep.subr.bf16.mxu0 0
        %2408 = vmatpush1.bf16.msra.mxu0 0
        %2409 = vmatprep.subr.bf16.mxu0 0
        %2410 = vmatpush1.bf16.msra.mxu0 0
        %2411 = vmatprep.subr.bf16.mxu0 0
        %2412 = vmatpush1.bf16.msra.mxu0 0
        %2413 = vmatprep.subr.bf16.mxu0 0
        %2414 = vmatpush1.bf16.msra.mxu0 0
        %2415 = vmatprep.subr.bf16.mxu0 0
        %2416 = vmatpush1.bf16.msra.mxu0 0
        %2417 = vmatprep.subr.bf16.mxu0 0
        %2418 = vmatpush1.bf16.msra.mxu0 0
        %2419 = vmatprep.subr.bf16.mxu0 0
        %2420 = vmatpush1.bf16.msra.mxu0 0
        %2421 = vmatprep.subr.bf16.mxu0 0
        %2422 = vmatpush1.bf16.msra.mxu0 0
        %2423 = vmatprep.subr.bf16.mxu0 0
        %2424 = vmatpush1.bf16.msra.mxu0 0
        %2425 = vmatprep.subr.bf16.mxu0 0
        %2426 = vmatpush1.bf16.msra.mxu0 0
        %2427 = vmatprep.subr.bf16.mxu0 0
        %2428 = vmatpush1.bf16.msra.mxu0 0
        %2429 = vmatprep.subr.bf16.mxu0 0
        %2430 = vmatpush1.bf16.msra.mxu0 0
        %2431 = vmatprep.mubr.bf16.mxu0 0
        %2432 = vmatmul.mubr.bf16.gmra.mrb[0].mxu0 %v2397
        %v2433 = vpop.f32.mrb[0].mxu0
        %v2434 = vadd.f32 0.0, %v2433
        %v2435 = vpop.f32.mrb[0].mxu0
        %v2436 = vpop.f32.mrb[0].mxu0
        %v2437 = vpop.f32.mrb[0].mxu0
        %2438 = vdwg.mxu0
        %2439 = vrot.lane.b32.xlu0 %v2007, 112
        %v2440 = vpop.permute.xlu0 %2439
        %2441 = vrot.lane.b32.xlu0 %v2009, 112
        %v2442 = vpop.permute.xlu0 %2441
        %v2444 = vsel %vm827, %v2440, 0
        %v2447 = vsel %vm827, %v2442, 0
        %2449 = vmatprep.subr.bf16.mxu0 0
        %2450 = vmatpush1.bf16.xpose.msra.mxu0 %v2447
        %2451 = vmatprep.subr.bf16.mxu0 0
        %2452 = vmatpush1.bf16.xpose.msra.mxu0 0
        %2453 = vmatprep.subr.bf16.mxu0 0
        %2454 = vmatpush1.bf16.xpose.msra.mxu0 0
        %2455 = vmatprep.subr.bf16.mxu0 0
        %2456 = vmatpush1.bf16.xpose.msra.mxu0 0
        %2457 = vmatprep.subr.bf16.mxu0 0
        %2458 = vmatpush1.bf16.xpose.msra.mxu0 0
        %2459 = vmatprep.subr.bf16.mxu0 0
        %2460 = vmatpush1.bf16.xpose.msra.mxu0 0
        %2461 = vmatprep.subr.bf16.mxu0 0
        %2462 = vmatpush1.bf16.xpose.msra.mxu0 0
        %2463 = vmatprep.subr.bf16.mxu0 0
        %2464 = vmatpush1.bf16.xpose.msra.mxu0 0
        %2465 = vmatprep.subr.bf16.mxu0 0
        %2466 = vmatpush1.bf16.xpose.msra.mxu0 0
        %2467 = vmatprep.subr.bf16.mxu0 0
        %2468 = vmatpush1.bf16.xpose.msra.mxu0 0
        %2469 = vmatprep.subr.bf16.mxu0 0
        %2470 = vmatpush1.bf16.xpose.msra.mxu0 0
        %2471 = vmatprep.subr.bf16.mxu0 0
        %2472 = vmatpush1.bf16.xpose.msra.mxu0 0
        %2473 = vmatprep.subr.bf16.mxu0 0
        %2474 = vmatpush1.bf16.xpose.msra.mxu0 0
        %2475 = vmatprep.subr.bf16.mxu0 0
        %2476 = vmatpush1.bf16.xpose.msra.mxu0 0
        %2477 = vmatprep.subr.bf16.mxu0 0
        %2478 = vmatpush1.bf16.xpose.msra.mxu0 0
        %2479 = vmatprep.subr.bf16.mxu0 0
        %2480 = vmatpush1.bf16.xpose.msra.mxu0 0
        %2481 = vmatprep.mubr.bf16.mxu0 0
        %2482 = vmatmul.mubr.bf16.gmra.mrb[0].mxu0 %v2444
        %v2483 = vpop.f32.mrb[0].mxu0
        %v2484 = vadd.f32 %v2006, %v2483
        %v2485 = vpop.f32.mrb[0].mxu0
        %v2486 = vpop.f32.mrb[0].mxu0
        %v2487 = vpop.f32.mrb[0].mxu0
        %2488 = vdwg.mxu0
        %2489 = vrot.lane.b32.xlu0 %v2008, 112
        %v2490 = vpop.permute.xlu0 %2489
        %2491 = vrot.lane.b32.xlu0 %v2010, 112
        %v2492 = vpop.permute.xlu0 %2491
        %v2494 = vsel %vm827, %v2490, 0
        %v2497 = vsel %vm827, %v2492, 0
        %2499 = vmatprep.subr.bf16.mxu0 0
        %2500 = vmatpush1.bf16.xpose.msra.mxu0 %v2497
        %2501 = vmatprep.subr.bf16.mxu0 0
        %2502 = vmatpush1.bf16.xpose.msra.mxu0 0
        %2503 = vmatprep.subr.bf16.mxu0 0
        %2504 = vmatpush1.bf16.xpose.msra.mxu0 0
        %2505 = vmatprep.subr.bf16.mxu0 0
        %2506 = vmatpush1.bf16.xpose.msra.mxu0 0
        %2507 = vmatprep.subr.bf16.mxu0 0
        %2508 = vmatpush1.bf16.xpose.msra.mxu0 0
        %2509 = vmatprep.subr.bf16.mxu0 0
        %2510 = vmatpush1.bf16.xpose.msra.mxu0 0
        %2511 = vmatprep.subr.bf16.mxu0 0
        %2512 = vmatpush1.bf16.xpose.msra.mxu0 0
        %2513 = vmatprep.subr.bf16.mxu0 0
        %2514 = vmatpush1.bf16.xpose.msra.mxu0 0
        %2515 = vmatprep.subr.bf16.mxu0 0
        %2516 = vmatpush1.bf16.xpose.msra.mxu0 0
        %2517 = vmatprep.subr.bf16.mxu0 0
        %2518 = vmatpush1.bf16.xpose.msra.mxu0 0
        %2519 = vmatprep.subr.bf16.mxu0 0
        %2520 = vmatpush1.bf16.xpose.msra.mxu0 0
        %2521 = vmatprep.subr.bf16.mxu0 0
        %2522 = vmatpush1.bf16.xpose.msra.mxu0 0
        %2523 = vmatprep.subr.bf16.mxu0 0
        %2524 = vmatpush1.bf16.xpose.msra.mxu0 0
        %2525 = vmatprep.subr.bf16.mxu0 0
        %2526 = vmatpush1.bf16.xpose.msra.mxu0 0
        %2527 = vmatprep.subr.bf16.mxu0 0
        %2528 = vmatpush1.bf16.xpose.msra.mxu0 0
        %2529 = vmatprep.subr.bf16.mxu0 0
        %2530 = vmatpush1.bf16.xpose.msra.mxu0 0
        %2531 = vmatprep.mubr.bf16.mxu0 0
        %2532 = vmatmul.mubr.bf16.gmra.mrb[0].mxu0 %v2494
        %v2533 = vpop.f32.mrb[0].mxu0
        %v2534 = vadd.f32 %v2006, %v2533
        %v2535 = vpop.f32.mrb[0].mxu0
        %v2536 = vpop.f32.mrb[0].mxu0
        %v2537 = vpop.f32.mrb[0].mxu0
        %2538 = vdwg.mxu0
        %v2539 = vsel %vm1730, %v2484, -inf
        %2540 = vmax.xlane.f32.xlu0 %v2539
        %v2541 = vpop.xlane.xlu0 %2540
        %v2542 = vsel %vm1730, %v2534, -inf
        %2543 = vmax.xlane.f32.xlu0 %v2542
        %v2544 = vpop.xlane.xlu0 %2543
        %v2545 = vsub.f32 %v2484, %v2541
        %v2546 = vsub.f32 %v2534, %v2544
        %v2547 = vmul.f32 %v2545, 1.442695
        %v2548 = vpow.pop %v2547
        %v2549 = vmul.f32 %v2546, 1.442695
        %v2550 = vpow.pop %v2549
        %v2551 = vsel %vm1730, %v2548, 0.0
        %2552 = vadd.xlane.f32.xlu0 %v2551
        %v2553 = vpop.xlane.xlu0 %2552
        %v2554 = vsel %vm1730, %v2550, 0.0
        %2555 = vadd.xlane.f32.xlu0 %v2554
        %v2556 = vpop.xlane.xlu0 %2555
        %v2557 = vrcp.pop %v2553
        %v2558 = vrcp.pop %v2556
        %v2559 = vmul.f32 %v2548, %v2557
        %v2560 = vmul.f32 %v2550, %v2558
        %v2561 = vpack.c.bf16 %v2559, %v2559
        %v2562 = vpack.c.bf16 %v2560, %v2560
        %2563 = vrot.lane.b32.xlu0 %v2009, 80
        %v2564 = vpop.permute.xlu0 %2563
        %v2567 = vsel %vm1730, %v2561, 0
        %2569 = vmatprep.subr.bf16.mxu0 0
        %2570 = vmatpush1.bf16.msra.mxu0 %v2564
        %2571 = vmatprep.subr.bf16.mxu0 0
        %2572 = vmatpush1.bf16.msra.mxu0 0
        %2573 = vmatprep.subr.bf16.mxu0 0
        %2574 = vmatpush1.bf16.msra.mxu0 0
        %2575 = vmatprep.subr.bf16.mxu0 0
        %2576 = vmatpush1.bf16.msra.mxu0 0
        %2577 = vmatprep.subr.bf16.mxu0 0
        %2578 = vmatpush1.bf16.msra.mxu0 0
        %2579 = vmatprep.subr.bf16.mxu0 0
        %2580 = vmatpush1.bf16.msra.mxu0 0
        %2581 = vmatprep.subr.bf16.mxu0 0
        %2582 = vmatpush1.bf16.msra.mxu0 0
        %2583 = vmatprep.subr.bf16.mxu0 0
        %2584 = vmatpush1.bf16.msra.mxu0 0
        %2585 = vmatprep.subr.bf16.mxu0 0
        %2586 = vmatpush1.bf16.msra.mxu0 0
        %2587 = vmatprep.subr.bf16.mxu0 0
        %2588 = vmatpush1.bf16.msra.mxu0 0
        %2589 = vmatprep.subr.bf16.mxu0 0
        %2590 = vmatpush1.bf16.msra.mxu0 0
        %2591 = vmatprep.subr.bf16.mxu0 0
        %2592 = vmatpush1.bf16.msra.mxu0 0
        %2593 = vmatprep.subr.bf16.mxu0 0
        %2594 = vmatpush1.bf16.msra.mxu0 0
        %2595 = vmatprep.subr.bf16.mxu0 0
        %2596 = vmatpush1.bf16.msra.mxu0 0
        %2597 = vmatprep.subr.bf16.mxu0 0
        %2598 = vmatpush1.bf16.msra.mxu0 0
        %2599 = vmatprep.subr.bf16.mxu0 0
        %2600 = vmatpush1.bf16.msra.mxu0 0
        %2601 = vmatprep.mubr.bf16.mxu0 0
        %2602 = vmatmul.mubr.bf16.gmra.mrb[0].mxu0 %v2567
        %v2603 = vpop.f32.mrb[0].mxu0
        %v2604 = vadd.f32 0.0, %v2603
        %v2605 = vpop.f32.mrb[0].mxu0
        %v2606 = vpop.f32.mrb[0].mxu0
        %v2607 = vpop.f32.mrb[0].mxu0
        %2608 = vdwg.mxu0
        %2609 = vrot.lane.b32.xlu0 %v2010, 80
        %v2610 = vpop.permute.xlu0 %2609
        %v2613 = vsel %vm1730, %v2562, 0
        %2615 = vmatprep.subr.bf16.mxu0 0
        %2616 = vmatpush1.bf16.msra.mxu0 %v2610
        %2617 = vmatprep.subr.bf16.mxu0 0
        %2618 = vmatpush1.bf16.msra.mxu0 0
        %2619 = vmatprep.subr.bf16.mxu0 0
        %2620 = vmatpush1.bf16.msra.mxu0 0
        %2621 = vmatprep.subr.bf16.mxu0 0
        %2622 = vmatpush1.bf16.msra.mxu0 0
        %2623 = vmatprep.subr.bf16.mxu0 0
        %2624 = vmatpush1.bf16.msra.mxu0 0
        %2625 = vmatprep.subr.bf16.mxu0 0
        %2626 = vmatpush1.bf16.msra.mxu0 0
        %2627 = vmatprep.subr.bf16.mxu0 0
        %2628 = vmatpush1.bf16.msra.mxu0 0
        %2629 = vmatprep.subr.bf16.mxu0 0
        %2630 = vmatpush1.bf16.msra.mxu0 0
        %2631 = vmatprep.subr.bf16.mxu0 0
        %2632 = vmatpush1.bf16.msra.mxu0 0
        %2633 = vmatprep.subr.bf16.mxu0 0
        %2634 = vmatpush1.bf16.msra.mxu0 0
        %2635 = vmatprep.subr.bf16.mxu0 0
        %2636 = vmatpush1.bf16.msra.mxu0 0
        %2637 = vmatprep.subr.bf16.mxu0 0
        %2638 = vmatpush1.bf16.msra.mxu0 0
        %2639 = vmatprep.subr.bf16.mxu0 0
        %2640 = vmatpush1.bf16.msra.mxu0 0
        %2641 = vmatprep.subr.bf16.mxu0 0
        %2642 = vmatpush1.bf16.msra.mxu0 0
        %2643 = vmatprep.subr.bf16.mxu0 0
        %2644 = vmatpush1.bf16.msra.mxu0 0
        %2645 = vmatprep.subr.bf16.mxu0 0
        %2646 = vmatpush1.bf16.msra.mxu0 0
        %2647 = vmatprep.mubr.bf16.mxu0 0
        %2648 = vmatmul.mubr.bf16.gmra.mrb[0].mxu0 %v2613
        %v2649 = vpop.f32.mrb[0].mxu0
        %v2650 = vadd.f32 0.0, %v2649
        %v2651 = vpop.f32.mrb[0].mxu0
        %v2652 = vpop.f32.mrb[0].mxu0
        %v2653 = vpop.f32.mrb[0].mxu0
        %2654 = vdwg.mxu0
        %2655 = vrot.lane.b32.xlu0 %v2007, 104
        %v2656 = vpop.permute.xlu0 %2655
        %2657 = vrot.lane.b32.xlu0 %v2009, 104
        %v2658 = vpop.permute.xlu0 %2657
        %v2660 = vsel %vm827, %v2656, 0
        %v2663 = vsel %vm827, %v2658, 0
        %2665 = vmatprep.subr.bf16.mxu0 0
        %2666 = vmatpush1.bf16.xpose.msra.mxu0 %v2663
        %2667 = vmatprep.subr.bf16.mxu0 0
        %2668 = vmatpush1.bf16.xpose.msra.mxu0 0
        %2669 = vmatprep.subr.bf16.mxu0 0
        %2670 = vmatpush1.bf16.xpose.msra.mxu0 0
        %2671 = vmatprep.subr.bf16.mxu0 0
        %2672 = vmatpush1.bf16.xpose.msra.mxu0 0
        %2673 = vmatprep.subr.bf16.mxu0 0
        %2674 = vmatpush1.bf16.xpose.msra.mxu0 0
        %2675 = vmatprep.subr.bf16.mxu0 0
        %2676 = vmatpush1.bf16.xpose.msra.mxu0 0
        %2677 = vmatprep.subr.bf16.mxu0 0
        %2678 = vmatpush1.bf16.xpose.msra.mxu0 0
        %2679 = vmatprep.subr.bf16.mxu0 0
        %2680 = vmatpush1.bf16.xpose.msra.mxu0 0
        %2681 = vmatprep.subr.bf16.mxu0 0
        %2682 = vmatpush1.bf16.xpose.msra.mxu0 0
        %2683 = vmatprep.subr.bf16.mxu0 0
        %2684 = vmatpush1.bf16.xpose.msra.mxu0 0
        %2685 = vmatprep.subr.bf16.mxu0 0
        %2686 = vmatpush1.bf16.xpose.msra.mxu0 0
        %2687 = vmatprep.subr.bf16.mxu0 0
        %2688 = vmatpush1.bf16.xpose.msra.mxu0 0
        %2689 = vmatprep.subr.bf16.mxu0 0
        %2690 = vmatpush1.bf16.xpose.msra.mxu0 0
        %2691 = vmatprep.subr.bf16.mxu0 0
        %2692 = vmatpush1.bf16.xpose.msra.mxu0 0
        %2693 = vmatprep.subr.bf16.mxu0 0
        %2694 = vmatpush1.bf16.xpose.msra.mxu0 0
        %2695 = vmatprep.subr.bf16.mxu0 0
        %2696 = vmatpush1.bf16.xpose.msra.mxu0 0
        %2697 = vmatprep.mubr.bf16.mxu0 0
        %2698 = vmatmul.mubr.bf16.gmra.mrb[0].mxu0 %v2660
        %v2699 = vpop.f32.mrb[0].mxu0
        %v2700 = vadd.f32 %v2006, %v2699
        %v2701 = vpop.f32.mrb[0].mxu0
        %v2702 = vpop.f32.mrb[0].mxu0
        %v2703 = vpop.f32.mrb[0].mxu0
        %2704 = vdwg.mxu0
        %2705 = vrot.lane.b32.xlu0 %v2008, 104
        %v2706 = vpop.permute.xlu0 %2705
        %2707 = vrot.lane.b32.xlu0 %v2010, 104
        %v2708 = vpop.permute.xlu0 %2707
        %v2710 = vsel %vm827, %v2706, 0
        %v2713 = vsel %vm827, %v2708, 0
        %2715 = vmatprep.subr.bf16.mxu0 0
        %2716 = vmatpush1.bf16.xpose.msra.mxu0 %v2713
        %2717 = vmatprep.subr.bf16.mxu0 0
        %2718 = vmatpush1.bf16.xpose.msra.mxu0 0
        %2719 = vmatprep.subr.bf16.mxu0 0
        %2720 = vmatpush1.bf16.xpose.msra.mxu0 0
        %2721 = vmatprep.subr.bf16.mxu0 0
        %2722 = vmatpush1.bf16.xpose.msra.mxu0 0
        %2723 = vmatprep.subr.bf16.mxu0 0
        %2724 = vmatpush1.bf16.xpose.msra.mxu0 0
        %2725 = vmatprep.subr.bf16.mxu0 0
        %2726 = vmatpush1.bf16.xpose.msra.mxu0 0
        %2727 = vmatprep.subr.bf16.mxu0 0
        %2728 = vmatpush1.bf16.xpose.msra.mxu0 0
        %2729 = vmatprep.subr.bf16.mxu0 0
        %2730 = vmatpush1.bf16.xpose.msra.mxu0 0
        %2731 = vmatprep.subr.bf16.mxu0 0
        %2732 = vmatpush1.bf16.xpose.msra.mxu0 0
        %2733 = vmatprep.subr.bf16.mxu0 0
        %2734 = vmatpush1.bf16.xpose.msra.mxu0 0
        %2735 = vmatprep.subr.bf16.mxu0 0
        %2736 = vmatpush1.bf16.xpose.msra.mxu0 0
        %2737 = vmatprep.subr.bf16.mxu0 0
        %2738 = vmatpush1.bf16.xpose.msra.mxu0 0
        %2739 = vmatprep.subr.bf16.mxu0 0
        %2740 = vmatpush1.bf16.xpose.msra.mxu0 0
        %2741 = vmatprep.subr.bf16.mxu0 0
        %2742 = vmatpush1.bf16.xpose.msra.mxu0 0
        %2743 = vmatprep.subr.bf16.mxu0 0
        %2744 = vmatpush1.bf16.xpose.msra.mxu0 0
        %2745 = vmatprep.subr.bf16.mxu0 0
        %2746 = vmatpush1.bf16.xpose.msra.mxu0 0
        %2747 = vmatprep.mubr.bf16.mxu0 0
        %2748 = vmatmul.mubr.bf16.gmra.mrb[0].mxu0 %v2710
        %v2749 = vpop.f32.mrb[0].mxu0
        %v2750 = vadd.f32 %v2006, %v2749
        %v2751 = vpop.f32.mrb[0].mxu0
        %v2752 = vpop.f32.mrb[0].mxu0
        %v2753 = vpop.f32.mrb[0].mxu0
        %2754 = vdwg.mxu0
        %v2755 = vsel %vm1730, %v2700, -inf
        %2756 = vmax.xlane.f32.xlu0 %v2755
        %v2757 = vpop.xlane.xlu0 %2756
        %v2758 = vsel %vm1730, %v2750, -inf
        %2759 = vmax.xlane.f32.xlu0 %v2758
        %v2760 = vpop.xlane.xlu0 %2759
        %v2761 = vsub.f32 %v2700, %v2757
        %v2762 = vsub.f32 %v2750, %v2760
        %v2763 = vmul.f32 %v2761, 1.442695
        %v2764 = vpow.pop %v2763
        %v2765 = vmul.f32 %v2762, 1.442695
        %v2766 = vpow.pop %v2765
        %v2767 = vsel %vm1730, %v2764, 0.0
        %2768 = vadd.xlane.f32.xlu0 %v2767
        %v2769 = vpop.xlane.xlu0 %2768
        %v2770 = vsel %vm1730, %v2766, 0.0
        %2771 = vadd.xlane.f32.xlu0 %v2770
        %v2772 = vpop.xlane.xlu0 %2771
        %v2773 = vrcp.pop %v2769
        %v2774 = vrcp.pop %v2772
        %v2775 = vmul.f32 %v2764, %v2773
        %v2776 = vmul.f32 %v2766, %v2774
        %v2777 = vpack.c.bf16 %v2775, %v2775
        %v2778 = vpack.c.bf16 %v2776, %v2776
        %2779 = vrot.lane.b32.xlu0 %v2009, 72
        %v2780 = vpop.permute.xlu0 %2779
        %v2783 = vsel %vm1730, %v2777, 0
        %2785 = vmatprep.subr.bf16.mxu0 0
        %2786 = vmatpush1.bf16.msra.mxu0 %v2780
        %2787 = vmatprep.subr.bf16.mxu0 0
        %2788 = vmatpush1.bf16.msra.mxu0 0
        %2789 = vmatprep.subr.bf16.mxu0 0
        %2790 = vmatpush1.bf16.msra.mxu0 0
        %2791 = vmatprep.subr.bf16.mxu0 0
        %2792 = vmatpush1.bf16.msra.mxu0 0
        %2793 = vmatprep.subr.bf16.mxu0 0
        %2794 = vmatpush1.bf16.msra.mxu0 0
        %2795 = vmatprep.subr.bf16.mxu0 0
        %2796 = vmatpush1.bf16.msra.mxu0 0
        %2797 = vmatprep.subr.bf16.mxu0 0
        %2798 = vmatpush1.bf16.msra.mxu0 0
        %2799 = vmatprep.subr.bf16.mxu0 0
        %2800 = vmatpush1.bf16.msra.mxu0 0
        %2801 = vmatprep.subr.bf16.mxu0 0
        %2802 = vmatpush1.bf16.msra.mxu0 0
        %2803 = vmatprep.subr.bf16.mxu0 0
        %2804 = vmatpush1.bf16.msra.mxu0 0
        %2805 = vmatprep.subr.bf16.mxu0 0
        %2806 = vmatpush1.bf16.msra.mxu0 0
        %2807 = vmatprep.subr.bf16.mxu0 0
        %2808 = vmatpush1.bf16.msra.mxu0 0
        %2809 = vmatprep.subr.bf16.mxu0 0
        %2810 = vmatpush1.bf16.msra.mxu0 0
        %2811 = vmatprep.subr.bf16.mxu0 0
        %2812 = vmatpush1.bf16.msra.mxu0 0
        %2813 = vmatprep.subr.bf16.mxu0 0
        %2814 = vmatpush1.bf16.msra.mxu0 0
        %2815 = vmatprep.subr.bf16.mxu0 0
        %2816 = vmatpush1.bf16.msra.mxu0 0
        %2817 = vmatprep.mubr.bf16.mxu0 0
        %2818 = vmatmul.mubr.bf16.gmra.mrb[0].mxu0 %v2783
        %v2819 = vpop.f32.mrb[0].mxu0
        %v2820 = vadd.f32 0.0, %v2819
        %v2821 = vpop.f32.mrb[0].mxu0
        %v2822 = vpop.f32.mrb[0].mxu0
        %v2823 = vpop.f32.mrb[0].mxu0
        %2824 = vdwg.mxu0
        %2825 = vrot.lane.b32.xlu0 %v2010, 72
        %v2826 = vpop.permute.xlu0 %2825
        %v2829 = vsel %vm1730, %v2778, 0
        %2831 = vmatprep.subr.bf16.mxu0 0
        %2832 = vmatpush1.bf16.msra.mxu0 %v2826
        %2833 = vmatprep.subr.bf16.mxu0 0
        %2834 = vmatpush1.bf16.msra.mxu0 0
        %2835 = vmatprep.subr.bf16.mxu0 0
        %2836 = vmatpush1.bf16.msra.mxu0 0
        %2837 = vmatprep.subr.bf16.mxu0 0
        %2838 = vmatpush1.bf16.msra.mxu0 0
        %2839 = vmatprep.subr.bf16.mxu0 0
        %2840 = vmatpush1.bf16.msra.mxu0 0
        %2841 = vmatprep.subr.bf16.mxu0 0
        %2842 = vmatpush1.bf16.msra.mxu0 0
        %2843 = vmatprep.subr.bf16.mxu0 0
        %2844 = vmatpush1.bf16.msra.mxu0 0
        %2845 = vmatprep.subr.bf16.mxu0 0
        %2846 = vmatpush1.bf16.msra.mxu0 0
        %2847 = vmatprep.subr.bf16.mxu0 0
        %2848 = vmatpush1.bf16.msra.mxu0 0
        %2849 = vmatprep.subr.bf16.mxu0 0
        %2850 = vmatpush1.bf16.msra.mxu0 0
        %2851 = vmatprep.subr.bf16.mxu0 0
        %2852 = vmatpush1.bf16.msra.mxu0 0
        %2853 = vmatprep.subr.bf16.mxu0 0
        %2854 = vmatpush1.bf16.msra.mxu0 0
        %2855 = vmatprep.subr.bf16.mxu0 0
        %2856 = vmatpush1.bf16.msra.mxu0 0
        %2857 = vmatprep.subr.bf16.mxu0 0
        %2858 = vmatpush1.bf16.msra.mxu0 0
        %2859 = vmatprep.subr.bf16.mxu0 0
        %2860 = vmatpush1.bf16.msra.mxu0 0
        %2861 = vmatprep.subr.bf16.mxu0 0
        %2862 = vmatpush1.bf16.msra.mxu0 0
        %2863 = vmatprep.mubr.bf16.mxu0 0
        %2864 = vmatmul.mubr.bf16.gmra.mrb[0].mxu0 %v2829
        %v2865 = vpop.f32.mrb[0].mxu0
        %v2866 = vadd.f32 0.0, %v2865
        %v2867 = vpop.f32.mrb[0].mxu0
        %v2868 = vpop.f32.mrb[0].mxu0
        %v2869 = vpop.f32.mrb[0].mxu0
        %2870 = vdwg.mxu0
        %2873 = vrot.lane.b32.xlu0 %v2388, 8
        %v2874 = vpop.permute.xlu0 %2873
        %2875 = vrot.lane.b32.xlu0 %v2434, 8
        %v2876 = vpop.permute.xlu0 %2875
        %2881 = vrot.lane.b32.xlu0 %v2604, 16
        %v2882 = vpop.permute.xlu0 %2881
        %2883 = vrot.lane.b32.xlu0 %v2650, 16
        %v2884 = vpop.permute.xlu0 %2883
        %2889 = vrot.lane.b32.xlu0 %v2820, 24
        %v2890 = vpop.permute.xlu0 %2889
        %2891 = vrot.lane.b32.xlu0 %v2866, 24
        %v2892 = vpop.permute.xlu0 %2891
        %v2895 = vsel %vm827, %v2169, %v2874
        %v2896 = vsel %vm827, %v2216, %v2876
        %v2897 = vsel %vm1730, %v2895, %v2882
        %v2898 = vsel %vm1730, %v2896, %v2884
        %v2899 = vsel %vm1733, %v2897, %v2890
        %v2900 = vsel %vm1733, %v2898, %v2892
        %v2901 = vld [vmem:[%s639] sm:$0xf]
        %v2902 = vld [vmem:[%s639 + $0x4] sm:$0xf]
        %v2903 = vld [vmem:[%s639 + $0x8] sm:$0xf]
        %v2904 = vld [vmem:[%s639 + $0xc] sm:$0xf]
        %v2905 = vpack.c.bf16 %v2900, %v2899
        %v2906 = vld [vmem:[%s666 + $0x2] sm:$0x1]
        %v2908 = vlaneseq
        %v2909 = vshrl.u32 %v2908, 7
        %v2910 = vsub.s32 0, %v2909
        %v2911 = vrot.slane %v2906, %v2910
        %v2916 = vunpack.c.l.b16 %v2901
        %v2917 = vunpack.c.l.b16 %v2902
        %v2918 = vunpack.c.l.b16 %v2903
        %v2919 = vunpack.c.l.b16 %v2904
        %v2920 = vpack.c.b16 %v2917, %v2916
        %v2921 = vpack.c.b16 %v2919, %v2918
        %2924 = vrot.lane.b32.xlu0 %v2911, 96
        %v2925 = vpop.permute.xlu0 %2924
        %v2928 = vsel %vm777, %v2905, 0
        %2930 = vmatprep.subr.bf16.mxu0 0
        %2931 = vmatpush1.bf16.msra.mxu0 %v2920
        %2932 = vmatprep.subr.bf16.mxu0 0
        %2933 = vmatpush1.bf16.msra.mxu0 %v2921
        %2934 = vmatprep.subr.bf16.mxu0 0
        %2935 = vmatpush1.bf16.msra.mxu0 0
        %2936 = vmatprep.subr.bf16.mxu0 0
        %2937 = vmatpush1.bf16.msra.mxu0 0
        %2938 = vmatprep.subr.bf16.mxu0 0
        %2939 = vmatpush1.bf16.msra.mxu0 0
        %2940 = vmatprep.subr.bf16.mxu0 0
        %2941 = vmatpush1.bf16.msra.mxu0 0
        %2942 = vmatprep.subr.bf16.mxu0 0
        %2943 = vmatpush1.bf16.msra.mxu0 0
        %2944 = vmatprep.subr.bf16.mxu0 0
        %2945 = vmatpush1.bf16.msra.mxu0 0
        %2946 = vmatprep.subr.bf16.mxu0 0
        %2947 = vmatpush1.bf16.msra.mxu0 0
        %2948 = vmatprep.subr.bf16.mxu0 0
        %2949 = vmatpush1.bf16.msra.mxu0 0
        %2950 = vmatprep.subr.bf16.mxu0 0
        %2951 = vmatpush1.bf16.msra.mxu0 0
        %2952 = vmatprep.subr.bf16.mxu0 0
        %2953 = vmatpush1.bf16.msra.mxu0 0
        %2954 = vmatprep.subr.bf16.mxu0 0
        %2955 = vmatpush1.bf16.msra.mxu0 0
        %2956 = vmatprep.subr.bf16.mxu0 0
        %2957 = vmatpush1.bf16.msra.mxu0 0
        %2958 = vmatprep.subr.bf16.mxu0 0
        %2959 = vmatpush1.bf16.msra.mxu0 0
        %2960 = vmatprep.subr.bf16.mxu0 0
        %2961 = vmatpush1.bf16.msra.mxu0 0
        %2962 = vmatprep.mubr.bf16.mxu0 0
        %2963 = vmatmul.mubr.bf16.gmra.mrb[0].mxu0 %v2928
        %v2964 = vpop.f32.mrb[0].mxu0
        %v2965 = vadd.f32 %v2925, %v2964
        %v2966 = vpop.f32.mrb[0].mxu0
        %v2967 = vpop.f32.mrb[0].mxu0
        %v2968 = vadd.f32 %v2925, %v2967
        %v2969 = vpop.f32.mrb[0].mxu0
        %2970 = vdwg.mxu0
        %v2971 = vadd.f32 %v1847, %v2965
        %v2972 = vadd.f32 %v1848, %v2968
        %v2973 = vsel %vm777, %v2971, 0.0
        %2974 = vadd.xlane.f32.xlu0 %v2973
        %v2975 = vpop.xlane.xlu0 %2974
        %v2976 = vsel %vm777, %v2972, 0.0
        %2977 = vadd.xlane.f32.xlu0 %v2976
        %v2978 = vpop.xlane.xlu0 %2977
        %v2979 = vmul.f32 %v2975, %v1815
        %v2980 = vmul.f32 %v2978, %v1815
        %v2981 = vsub.f32 %v2971, %v2979
        %v2982 = vsub.f32 %v2972, %v2980
        %v2983 = vmul.f32 %v2981, %v2981
        %v2984 = vmul.f32 %v2982, %v2982
        %v2985 = vsel %vm777, %v2983, 0.0
        %2986 = vadd.xlane.f32.xlu0 %v2985
        %v2987 = vpop.xlane.xlu0 %2986
        %v2988 = vsel %vm777, %v2984, 0.0
        %2989 = vadd.xlane.f32.xlu0 %v2988
        %v2990 = vpop.xlane.xlu0 %2989
        %v2991 = vmul.f32 %v2987, %v1815
        %v2992 = vmul.f32 %v2990, %v1815
        %v2993 = vadd.f32 %v2991, 1e-05
        %v2994 = vadd.f32 %v2992, 1e-05
        %v2995 = vrsqrt.pop %v2993
        %v2996 = vrsqrt.pop %v2994
        %v2997 = vmul.f32 %v2981, %v2995
        %v2998 = vmul.f32 %v2982, %v2996
        %2999 = vrot.lane.b32.xlu0 %v2911, 64
        %v3000 = vpop.permute.xlu0 %2999
        %v3002 = vmul.f32 %v2997, %v3000
        %v3003 = vmul.f32 %v2998, %v3000
        %3004 = vrot.lane.b32.xlu0 %v2911, 32
        %v3005 = vpop.permute.xlu0 %3004
        %v3007 = vadd.f32 %v3002, %v3005
        %v3008 = vadd.f32 %v3003, %v3005
        %v3009 = vld [vmem:[%s648] sm:$0xf]
        %v3010 = vld [vmem:[%s648 + $0x4] sm:$0xf]
        %v3011 = vld [vmem:[%s648 + $0x8] sm:$0xf]
        %v3012 = vld [vmem:[%s648 + $0xc] sm:$0xf]
        %v3013 = vpack.c.bf16 %v3008, %v3007
        %v3014 = vld [vmem:[%s666 + $0x3] sm:$0x1]
        %v3016 = vlaneseq
        %v3017 = vshrl.u32 %v3016, 7
        %v3018 = vsub.s32 0, %v3017
        %v3019 = vrot.slane %v3014, %v3018
        %v3025 = vunpack.c.l.b16 %v3009
        %v3026 = vunpack.c.l.b16 %v3010
        %v3027 = vunpack.c.l.b16 %v3011
        %v3028 = vunpack.c.l.b16 %v3012
        %v3029 = vpack.c.b16 %v3026, %v3025
        %v3030 = vpack.c.b16 %v3028, %v3027
        %v3034 = vsel %vm777, %v3013, 0
        %3036 = vmatprep.subr.bf16.mxu0 0
        %3037 = vmatpush1.bf16.msra.mxu0 %v3029
        %3038 = vmatprep.subr.bf16.mxu0 0
        %3039 = vmatpush1.bf16.msra.mxu0 %v3030
        %3040 = vmatprep.subr.bf16.mxu0 0
        %3041 = vmatpush1.bf16.msra.mxu0 0
        %3042 = vmatprep.subr.bf16.mxu0 0
        %3043 = vmatpush1.bf16.msra.mxu0 0
        %3044 = vmatprep.subr.bf16.mxu0 0
        %3045 = vmatpush1.bf16.msra.mxu0 0
        %3046 = vmatprep.subr.bf16.mxu0 0
        %3047 = vmatpush1.bf16.msra.mxu0 0
        %3048 = vmatprep.subr.bf16.mxu0 0
        %3049 = vmatpush1.bf16.msra.mxu0 0
        %3050 = vmatprep.subr.bf16.mxu0 0
        %3051 = vmatpush1.bf16.msra.mxu0 0
        %3052 = vmatprep.subr.bf16.mxu0 0
        %3053 = vmatpush1.bf16.msra.mxu0 0
        %3054 = vmatprep.subr.bf16.mxu0 0
        %3055 = vmatpush1.bf16.msra.mxu0 0
        %3056 = vmatprep.subr.bf16.mxu0 0
        %3057 = vmatpush1.bf16.msra.mxu0 0
        %3058 = vmatprep.subr.bf16.mxu0 0
        %3059 = vmatpush1.bf16.msra.mxu0 0
        %3060 = vmatprep.subr.bf16.mxu0 0
        %3061 = vmatpush1.bf16.msra.mxu0 0
        %3062 = vmatprep.subr.bf16.mxu0 0
        %3063 = vmatpush1.bf16.msra.mxu0 0
        %3064 = vmatprep.subr.bf16.mxu0 0
        %3065 = vmatpush1.bf16.msra.mxu0 0
        %3066 = vmatprep.subr.bf16.mxu0 0
        %3067 = vmatpush1.bf16.msra.mxu0 0
        %3068 = vmatprep.mubr.bf16.mxu0 0
        %3069 = vmatmul.mubr.bf16.gmra.mrb[0].mxu0 %v3034
        %v3070 = vpop.f32.mrb[0].mxu0
        %v3071 = vadd.f32 %v3019, %v3070
        %v3072 = vpop.f32.mrb[0].mxu0
        %v3073 = vpop.f32.mrb[0].mxu0
        %v3074 = vadd.f32 %v3019, %v3073
        %v3075 = vpop.f32.mrb[0].mxu0
        %3076 = vdwg.mxu0
        %v3077 = vmax.f32 %v3071, 0.0
        %v3078 = vmax.f32 %v3074, 0.0
        %v3079 = vld [vmem:[%s657] sm:$0xf]
        %v3080 = vld [vmem:[%s657 + $0x4] sm:$0xf]
        %v3081 = vld [vmem:[%s657 + $0x8] sm:$0xf]
        %v3082 = vld [vmem:[%s657 + $0xc] sm:$0xf]
        %v3083 = vld [vmem:[%s657 + $0x10] sm:$0xf]
        %v3084 = vld [vmem:[%s657 + $0x14] sm:$0xf]
        %v3085 = vld [vmem:[%s657 + $0x18] sm:$0xf]
        %v3086 = vld [vmem:[%s657 + $0x1c] sm:$0xf]
        %v3087 = vpack.c.bf16 %v3078, %v3077
        %v3096 = vunpack.c.l.b16 %v3079
        %v3097 = vunpack.c.l.b16 %v3080
        %v3098 = vunpack.c.l.b16 %v3081
        %v3099 = vunpack.c.l.b16 %v3082
        %v3100 = vunpack.c.l.b16 %v3083
        %v3101 = vunpack.c.l.b16 %v3084
        %v3102 = vunpack.c.l.b16 %v3085
        %v3103 = vunpack.c.l.b16 %v3086
        %v3104 = vpack.c.b16 %v3097, %v3096
        %v3105 = vpack.c.b16 %v3099, %v3098
        %v3106 = vpack.c.b16 %v3101, %v3100
        %v3107 = vpack.c.b16 %v3103, %v3102
        %3112 = vrot.lane.b32.xlu0 %v3019, 64
        %v3113 = vpop.permute.xlu0 %3112
        %vm3115 = vcmask 523264
        %v3117 = vsel %vm3115, %v3087, 0
        %3119 = vmatprep.subr.bf16.mxu0 0
        %3120 = vmatpush1.bf16.msra.mxu0 %v3104
        %3121 = vmatprep.subr.bf16.mxu0 0
        %3122 = vmatpush1.bf16.msra.mxu0 %v3105
        %3123 = vmatprep.subr.bf16.mxu0 0
        %3124 = vmatpush1.bf16.msra.mxu0 %v3106
        %3125 = vmatprep.subr.bf16.mxu0 0
        %3126 = vmatpush1.bf16.msra.mxu0 %v3107
        %3127 = vmatprep.subr.bf16.mxu0 0
        %3128 = vmatpush1.bf16.msra.mxu0 0
        %3129 = vmatprep.subr.bf16.mxu0 0
        %3130 = vmatpush1.bf16.msra.mxu0 0
        %3131 = vmatprep.subr.bf16.mxu0 0
        %3132 = vmatpush1.bf16.msra.mxu0 0
        %3133 = vmatprep.subr.bf16.mxu0 0
        %3134 = vmatpush1.bf16.msra.mxu0 0
        %3135 = vmatprep.subr.bf16.mxu0 0
        %3136 = vmatpush1.bf16.msra.mxu0 0
        %3137 = vmatprep.subr.bf16.mxu0 0
        %3138 = vmatpush1.bf16.msra.mxu0 0
        %3139 = vmatprep.subr.bf16.mxu0 0
        %3140 = vmatpush1.bf16.msra.mxu0 0
        %3141 = vmatprep.subr.bf16.mxu0 0
        %3142 = vmatpush1.bf16.msra.mxu0 0
        %3143 = vmatprep.subr.bf16.mxu0 0
        %3144 = vmatpush1.bf16.msra.mxu0 0
        %3145 = vmatprep.subr.bf16.mxu0 0
        %3146 = vmatpush1.bf16.msra.mxu0 0
        %3147 = vmatprep.subr.bf16.mxu0 0
        %3148 = vmatpush1.bf16.msra.mxu0 0
        %3149 = vmatprep.subr.bf16.mxu0 0
        %3150 = vmatpush1.bf16.msra.mxu0 0
        %3151 = vmatprep.mubr.bf16.mxu0 0
        %3152 = vmatmul.mubr.bf16.gmra.mrb[0].mxu0 %v3117
        %v3153 = vpop.f32.mrb[0].mxu0
        %v3154 = vadd.f32 %v3113, %v3153
        %v3155 = vpop.f32.mrb[0].mxu0
        %v3156 = vpop.f32.mrb[0].mxu0
        %v3157 = vadd.f32 %v3113, %v3156
        %v3158 = vpop.f32.mrb[0].mxu0
        %3159 = vdwg.mxu0
        %v3160 = vadd.f32 %v3007, %v3154
        %v3161 = vadd.f32 %v3008, %v3157
        %v3162 = vld [vmem:[%s666 + $0x4] sm:$0x1]
        %v3163 = vsel %vm777, %v3160, 0.0
        %3164 = vadd.xlane.f32.xlu0 %v3163
        %v3165 = vpop.xlane.xlu0 %3164
        %v3166 = vsel %vm777, %v3161, 0.0
        %3167 = vadd.xlane.f32.xlu0 %v3166
        %v3168 = vpop.xlane.xlu0 %3167
        %v3169 = vmul.f32 %v3165, %v1815
        %v3170 = vmul.f32 %v3168, %v1815
        %v3171 = vsub.f32 %v3160, %v3169
        %v3172 = vsub.f32 %v3161, %v3170
        %v3173 = vmul.f32 %v3171, %v3171
        %v3174 = vmul.f32 %v3172, %v3172
        %v3175 = vsel %vm777, %v3173, 0.0
        %3176 = vadd.xlane.f32.xlu0 %v3175
        %v3177 = vpop.xlane.xlu0 %3176
        %v3178 = vsel %vm777, %v3174, 0.0
        %3179 = vadd.xlane.f32.xlu0 %v3178
        %v3180 = vpop.xlane.xlu0 %3179
        %v3181 = vmul.f32 %v3177, %v1815
        %v3182 = vmul.f32 %v3180, %v1815
        %v3183 = vadd.f32 %v3181, 1e-05
        %v3184 = vadd.f32 %v3182, 1e-05
        %v3185 = vrsqrt.pop %v3183
        %v3186 = vrsqrt.pop %v3184
        %v3187 = vmul.f32 %v3171, %v3185
        %v3188 = vmul.f32 %v3172, %v3186
        %3189 = vrot.lane.b32.xlu0 %v3019, 32
        %v3190 = vpop.permute.xlu0 %3189
        %v3192 = vmul.f32 %v3187, %v3190
        %v3193 = vmul.f32 %v3188, %v3190
        %v3195 = vlaneseq
        %v3196 = vshrl.u32 %v3195, 7
        %v3197 = vsub.s32 0, %v3196
        %v3198 = vrot.slane %v3162, %v3197
        %v3200 = vadd.f32 %v3192, %v3198
        %v3201 = vadd.f32 %v3193, %v3198
        %3202 = vst.msk [vmem:[#allocation2] sm:$0xff] %vm777, %v3200
        %3203 = vst.msk [vmem:[#allocation2 + $0x8] sm:$0xff] %vm777, %v3201
        %p3204 = scmp.eq.s32.totalorder %s39, 1
        // Predicated region
        $region121: #{tpu_custom_call.1} parent=67 // pred_check
          %p3205 = pneg %p3204
        $region122: #{tpu_custom_call.1} parent=67 // pred_check_branch
          %3207 = sbr.rel (%p3205) target = $region124
        $region123: #{tpu_custom_call.1} parent=67 // pred_region
          %v3208 = vld [vmem:[#allocation21] sm:$0x1]
          %v3209 = vsel %vm777, %v3200, 0.0
          %3210 = vadd.xlane.f32.xlu0 %v3209
          %v3211 = vpop.xlane.xlu0 %3210
          %v3212 = vsel %vm777, %v3201, 0.0
          %3213 = vadd.xlane.f32.xlu0 %v3212
          %v3214 = vpop.xlane.xlu0 %3213
          %v3215 = vmul.f32 %v3211, %v1815
          %v3216 = vmul.f32 %v3214, %v1815
          %v3217 = vsub.f32 %v3200, %v3215
          %v3218 = vsub.f32 %v3201, %v3216
          %v3219 = vmul.f32 %v3217, %v3217
          %v3220 = vmul.f32 %v3218, %v3218
          %v3221 = vsel %vm777, %v3219, 0.0
          %3222 = vadd.xlane.f32.xlu0 %v3221
          %v3223 = vpop.xlane.xlu0 %3222
          %v3224 = vsel %vm777, %v3220, 0.0
          %3225 = vadd.xlane.f32.xlu0 %v3224
          %v3226 = vpop.xlane.xlu0 %3225
          %v3227 = vmul.f32 %v3223, %v1815
          %v3228 = vmul.f32 %v3226, %v1815
          %v3229 = vadd.f32 %v3227, 1e-05
          %v3230 = vadd.f32 %v3228, 1e-05
          %v3231 = vrsqrt.pop %v3229
          %v3232 = vrsqrt.pop %v3230
          %v3233 = vmul.f32 %v3217, %v3231
          %v3234 = vmul.f32 %v3218, %v3232
          %v3236 = vlaneseq
          %v3237 = vshrl.u32 %v3236, 7
          %v3238 = vsub.s32 0, %v3237
          %v3239 = vrot.slane %v3208, %v3238
          %v3241 = vmul.f32 %v3233, %v3239
          %v3242 = vmul.f32 %v3234, %v3239
          %3243 = vrot.lane.b32.xlu0 %v3239, 96
          %v3244 = vpop.permute.xlu0 %3243
          %v3246 = vadd.f32 %v3241, %v3244
          %v3247 = vadd.f32 %v3242, %v3244
          %3248 = vst.msk [vmem:[#allocation23] sm:$0xff] %vm777, %v3246
          %3249 = vst.msk [vmem:[#allocation23 + $0x8] sm:$0xff] %vm777, %v3247
        $region124: #{tpu_custom_call.1} parent=67 // pred_fallthru
          _
        // Predicated region
        $region125: #{tpu_custom_call.1} parent=67 // pred_check
          %p3250 = pneg %p344
        $region126: #{tpu_custom_call.1} parent=67 // pred_check_branch
          %3252 = sbr.rel (%p3250) target = $region128
        $region127: #{tpu_custom_call.1} parent=67 // pred_region
          %s3254 = ssub.s32 256, 256
          %3255 = vsyncadd [#allocation5], %s3254
          %s3256 = sshll.u32 [#allocation23], 4
          %s3257 = int_to_ptr.vmem [resolvable:$true] %s3256
          %3262 = dma.vmem_to_hbm [thread:$0]  %s3257, 256, %s12, [#allocation5], 128, 128, 8
        $region128: #{tpu_custom_call.1} parent=67 // pred_fallthru
          _
        // Predicated region
        $region129: #{tpu_custom_call.1} parent=67 // pred_check
          %p3263 = pneg %p344
        $region130: #{tpu_custom_call.1} parent=67 // pred_check_branch
          %3265 = sbr.rel (%p3263) target = $region132
        $region131: #{tpu_custom_call.1} parent=67 // pred_region
          %3266 = dma.done [#allocation5], 256
        $region132: #{tpu_custom_call.1} parent=67 // pred_fallthru
          _
      $region68: #{tpu_custom_call.1} parent=5 // pred_fallthru
        _
      %p3267 = scmp.le.s32.totalorder 2, %s34
      // Predicated region
      $region133: #{tpu_custom_call.1} parent=5 // pred_check
        %p3268 = pneg %p3267
      $region134: #{tpu_custom_call.1} parent=5 // pred_check_branch
        %3270 = sbr.rel (%p3268) target = $region136
      $region135: #{tpu_custom_call.1} parent=5 // pred_region
        %s3271 = ssub.s32 %s34, 2
      $region136: #{tpu_custom_call.1} parent=5 // pred_fallthru
        _
    $region6: #{tpu_custom_call.1} parent=1 // loop_footer
      %s38 = sadd.s32 1, %s34
    $region7: #{tpu_custom_call.1} parent=1 // loop_footer_branch
      %33 = sbr.rel target = $region3
    $region8: #{tpu_custom_call.1} parent=1 // loop_exit
      _
    %3272 = vsyncpa [#allocation4], 1
    %s3273 = scalar_lea.sflag [#allocation4], 1
    %3274 = vsyncpa %s3273, 1
    %3275 = vsyncpa [#allocation7], 1
    %3276 = vsyncpa [#allocation10], 1
    %s3277 = scalar_lea.sflag [#allocation10], 1
    %3278 = vsyncpa %s3277, 1
    %3279 = vsyncpa [#allocation13], 1
    %s3280 = scalar_lea.sflag [#allocation13], 1
    %3281 = vsyncpa %s3280, 1
    %3282 = vsyncpa [#allocation16], 1
    %s3283 = scalar_lea.sflag [#allocation16], 1
    %3284 = vsyncpa %s3283, 1
    %3285 = vsyncpa [#allocation19], 1
    %s3286 = scalar_lea.sflag [#allocation19], 1
    %3287 = vsyncpa %s3286, 1
    %3288 = vsyncpa [#allocation22], 1
    %3289 = vsyncpa [#allocation5], 1
    %s3290 = scalar_lea.sflag [#allocation5], 1
    %3291 = vsyncpa %s3290, 1

</llo_original>
